<compile_context>
chip_gen: v6e
topology: v6e:2x2x1
jax: 0.10.0
libtpu: 0.0.40
codegen_flags: <defaults>
</compile_context>

<pallas_src>
import jax
import jax.numpy as jnp
import numpy as np
from jax import lax
from jax.experimental import pallas as pl
from jax.experimental.pallas import tpu as pltpu

F32 = jnp.float32
BF16 = jnp.bfloat16


# ---------------------------------------------------------------------------
# Pure-JAX reference helpers (unfused math; mirrors the torch module).
# ---------------------------------------------------------------------------
def _sage(h_src, h_dst, wl, bl, wr):
    return (jnp.dot(h_src, wl, preferred_element_type=F32) + bl
            + jnp.dot(h_dst, wr, preferred_element_type=F32))


def _lstm_step(p, x_agent, x_hideout, x_ts, magg, mbr, ha, hb, ca, cb):
    """One HeteroGCLSTM step.  hb/cb stack order: [hideout, timestep,
    agent_summ, hideout_summ, state_summ]."""
    w_agent, w_hideout, w_ts, b = p["w_agent"], p["w_hideout"], p["w_ts"], p["b"]
    cwl, cbl, cwr = p["cwl"], p["cbl"], p["cwr"]

    hh, ht, has, hhs, hss = hb[0], hb[1], hb[2], hb[3], hb[4]

    mean_agent = jnp.dot(magg, ha, preferred_element_type=F32)   # (B, H)
    bcast_as = jnp.dot(mbr, has, preferred_element_type=F32)     # (A, H)

    def gate(g, act):
        lin_a = jnp.dot(x_agent, w_agent[g], preferred_element_type=F32) + b[g, 0]
        lin_h = jnp.dot(x_hideout, w_hideout[g], preferred_element_type=F32) + b[g, 1]
        lin_t = x_ts * w_ts[g] + b[g, 2]
        lin_as, lin_hs, lin_ss = b[g, 3], b[g, 4], b[g, 5]

        conv_a = _sage(bcast_as, ha, cwl[g, 5], cbl[g, 5], cwr[g, 5])
        conv_h = _sage(hhs, hh, cwl[g, 6], cbl[g, 6], cwr[g, 6])
        conv_t = _sage(hss, ht, cwl[g, 9], cbl[g, 9], cwr[g, 9])
        conv_as = (_sage(mean_agent, has, cwl[g, 0], cbl[g, 0], cwr[g, 0])
                   + _sage(hss, has, cwl[g, 8], cbl[g, 8], cwr[g, 8]))
        conv_hs = (_sage(hh, hhs, cwl[g, 1], cbl[g, 1], cwr[g, 1])
                   + _sage(hss, hhs, cwl[g, 7], cbl[g, 7], cwr[g, 7]))
        conv_ss = (_sage(hhs, hss, cwl[g, 2], cbl[g, 2], cwr[g, 2])
                   + _sage(has, hss, cwl[g, 3], cbl[g, 3], cwr[g, 3])
                   + _sage(ht, hss, cwl[g, 4], cbl[g, 4], cwr[g, 4]))

        return (act(lin_a + conv_a), act(lin_h + conv_h), act(lin_t + conv_t),
                act(lin_as + conv_as), act(lin_hs + conv_hs), act(lin_ss + conv_ss))

    sig = jax.nn.sigmoid
    ig = gate(0, sig)
    fg = gate(1, sig)
    tg = gate(2, jnp.tanh)
    og = gate(3, sig)

    ca_new = fg[0] * ca + ig[0] * tg[0]
    ha_new = og[0] * jnp.tanh(ca_new)
    cb_new, hb_new = [], []
    for k in range(5):
        cn = fg[k + 1] * cb[k] + ig[k + 1] * tg[k + 1]
        cb_new.append(cn)
        hb_new.append(og[k + 1] * jnp.tanh(cn))
    return ha_new, jnp.stack(hb_new), ca_new, jnp.stack(cb_new)


def _outer_conv(owl, obl, owr, hb):
    ht, has, hhs, hss = hb[1], hb[2], hb[3], hb[4]
    return (_sage(hhs, hss, owl[0], obl[0], owr[0])
            + _sage(has, hss, owl[1], obl[1], owr[1])
            + _sage(ht, hss, owl[2], obl[2], owr[2]))


def _graph_matrices(B, n_agents):
    A = B * n_agents
    seg = jnp.repeat(jnp.arange(B), n_agents)
    magg = (jnp.arange(B)[:, None] == seg[None, :]).astype(F32) / n_agents
    mbr = (seg[:, None] == jnp.arange(B)[None, :]).astype(F32)
    return magg, mbr, A


# ---------------------------------------------------------------------------
# Pallas kernel: single program, recurrence as an unrolled fori_loop with
# loop-carried h/c, two fused matmuls per step, one fused cell update for all
# five batch-row node types, one fused lane-dense readout matmul.
# ---------------------------------------------------------------------------
def _hetero_lstm_kernel(x_agent_ref, x_ts_ref, w_a_ref, w_b_ref, bias_b_ref,
                        w_out_ref, b_out_ref, out_ref):
    seq, A, _ = x_agent_ref.shape
    B = x_ts_ref.shape[1]
    H4 = w_a_ref.shape[1]
    H = H4 // 4
    H5 = 5 * H
    n_agents = A // B

    w_a = w_a_ref[...]            # (2H+Fa+1, 4H)   bf16
    w_b = w_b_ref[...]            # (6H+1, 20H)     bf16
    bias_b = bias_b_ref[...]      # (B, 20H)        f32
    ones_a = jnp.ones((A, 1), BF16)
    inv_n = jnp.float32(1.0 / n_agents)

    def mm(x, w):
        return jnp.dot(x, w, preferred_element_type=F32)

    def cell(pre, c, n):
        # gate-major lane layout: [ i | f | c~ | o ], each n lanes wide
        i = jax.nn.sigmoid(pre[:, 0:n])
        f = jax.nn.sigmoid(pre[:, n:2 * n])
        g = jnp.tanh(pre[:, 2 * n:3 * n])
        o = jax.nn.sigmoid(pre[:, 3 * n:4 * n])
        c = f * c + i * g
        return (o * jnp.tanh(c)).astype(BF16), c

    def body(t, carry):
        h_a, h_b, c_a, c_b = carry            # h_* bf16 (matmul operands), c_* f32
        x_agent = x_agent_ref[t]              # (A, Fa) bf16, row j*B+b = agent j / graph b
        x_ts = x_ts_ref[t]                    # (B, 1)  bf16

        # Graph-structure ops off the MXU: per-graph agent mean (contiguous
        # slice adds, f32) and agent_summ -> agent broadcast (sublane concat).
        mean_agent = jnp.zeros((B, H), F32)
        for j in range(n_agents):
            mean_agent = mean_agent + h_a[j * B:(j + 1) * B].astype(F32)
        mean_agent = (mean_agent * inv_n).astype(BF16)
        has = h_b[:, 2 * H:3 * H]                                 # agent_summ h
        has_bcast = jnp.concatenate([has] * n_agents, axis=0)     # (A, H)

        # Two fused matmuls per step (previously ~9 tiny ones):
        src_a = jnp.concatenate([h_a, has_bcast, x_agent, ones_a], axis=1)
        pre_a = mm(src_a, w_a)                                    # (A, 4H)  f32
        src_b = jnp.concatenate([h_b, mean_agent, x_ts], axis=1)
        pre_b = mm(src_b, w_b) + bias_b                           # (B, 20H) f32

        h_a, c_a = cell(pre_a, c_a, H)        # agent nodes
        h_b, c_b = cell(pre_b, c_b, H5)       # all 5 batch-row node types at once
        return h_a, h_b, c_a, c_b

    init = (jnp.zeros((A, H), BF16), jnp.zeros((B, H5), BF16),
            jnp.zeros((A, H), F32), jnp.zeros((B, H5), F32))
    # seq is a static Python int (from the Ref shape) -> full unroll is legal.
    h_a, h_b, _, _ = lax.fori_loop(0, seq, body, init, unroll=True)

    # Final HeteroConv(SAGEConv) readout into 'state_summ' (lane-dense slab).
    out_ref[...] = mm(h_b, w_out_ref[...]) + b_out_ref[...]


# ---------------------------------------------------------------------------
# One-time weight packing (hoisted out of the per-call jit).
# ---------------------------------------------------------------------------
def prepare_params(params):
    H = params["w_agent"].shape[-1]
    H4 = 4 * H
    Fh = params["w_hideout"].shape[1]
    Hp = ((H + 127) // 128) * 128

    cwl, cwr, cbl, b = params["cwl"], params["cwr"], params["cbl"], params["b"]

    def fuse(w):                       # (4, K, H) -> (K, 4H): gates [i|f|c~|o] along lanes
        return jnp.transpose(w, (1, 0, 2)).reshape(w.shape[1], H4)

    def dest_pack(blocks, k_in):
        # blocks: {dest_idx: (4, k_in, H)}; dest order [hid, ts, as, hs, ss].
        # column index = gate*5H + dest*H (gate-major, matches cell() slicing).
        cols = []
        for g in range(4):
            for d in range(5):
                w = blocks.get(d)
                cols.append(jnp.zeros((k_in, H), F32) if w is None else w[g])
        return jnp.concatenate(cols, axis=1)                      # (k_in, 20H)

    # --- agent destination: [h_a | bcast(h_agent_summ) | x_agent | 1] @ W_A ---
    w_a = jnp.concatenate([
        fuse(cwr[:, 5]),                    # h_a          (agent_summ->agent, lin_r)
        fuse(cwl[:, 5]),                    # bcast(h_as)  (agent_summ->agent, lin_l)
        fuse(params["w_agent"]),            # x_agent
        fuse(b[:, 0] + cbl[:, 5]),          # folded constant bias (ones column)
    ], axis=0)                              # (2H+Fa+1, 4H)

    # --- 5 batch-row destinations: [h_hid|h_ts|h_as|h_hs|h_ss|mean_agent|x_ts] @ W_B
    w_b = jnp.concatenate([
        dest_pack({0: cwr[:, 6], 3: cwl[:, 1]}, H),                           # src h_hid
        dest_pack({1: cwr[:, 9], 4: cwl[:, 4]}, H),                           # src h_ts
        dest_pack({2: cwr[:, 0] + cwr[:, 8], 4: cwl[:, 3]}, H),               # src h_as
        dest_pack({0: cwl[:, 6], 3: cwr[:, 1] + cwr[:, 7], 4: cwl[:, 2]}, H),  # src h_hs
        dest_pack({1: cwl[:, 9], 2: cwl[:, 8], 3: cwl[:, 7],
                   4: cwr[:, 2] + cwr[:, 3] + cwr[:, 4]}, H),                 # src h_ss
        dest_pack({2: cwl[:, 0]}, H),                                         # mean_agent
        dest_pack({1: params["w_ts"]}, 1),                                    # x_ts
    ], axis=0)                              # (6H+1, 20H)

    # Constant biases (node bias + SAGE lin_l bias) scattered into the same
    # gate-major layout, plus the hideout-feature projection (folded per call).
    bias_const = dest_pack({0: b[:, 1] + cbl[:, 6],
                            1: b[:, 2] + cbl[:, 9],
                            2: b[:, 3] + cbl[:, 0] + cbl[:, 8],
                            3: b[:, 4] + cbl[:, 1] + cbl[:, 7],
                            4: b[:, 5] + cbl[:, 2] + cbl[:, 3] + cbl[:, 4]}, 1)
    w_xh_scatter = dest_pack({0: params["w_hideout"]}, Fh)                    # (Fh, 20H)

    # --- readout HeteroConv(SAGEConv) -> state_summ, one matmul over [hid..ss]
    w_out = jnp.concatenate([
        jnp.zeros((H, H), F32),                                    # h_hid (unused)
        params["owl"][2],                                          # h_ts
        params["owl"][1],                                          # h_as
        params["owl"][0],                                          # h_hs
        params["owr"][0] + params["owr"][1] + params["owr"][2],    # h_ss (dest term)
    ], axis=0)
    w_out = jnp.pad(w_out, ((0, 0), (0, Hp - H)))                  # lane-dense (5H, Hp)
    b_out = jnp.pad(params["obl"][0] + params["obl"][1] + params["obl"][2],
                    ((0, 0), (0, Hp - H)))                         # (1, Hp)

    return dict(w_a=w_a.astype(BF16), w_b=w_b.astype(BF16), w_out=w_out.astype(BF16),
                bias_const=bias_const, w_xh_scatter=w_xh_scatter, b_out=b_out)


@jax.jit
def hetero_lstm_pallas(packed, agent_obs, hideout_obs, timestep_obs):
    B, seq_len, n_agents, Fa = agent_obs.shape
    H = packed["w_a"].shape[1] // 4
    Hp = packed["w_out"].shape[1]
    A = B * n_agents

    # Agent-major ("interleaved") row order: row j*B + b = agent j of graph b,
    # so the per-graph mean / broadcast are contiguous slice ops in the kernel.
    x_agent_seq = jnp.transpose(agent_obs.astype(F32), (1, 2, 0, 3)) \
                     .reshape(seq_len, A, Fa).astype(BF16)
    x_ts_seq = jnp.transpose(timestep_obs.astype(F32)).reshape(seq_len, B, 1).astype(BF16)

    # Per-call bias slab: constant biases + time-invariant hideout projection,
    # already scattered into the gate-major (B, 20H) lane layout.
    bias_b = packed["bias_const"] + jnp.dot(hideout_obs.astype(F32),
                                            packed["w_xh_scatter"],
                                            preferred_element_type=F32)

    inputs = (x_agent_seq, x_ts_seq, packed["w_a"], packed["w_b"], bias_b,
              packed["w_out"], packed["b_out"])

    def full_spec(a):
        nd = a.ndim
        return pl.BlockSpec(a.shape, lambda i, _nd=nd: (0,) * _nd)

    # TODO(synk): at production batch sizes add a leading 'parallel' batch grid
    # axis (or pl.core_map over a TensorCore mesh) so v7x's 2nd core participates.
    # TODO(synk): if seq_len/A/H ever scale beyond VMEM (v7x: 64 MiB), move
    # x_agent_seq/x_ts_seq to memory_space=pl.ANY and double-buffer the per-step
    # slab with pltpu.make_async_copy; at current sizes everything fits easily.
    out_pad = pl.pallas_call(
        _hetero_lstm_kernel,
        out_shape=jax.ShapeDtypeStruct((B, Hp), F32),
        grid_spec=pltpu.PrefetchScalarGridSpec(
            num_scalar_prefetch=0,
            grid=(1,),
            in_specs=[full_spec(a) for a in inputs],
            out_specs=pl.BlockSpec((B, Hp), lambda i: (0, 0))),
        compiler_params=pltpu.CompilerParams(dimension_semantics=("arbitrary",)),
    )(*inputs)
    return out_pad[:, :H]


# ---------------------------------------------------------------------------
# Pure-JAX reference (unfused math) for the correctness check.
# ---------------------------------------------------------------------------
def hetero_lstm_reference(params, agent_obs, hideout_obs, timestep_obs):
    B, seq_len, n_agents, Fa = agent_obs.shape
    H = params["w_agent"].shape[-1]
    magg, mbr, A = _graph_matrices(B, n_agents)
    x_agent_seq = jnp.transpose(agent_obs, (1, 0, 2, 3)).reshape(seq_len, A, Fa).astype(F32)
    x_hideout = hideout_obs.astype(F32)
    x_ts_seq = jnp.transpose(timestep_obs).reshape(seq_len, B, 1).astype(F32)

    ha = jnp.zeros((A, H), F32)
    ca = jnp.zeros((A, H), F32)
    hb = jnp.zeros((5, B, H), F32)
    cb = jnp.zeros((5, B, H), F32)
    for t in range(seq_len):
        ha, hb, ca, cb = _lstm_step(params, x_agent_seq[t], x_hideout, x_ts_seq[t],
                                    magg, mbr, ha, hb, ca, cb)
    return _outer_conv(params["owl"], params["obl"], params["owr"], hb)


# ---------------------------------------------------------------------------
# Deterministic parameter init (synthetic; shapes match the torch module).
# ---------------------------------------------------------------------------
def init_params(key, H, Fa=8, Fh=2):
    ks = jax.random.split(key, 10)
    s = 0.2
    return dict(
        w_agent=s * jax.random.normal(ks[0], (4, Fa, H), F32),
        w_hideout=s * jax.random.normal(ks[1], (4, Fh, H), F32),
        w_ts=s * jax.random.normal(ks[2], (4, 1, H), F32),
        b=s * jax.random.normal(ks[3], (4, 6, 1, H), F32),
        cwl=s * jax.random.normal(ks[4], (4, 10, H, H), F32),
        cbl=s * jax.random.normal(ks[5], (4, 10, 1, H), F32),
        cwr=s * jax.random.normal(ks[6], (4, 10, H, H), F32),
        owl=s * jax.random.normal(ks[7], (3, H, H), F32),
        obl=s * jax.random.normal(ks[8], (3, 1, H), F32),
        owr=s * jax.random.normal(ks[9], (3, H, H), F32),
    )


if __name__ == "__main__":
    key = jax.random.PRNGKey(0)
    B, seq_len, n_agents, H = 2, 8, 4, 32
    k1, k2, k3, kp = jax.random.split(key, 4)

    agent_obs = jax.random.normal(k1, (B, seq_len, n_agents, 8), F32)
    hideout_obs = jax.random.normal(k2, (B, 2), F32)
    timestep_obs = jnp.tile(jnp.arange(seq_len, dtype=F32)[None, :], (B, 1)) / seq_len
    num_agents = jnp.full((B,), n_agents, jnp.int32)   # all graphs share the static count

    params = init_params(kp, H)
    packed = prepare_params(params)          # one-time weight packing, outside the jit

    out = hetero_lstm_pallas(packed, agent_obs, hideout_obs, timestep_obs)
    out = jax.block_until_ready(out)

    ref = hetero_lstm_reference(params, agent_obs, hideout_obs, timestep_obs)

    assert out.shape == (B, H)
    assert bool(jnp.all(jnp.isfinite(out)))
    # bf16 MXU operands (f32 accumulation / cell state) => ~1e-2-scale tolerance.
    np.testing.assert_allclose(np.asarray(out), np.asarray(ref), rtol=3e-2, atol=3e-2)
    print("KERNEL_OK")
</pallas_src>

<mosaic_0001>
module attributes {stable_mosaic.version = 11 : i64} {
  func.func @_hetero_lstm_kernel(%arg0: i32, %arg1: memref<8x8x8xbf16, #tpu.memory_space<vmem>>, %arg2: memref<8x2x1xbf16, #tpu.memory_space<vmem>>, %arg3: memref<73x128xbf16, #tpu.memory_space<vmem>>, %arg4: memref<193x640xbf16, #tpu.memory_space<vmem>>, %arg5: memref<2x640xf32, #tpu.memory_space<vmem>>, %arg6: memref<160x128xbf16, #tpu.memory_space<vmem>>, %arg7: memref<1x128xf32, #tpu.memory_space<vmem>>, %arg8: memref<2x128xf32, #tpu.memory_space<vmem>>) attributes {dimension_semantics = [#tpu.dimension_semantics<arbitrary>], iteration_bounds = array<i64: 1>, scalar_prefetch = 0 : i64, scratch_operands = 0 : i64, tpu.core_type = #tpu.core_type<tc>, window_params = [{pipeline_mode = #tpu.pipeline_mode<synchronous>, transform_indices = @transform_0, window_bounds = array<i64: 8, 8, 8>}, {pipeline_mode = #tpu.pipeline_mode<synchronous>, transform_indices = @transform_1, window_bounds = array<i64: 8, 2, 1>}, {pipeline_mode = #tpu.pipeline_mode<synchronous>, transform_indices = @transform_2, window_bounds = array<i64: 73, 128>}, {pipeline_mode = #tpu.pipeline_mode<synchronous>, transform_indices = @transform_3, window_bounds = array<i64: 193, 640>}, {pipeline_mode = #tpu.pipeline_mode<synchronous>, transform_indices = @transform_4, window_bounds = array<i64: 2, 640>}, {pipeline_mode = #tpu.pipeline_mode<synchronous>, transform_indices = @transform_5, window_bounds = array<i64: 160, 128>}, {pipeline_mode = #tpu.pipeline_mode<synchronous>, transform_indices = @transform_6, window_bounds = array<i64: 1, 128>}, {pipeline_mode = #tpu.pipeline_mode<synchronous>, transform_indices = @transform_7, window_bounds = array<i64: 2, 128>}]} {
    %c0 = arith.constant 0 : index
    %c0_0 = arith.constant 0 : index
    %0 = vector.load %arg3[%c0, %c0_0] : memref<73x128xbf16, #tpu.memory_space<vmem>>, vector<73x128xbf16>
    %c0_1 = arith.constant 0 : index
    %c0_2 = arith.constant 0 : index
    %1 = vector.load %arg4[%c0_1, %c0_2] : memref<193x640xbf16, #tpu.memory_space<vmem>>, vector<193x640xbf16>
    %c0_3 = arith.constant 0 : index
    %c0_4 = arith.constant 0 : index
    %2 = vector.load %arg5[%c0_3, %c0_4] : memref<2x640xf32, #tpu.memory_space<vmem>>, vector<2x640xf32>
    %cst = arith.constant 1.000000e+00 : bf16
    %3 = vector.broadcast %cst : bf16 to vector<8x1xbf16>
    %cst_5 = arith.constant 0.000000e+00 : bf16
    %4 = vector.broadcast %cst_5 : bf16 to vector<8x32xbf16>
    %cst_6 = arith.constant 0.000000e+00 : bf16
    %5 = vector.broadcast %cst_6 : bf16 to vector<2x160xbf16>
    %cst_7 = arith.constant 0.000000e+00 : f32
    %6 = vector.broadcast %cst_7 : f32 to vector<8x32xf32>
    %cst_8 = arith.constant 0.000000e+00 : f32
    %7 = vector.broadcast %cst_8 : f32 to vector<2x160xf32>
    %cst_9 = arith.constant 2.500000e-01 : f32
    %c0_i32 = arith.constant 0 : i32
    %8 = arith.index_cast %c0_i32 : i32 to index
    %c0_10 = arith.constant 0 : index
    %c0_11 = arith.constant 0 : index
    %9 = vector.load %arg1[%8, %c0_10, %c0_11] : memref<8x8x8xbf16, #tpu.memory_space<vmem>>, vector<1x8x8xbf16>
    %10 = vector.shape_cast %9 : vector<1x8x8xbf16> to vector<8x8xbf16>
    %11 = arith.index_cast %c0_i32 : i32 to index
    %c0_12 = arith.constant 0 : index
    %c0_13 = arith.constant 0 : index
    %12 = vector.load %arg2[%11, %c0_12, %c0_13] : memref<8x2x1xbf16, #tpu.memory_space<vmem>>, vector<1x2x1xbf16>
    %13 = vector.shape_cast %12 : vector<1x2x1xbf16> to vector<2x1xbf16>
    %cst_14 = arith.constant 0.000000e+00 : f32
    %14 = vector.broadcast %cst_14 : f32 to vector<2x32xf32>
    %15 = vector.extract_strided_slice %4 {offsets = [0, 0], sizes = [2, 32], strides = [1, 1]} : vector<8x32xbf16> to vector<2x32xbf16>
    %16 = arith.extf %15 : vector<2x32xbf16> to vector<2x32xf32>
    %17 = arith.addf %14, %16 : vector<2x32xf32>
    %18 = vector.extract_strided_slice %4 {offsets = [2, 0], sizes = [2, 32], strides = [1, 1]} : vector<8x32xbf16> to vector<2x32xbf16>
    %19 = arith.extf %18 : vector<2x32xbf16> to vector<2x32xf32>
    %20 = arith.addf %17, %19 : vector<2x32xf32>
    %21 = vector.extract_strided_slice %4 {offsets = [4, 0], sizes = [2, 32], strides = [1, 1]} : vector<8x32xbf16> to vector<2x32xbf16>
    %22 = arith.extf %21 : vector<2x32xbf16> to vector<2x32xf32>
    %23 = arith.addf %20, %22 : vector<2x32xf32>
    %24 = vector.extract_strided_slice %4 {offsets = [6, 0], sizes = [2, 32], strides = [1, 1]} : vector<8x32xbf16> to vector<2x32xbf16>
    %25 = arith.extf %24 : vector<2x32xbf16> to vector<2x32xf32>
    %26 = arith.addf %23, %25 : vector<2x32xf32>
    %27 = vector.broadcast %cst_9 : f32 to vector<2x32xf32>
    %28 = arith.mulf %26, %27 : vector<2x32xf32>
    %29 = arith.truncf %28 : vector<2x32xf32> to vector<2x32xbf16>
    %30 = vector.extract_strided_slice %5 {offsets = [0, 64], sizes = [2, 32], strides = [1, 1]} : vector<2x160xbf16> to vector<2x32xbf16>
    %31 = tpu.concatenate %30, %30, %30, %30 in 0 : vector<2x32xbf16>, vector<2x32xbf16>, vector<2x32xbf16>, vector<2x32xbf16> -> vector<8x32xbf16>
    %32 = tpu.concatenate %4, %31, %10, %3 in 1 : vector<8x32xbf16>, vector<8x32xbf16>, vector<8x8xbf16>, vector<8x1xbf16> -> vector<8x73xbf16>
    %cst_15 = arith.constant dense<0.000000e+00> : vector<8x128xf32>
    %33 = tpu.matmul %32, %0, %cst_15 {dimension_numbers = #tpu.dot_dimension_numbers<[1], [0], [0], [1], [0, 0, 1, 1], [], []>} : vector<8x73xbf16>, vector<73x128xbf16>, vector<8x128xf32> -> vector<8x128xf32>
    %34 = tpu.concatenate %5, %29, %13 in 1 : vector<2x160xbf16>, vector<2x32xbf16>, vector<2x1xbf16> -> vector<2x193xbf16>
    %cst_16 = arith.constant dense<0.000000e+00> : vector<2x640xf32>
    %35 = tpu.matmul %34, %1, %cst_16 {dimension_numbers = #tpu.dot_dimension_numbers<[1], [0], [0], [1], [0, 0, 1, 1], [], []>} : vector<2x193xbf16>, vector<193x640xbf16>, vector<2x640xf32> -> vector<2x640xf32>
    %36 = arith.addf %35, %2 : vector<2x640xf32>
    %37 = vector.extract_strided_slice %33 {offsets = [0, 0], sizes = [8, 32], strides = [1, 1]} : vector<8x128xf32> to vector<8x32xf32>
    %38 = arith.negf %37 : vector<8x32xf32>
    %39 = math.exp %38 : vector<8x32xf32>
    %cst_17 = arith.constant 1.000000e+00 : f32
    %40 = vector.broadcast %cst_17 : f32 to vector<8x32xf32>
    %41 = arith.addf %40, %39 : vector<8x32xf32>
    %42 = arith.divf %40, %41 : vector<8x32xf32>
    %43 = vector.extract_strided_slice %33 {offsets = [0, 32], sizes = [8, 32], strides = [1, 1]} : vector<8x128xf32> to vector<8x32xf32>
    %44 = arith.negf %43 : vector<8x32xf32>
    %45 = math.exp %44 : vector<8x32xf32>
    %cst_18 = arith.constant 1.000000e+00 : f32
    %46 = vector.broadcast %cst_18 : f32 to vector<8x32xf32>
    %47 = arith.addf %46, %45 : vector<8x32xf32>
    %48 = arith.divf %46, %47 : vector<8x32xf32>
    %49 = vector.extract_strided_slice %33 {offsets = [0, 64], sizes = [8, 32], strides = [1, 1]} : vector<8x128xf32> to vector<8x32xf32>
    %50 = math.tanh %49 : vector<8x32xf32>
    %51 = vector.extract_strided_slice %33 {offsets = [0, 96], sizes = [8, 32], strides = [1, 1]} : vector<8x128xf32> to vector<8x32xf32>
    %52 = arith.negf %51 : vector<8x32xf32>
    %53 = math.exp %52 : vector<8x32xf32>
    %cst_19 = arith.constant 1.000000e+00 : f32
    %54 = vector.broadcast %cst_19 : f32 to vector<8x32xf32>
    %55 = arith.addf %54, %53 : vector<8x32xf32>
    %56 = arith.divf %54, %55 : vector<8x32xf32>
    %57 = arith.mulf %48, %6 : vector<8x32xf32>
    %58 = arith.mulf %42, %50 : vector<8x32xf32>
    %59 = arith.addf %57, %58 : vector<8x32xf32>
    %60 = math.tanh %59 : vector<8x32xf32>
    %61 = arith.mulf %56, %60 : vector<8x32xf32>
    %62 = arith.truncf %61 : vector<8x32xf32> to vector<8x32xbf16>
    %63 = vector.extract_strided_slice %36 {offsets = [0, 0], sizes = [2, 160], strides = [1, 1]} : vector<2x640xf32> to vector<2x160xf32>
    %64 = arith.negf %63 : vector<2x160xf32>
    %65 = math.exp %64 : vector<2x160xf32>
    %cst_20 = arith.constant 1.000000e+00 : f32
    %66 = vector.broadcast %cst_20 : f32 to vector<2x160xf32>
    %67 = arith.addf %66, %65 : vector<2x160xf32>
    %68 = arith.divf %66, %67 : vector<2x160xf32>
    %69 = vector.extract_strided_slice %36 {offsets = [0, 160], sizes = [2, 160], strides = [1, 1]} : vector<2x640xf32> to vector<2x160xf32>
    %70 = arith.negf %69 : vector<2x160xf32>
    %71 = math.exp %70 : vector<2x160xf32>
    %cst_21 = arith.constant 1.000000e+00 : f32
    %72 = vector.broadcast %cst_21 : f32 to vector<2x160xf32>
    %73 = arith.addf %72, %71 : vector<2x160xf32>
    %74 = arith.divf %72, %73 : vector<2x160xf32>
    %75 = vector.extract_strided_slice %36 {offsets = [0, 320], sizes = [2, 160], strides = [1, 1]} : vector<2x640xf32> to vector<2x160xf32>
    %76 = math.tanh %75 : vector<2x160xf32>
    %77 = vector.extract_strided_slice %36 {offsets = [0, 480], sizes = [2, 160], strides = [1, 1]} : vector<2x640xf32> to vector<2x160xf32>
    %78 = arith.negf %77 : vector<2x160xf32>
    %79 = math.exp %78 : vector<2x160xf32>
    %cst_22 = arith.constant 1.000000e+00 : f32
    %80 = vector.broadcast %cst_22 : f32 to vector<2x160xf32>
    %81 = arith.addf %80, %79 : vector<2x160xf32>
    %82 = arith.divf %80, %81 : vector<2x160xf32>
    %83 = arith.mulf %74, %7 : vector<2x160xf32>
    %84 = arith.mulf %68, %76 : vector<2x160xf32>
    %85 = arith.addf %83, %84 : vector<2x160xf32>
    %86 = math.tanh %85 : vector<2x160xf32>
    %87 = arith.mulf %82, %86 : vector<2x160xf32>
    %88 = arith.truncf %87 : vector<2x160xf32> to vector<2x160xbf16>
    %c1_i32 = arith.constant 1 : i32
    %89 = arith.index_cast %c1_i32 : i32 to index
    %c0_23 = arith.constant 0 : index
    %c0_24 = arith.constant 0 : index
    %90 = vector.load %arg1[%89, %c0_23, %c0_24] : memref<8x8x8xbf16, #tpu.memory_space<vmem>>, vector<1x8x8xbf16>
    %91 = vector.shape_cast %90 : vector<1x8x8xbf16> to vector<8x8xbf16>
    %92 = arith.index_cast %c1_i32 : i32 to index
    %c0_25 = arith.constant 0 : index
    %c0_26 = arith.constant 0 : index
    %93 = vector.load %arg2[%92, %c0_25, %c0_26] : memref<8x2x1xbf16, #tpu.memory_space<vmem>>, vector<1x2x1xbf16>
    %94 = vector.shape_cast %93 : vector<1x2x1xbf16> to vector<2x1xbf16>
    %cst_27 = arith.constant 0.000000e+00 : f32
    %95 = vector.broadcast %cst_27 : f32 to vector<2x32xf32>
    %96 = vector.extract_strided_slice %62 {offsets = [0, 0], sizes = [2, 32], strides = [1, 1]} : vector<8x32xbf16> to vector<2x32xbf16>
    %97 = arith.extf %96 : vector<2x32xbf16> to vector<2x32xf32>
    %98 = arith.addf %95, %97 : vector<2x32xf32>
    %99 = vector.extract_strided_slice %62 {offsets = [2, 0], sizes = [2, 32], strides = [1, 1]} : vector<8x32xbf16> to vector<2x32xbf16>
    %100 = arith.extf %99 : vector<2x32xbf16> to vector<2x32xf32>
    %101 = arith.addf %98, %100 : vector<2x32xf32>
    %102 = vector.extract_strided_slice %62 {offsets = [4, 0], sizes = [2, 32], strides = [1, 1]} : vector<8x32xbf16> to vector<2x32xbf16>
    %103 = arith.extf %102 : vector<2x32xbf16> to vector<2x32xf32>
    %104 = arith.addf %101, %103 : vector<2x32xf32>
    %105 = vector.extract_strided_slice %62 {offsets = [6, 0], sizes = [2, 32], strides = [1, 1]} : vector<8x32xbf16> to vector<2x32xbf16>
    %106 = arith.extf %105 : vector<2x32xbf16> to vector<2x32xf32>
    %107 = arith.addf %104, %106 : vector<2x32xf32>
    %108 = vector.broadcast %cst_9 : f32 to vector<2x32xf32>
    %109 = arith.mulf %107, %108 : vector<2x32xf32>
    %110 = arith.truncf %109 : vector<2x32xf32> to vector<2x32xbf16>
    %111 = vector.extract_strided_slice %88 {offsets = [0, 64], sizes = [2, 32], strides = [1, 1]} : vector<2x160xbf16> to vector<2x32xbf16>
    %112 = tpu.concatenate %111, %111, %111, %111 in 0 : vector<2x32xbf16>, vector<2x32xbf16>, vector<2x32xbf16>, vector<2x32xbf16> -> vector<8x32xbf16>
    %113 = tpu.concatenate %62, %112, %91, %3 in 1 : vector<8x32xbf16>, vector<8x32xbf16>, vector<8x8xbf16>, vector<8x1xbf16> -> vector<8x73xbf16>
    %cst_28 = arith.constant dense<0.000000e+00> : vector<8x128xf32>
    %114 = tpu.matmul %113, %0, %cst_28 {dimension_numbers = #tpu.dot_dimension_numbers<[1], [0], [0], [1], [0, 0, 1, 1], [], []>} : vector<8x73xbf16>, vector<73x128xbf16>, vector<8x128xf32> -> vector<8x128xf32>
    %115 = tpu.concatenate %88, %110, %94 in 1 : vector<2x160xbf16>, vector<2x32xbf16>, vector<2x1xbf16> -> vector<2x193xbf16>
    %cst_29 = arith.constant dense<0.000000e+00> : vector<2x640xf32>
    %116 = tpu.matmul %115, %1, %cst_29 {dimension_numbers = #tpu.dot_dimension_numbers<[1], [0], [0], [1], [0, 0, 1, 1], [], []>} : vector<2x193xbf16>, vector<193x640xbf16>, vector<2x640xf32> -> vector<2x640xf32>
    %117 = arith.addf %116, %2 : vector<2x640xf32>
    %118 = vector.extract_strided_slice %114 {offsets = [0, 0], sizes = [8, 32], strides = [1, 1]} : vector<8x128xf32> to vector<8x32xf32>
    %119 = arith.negf %118 : vector<8x32xf32>
    %120 = math.exp %119 : vector<8x32xf32>
    %cst_30 = arith.constant 1.000000e+00 : f32
    %121 = vector.broadcast %cst_30 : f32 to vector<8x32xf32>
    %122 = arith.addf %121, %120 : vector<8x32xf32>
    %123 = arith.divf %121, %122 : vector<8x32xf32>
    %124 = vector.extract_strided_slice %114 {offsets = [0, 32], sizes = [8, 32], strides = [1, 1]} : vector<8x128xf32> to vector<8x32xf32>
    %125 = arith.negf %124 : vector<8x32xf32>
    %126 = math.exp %125 : vector<8x32xf32>
    %cst_31 = arith.constant 1.000000e+00 : f32
    %127 = vector.broadcast %cst_31 : f32 to vector<8x32xf32>
    %128 = arith.addf %127, %126 : vector<8x32xf32>
    %129 = arith.divf %127, %128 : vector<8x32xf32>
    %130 = vector.extract_strided_slice %114 {offsets = [0, 64], sizes = [8, 32], strides = [1, 1]} : vector<8x128xf32> to vector<8x32xf32>
    %131 = math.tanh %130 : vector<8x32xf32>
    %132 = vector.extract_strided_slice %114 {offsets = [0, 96], sizes = [8, 32], strides = [1, 1]} : vector<8x128xf32> to vector<8x32xf32>
    %133 = arith.negf %132 : vector<8x32xf32>
    %134 = math.exp %133 : vector<8x32xf32>
    %cst_32 = arith.constant 1.000000e+00 : f32
    %135 = vector.broadcast %cst_32 : f32 to vector<8x32xf32>
    %136 = arith.addf %135, %134 : vector<8x32xf32>
    %137 = arith.divf %135, %136 : vector<8x32xf32>
    %138 = arith.mulf %129, %59 : vector<8x32xf32>
    %139 = arith.mulf %123, %131 : vector<8x32xf32>
    %140 = arith.addf %138, %139 : vector<8x32xf32>
    %141 = math.tanh %140 : vector<8x32xf32>
    %142 = arith.mulf %137, %141 : vector<8x32xf32>
    %143 = arith.truncf %142 : vector<8x32xf32> to vector<8x32xbf16>
    %144 = vector.extract_strided_slice %117 {offsets = [0, 0], sizes = [2, 160], strides = [1, 1]} : vector<2x640xf32> to vector<2x160xf32>
    %145 = arith.negf %144 : vector<2x160xf32>
    %146 = math.exp %145 : vector<2x160xf32>
    %cst_33 = arith.constant 1.000000e+00 : f32
    %147 = vector.broadcast %cst_33 : f32 to vector<2x160xf32>
    %148 = arith.addf %147, %146 : vector<2x160xf32>
    %149 = arith.divf %147, %148 : vector<2x160xf32>
    %150 = vector.extract_strided_slice %117 {offsets = [0, 160], sizes = [2, 160], strides = [1, 1]} : vector<2x640xf32> to vector<2x160xf32>
    %151 = arith.negf %150 : vector<2x160xf32>
    %152 = math.exp %151 : vector<2x160xf32>
    %cst_34 = arith.constant 1.000000e+00 : f32
    %153 = vector.broadcast %cst_34 : f32 to vector<2x160xf32>
    %154 = arith.addf %153, %152 : vector<2x160xf32>
    %155 = arith.divf %153, %154 : vector<2x160xf32>
    %156 = vector.extract_strided_slice %117 {offsets = [0, 320], sizes = [2, 160], strides = [1, 1]} : vector<2x640xf32> to vector<2x160xf32>
    %157 = math.tanh %156 : vector<2x160xf32>
    %158 = vector.extract_strided_slice %117 {offsets = [0, 480], sizes = [2, 160], strides = [1, 1]} : vector<2x640xf32> to vector<2x160xf32>
    %159 = arith.negf %158 : vector<2x160xf32>
    %160 = math.exp %159 : vector<2x160xf32>
    %cst_35 = arith.constant 1.000000e+00 : f32
    %161 = vector.broadcast %cst_35 : f32 to vector<2x160xf32>
    %162 = arith.addf %161, %160 : vector<2x160xf32>
    %163 = arith.divf %161, %162 : vector<2x160xf32>
    %164 = arith.mulf %155, %85 : vector<2x160xf32>
    %165 = arith.mulf %149, %157 : vector<2x160xf32>
    %166 = arith.addf %164, %165 : vector<2x160xf32>
    %167 = math.tanh %166 : vector<2x160xf32>
    %168 = arith.mulf %163, %167 : vector<2x160xf32>
    %169 = arith.truncf %168 : vector<2x160xf32> to vector<2x160xbf16>
    %c2_i32 = arith.constant 2 : i32
    %170 = arith.index_cast %c2_i32 : i32 to index
    %c0_36 = arith.constant 0 : index
    %c0_37 = arith.constant 0 : index
    %171 = vector.load %arg1[%170, %c0_36, %c0_37] : memref<8x8x8xbf16, #tpu.memory_space<vmem>>, vector<1x8x8xbf16>
    %172 = vector.shape_cast %171 : vector<1x8x8xbf16> to vector<8x8xbf16>
    %173 = arith.index_cast %c2_i32 : i32 to index
    %c0_38 = arith.constant 0 : index
    %c0_39 = arith.constant 0 : index
    %174 = vector.load %arg2[%173, %c0_38, %c0_39] : memref<8x2x1xbf16, #tpu.memory_space<vmem>>, vector<1x2x1xbf16>
    %175 = vector.shape_cast %174 : vector<1x2x1xbf16> to vector<2x1xbf16>
    %cst_40 = arith.constant 0.000000e+00 : f32
    %176 = vector.broadcast %cst_40 : f32 to vector<2x32xf32>
    %177 = vector.extract_strided_slice %143 {offsets = [0, 0], sizes = [2, 32], strides = [1, 1]} : vector<8x32xbf16> to vector<2x32xbf16>
    %178 = arith.extf %177 : vector<2x32xbf16> to vector<2x32xf32>
    %179 = arith.addf %176, %178 : vector<2x32xf32>
    %180 = vector.extract_strided_slice %143 {offsets = [2, 0], sizes = [2, 32], strides = [1, 1]} : vector<8x32xbf16> to vector<2x32xbf16>
    %181 = arith.extf %180 : vector<2x32xbf16> to vector<2x32xf32>
    %182 = arith.addf %179, %181 : vector<2x32xf32>
    %183 = vector.extract_strided_slice %143 {offsets = [4, 0], sizes = [2, 32], strides = [1, 1]} : vector<8x32xbf16> to vector<2x32xbf16>
    %184 = arith.extf %183 : vector<2x32xbf16> to vector<2x32xf32>
    %185 = arith.addf %182, %184 : vector<2x32xf32>
    %186 = vector.extract_strided_slice %143 {offsets = [6, 0], sizes = [2, 32], strides = [1, 1]} : vector<8x32xbf16> to vector<2x32xbf16>
    %187 = arith.extf %186 : vector<2x32xbf16> to vector<2x32xf32>
    %188 = arith.addf %185, %187 : vector<2x32xf32>
    %189 = vector.broadcast %cst_9 : f32 to vector<2x32xf32>
    %190 = arith.mulf %188, %189 : vector<2x32xf32>
    %191 = arith.truncf %190 : vector<2x32xf32> to vector<2x32xbf16>
    %192 = vector.extract_strided_slice %169 {offsets = [0, 64], sizes = [2, 32], strides = [1, 1]} : vector<2x160xbf16> to vector<2x32xbf16>
    %193 = tpu.concatenate %192, %192, %192, %192 in 0 : vector<2x32xbf16>, vector<2x32xbf16>, vector<2x32xbf16>, vector<2x32xbf16> -> vector<8x32xbf16>
    %194 = tpu.concatenate %143, %193, %172, %3 in 1 : vector<8x32xbf16>, vector<8x32xbf16>, vector<8x8xbf16>, vector<8x1xbf16> -> vector<8x73xbf16>
    %cst_41 = arith.constant dense<0.000000e+00> : vector<8x128xf32>
    %195 = tpu.matmul %194, %0, %cst_41 {dimension_numbers = #tpu.dot_dimension_numbers<[1], [0], [0], [1], [0, 0, 1, 1], [], []>} : vector<8x73xbf16>, vector<73x128xbf16>, vector<8x128xf32> -> vector<8x128xf32>
    %196 = tpu.concatenate %169, %191, %175 in 1 : vector<2x160xbf16>, vector<2x32xbf16>, vector<2x1xbf16> -> vector<2x193xbf16>
    %cst_42 = arith.constant dense<0.000000e+00> : vector<2x640xf32>
    %197 = tpu.matmul %196, %1, %cst_42 {dimension_numbers = #tpu.dot_dimension_numbers<[1], [0], [0], [1], [0, 0, 1, 1], [], []>} : vector<2x193xbf16>, vector<193x640xbf16>, vector<2x640xf32> -> vector<2x640xf32>
    %198 = arith.addf %197, %2 : vector<2x640xf32>
    %199 = vector.extract_strided_slice %195 {offsets = [0, 0], sizes = [8, 32], strides = [1, 1]} : vector<8x128xf32> to vector<8x32xf32>
    %200 = arith.negf %199 : vector<8x32xf32>
    %201 = math.exp %200 : vector<8x32xf32>
    %cst_43 = arith.constant 1.000000e+00 : f32
    %202 = vector.broadcast %cst_43 : f32 to vector<8x32xf32>
    %203 = arith.addf %202, %201 : vector<8x32xf32>
    %204 = arith.divf %202, %203 : vector<8x32xf32>
    %205 = vector.extract_strided_slice %195 {offsets = [0, 32], sizes = [8, 32], strides = [1, 1]} : vector<8x128xf32> to vector<8x32xf32>
    %206 = arith.negf %205 : vector<8x32xf32>
    %207 = math.exp %206 : vector<8x32xf32>
    %cst_44 = arith.constant 1.000000e+00 : f32
    %208 = vector.broadcast %cst_44 : f32 to vector<8x32xf32>
    %209 = arith.addf %208, %207 : vector<8x32xf32>
    %210 = arith.divf %208, %209 : vector<8x32xf32>
    %211 = vector.extract_strided_slice %195 {offsets = [0, 64], sizes = [8, 32], strides = [1, 1]} : vector<8x128xf32> to vector<8x32xf32>
    %212 = math.tanh %211 : vector<8x32xf32>
    %213 = vector.extract_strided_slice %195 {offsets = [0, 96], sizes = [8, 32], strides = [1, 1]} : vector<8x128xf32> to vector<8x32xf32>
    %214 = arith.negf %213 : vector<8x32xf32>
    %215 = math.exp %214 : vector<8x32xf32>
    %cst_45 = arith.constant 1.000000e+00 : f32
    %216 = vector.broadcast %cst_45 : f32 to vector<8x32xf32>
    %217 = arith.addf %216, %215 : vector<8x32xf32>
    %218 = arith.divf %216, %217 : vector<8x32xf32>
    %219 = arith.mulf %210, %140 : vector<8x32xf32>
    %220 = arith.mulf %204, %212 : vector<8x32xf32>
    %221 = arith.addf %219, %220 : vector<8x32xf32>
    %222 = math.tanh %221 : vector<8x32xf32>
    %223 = arith.mulf %218, %222 : vector<8x32xf32>
    %224 = arith.truncf %223 : vector<8x32xf32> to vector<8x32xbf16>
    %225 = vector.extract_strided_slice %198 {offsets = [0, 0], sizes = [2, 160], strides = [1, 1]} : vector<2x640xf32> to vector<2x160xf32>
    %226 = arith.negf %225 : vector<2x160xf32>
    %227 = math.exp %226 : vector<2x160xf32>
    %cst_46 = arith.constant 1.000000e+00 : f32
    %228 = vector.broadcast %cst_46 : f32 to vector<2x160xf32>
    %229 = arith.addf %228, %227 : vector<2x160xf32>
    %230 = arith.divf %228, %229 : vector<2x160xf32>
    %231 = vector.extract_strided_slice %198 {offsets = [0, 160], sizes = [2, 160], strides = [1, 1]} : vector<2x640xf32> to vector<2x160xf32>
    %232 = arith.negf %231 : vector<2x160xf32>
    %233 = math.exp %232 : vector<2x160xf32>
    %cst_47 = arith.constant 1.000000e+00 : f32
    %234 = vector.broadcast %cst_47 : f32 to vector<2x160xf32>
    %235 = arith.addf %234, %233 : vector<2x160xf32>
    %236 = arith.divf %234, %235 : vector<2x160xf32>
    %237 = vector.extract_strided_slice %198 {offsets = [0, 320], sizes = [2, 160], strides = [1, 1]} : vector<2x640xf32> to vector<2x160xf32>
    %238 = math.tanh %237 : vector<2x160xf32>
    %239 = vector.extract_strided_slice %198 {offsets = [0, 480], sizes = [2, 160], strides = [1, 1]} : vector<2x640xf32> to vector<2x160xf32>
    %240 = arith.negf %239 : vector<2x160xf32>
    %241 = math.exp %240 : vector<2x160xf32>
    %cst_48 = arith.constant 1.000000e+00 : f32
    %242 = vector.broadcast %cst_48 : f32 to vector<2x160xf32>
    %243 = arith.addf %242, %241 : vector<2x160xf32>
    %244 = arith.divf %242, %243 : vector<2x160xf32>
    %245 = arith.mulf %236, %166 : vector<2x160xf32>
    %246 = arith.mulf %230, %238 : vector<2x160xf32>
    %247 = arith.addf %245, %246 : vector<2x160xf32>
    %248 = math.tanh %247 : vector<2x160xf32>
    %249 = arith.mulf %244, %248 : vector<2x160xf32>
    %250 = arith.truncf %249 : vector<2x160xf32> to vector<2x160xbf16>
    %c3_i32 = arith.constant 3 : i32
    %251 = arith.index_cast %c3_i32 : i32 to index
    %c0_49 = arith.constant 0 : index
    %c0_50 = arith.constant 0 : index
    %252 = vector.load %arg1[%251, %c0_49, %c0_50] : memref<8x8x8xbf16, #tpu.memory_space<vmem>>, vector<1x8x8xbf16>
    %253 = vector.shape_cast %252 : vector<1x8x8xbf16> to vector<8x8xbf16>
    %254 = arith.index_cast %c3_i32 : i32 to index
    %c0_51 = arith.constant 0 : index
    %c0_52 = arith.constant 0 : index
    %255 = vector.load %arg2[%254, %c0_51, %c0_52] : memref<8x2x1xbf16, #tpu.memory_space<vmem>>, vector<1x2x1xbf16>
    %256 = vector.shape_cast %255 : vector<1x2x1xbf16> to vector<2x1xbf16>
    %cst_53 = arith.constant 0.000000e+00 : f32
    %257 = vector.broadcast %cst_53 : f32 to vector<2x32xf32>
    %258 = vector.extract_strided_slice %224 {offsets = [0, 0], sizes = [2, 32], strides = [1, 1]} : vector<8x32xbf16> to vector<2x32xbf16>
    %259 = arith.extf %258 : vector<2x32xbf16> to vector<2x32xf32>
    %260 = arith.addf %257, %259 : vector<2x32xf32>
    %261 = vector.extract_strided_slice %224 {offsets = [2, 0], sizes = [2, 32], strides = [1, 1]} : vector<8x32xbf16> to vector<2x32xbf16>
    %262 = arith.extf %261 : vector<2x32xbf16> to vector<2x32xf32>
    %263 = arith.addf %260, %262 : vector<2x32xf32>
    %264 = vector.extract_strided_slice %224 {offsets = [4, 0], sizes = [2, 32], strides = [1, 1]} : vector<8x32xbf16> to vector<2x32xbf16>
    %265 = arith.extf %264 : vector<2x32xbf16> to vector<2x32xf32>
    %266 = arith.addf %263, %265 : vector<2x32xf32>
    %267 = vector.extract_strided_slice %224 {offsets = [6, 0], sizes = [2, 32], strides = [1, 1]} : vector<8x32xbf16> to vector<2x32xbf16>
    %268 = arith.extf %267 : vector<2x32xbf16> to vector<2x32xf32>
    %269 = arith.addf %266, %268 : vector<2x32xf32>
    %270 = vector.broadcast %cst_9 : f32 to vector<2x32xf32>
    %271 = arith.mulf %269, %270 : vector<2x32xf32>
    %272 = arith.truncf %271 : vector<2x32xf32> to vector<2x32xbf16>
    %273 = vector.extract_strided_slice %250 {offsets = [0, 64], sizes = [2, 32], strides = [1, 1]} : vector<2x160xbf16> to vector<2x32xbf16>
    %274 = tpu.concatenate %273, %273, %273, %273 in 0 : vector<2x32xbf16>, vector<2x32xbf16>, vector<2x32xbf16>, vector<2x32xbf16> -> vector<8x32xbf16>
    %275 = tpu.concatenate %224, %274, %253, %3 in 1 : vector<8x32xbf16>, vector<8x32xbf16>, vector<8x8xbf16>, vector<8x1xbf16> -> vector<8x73xbf16>
    %cst_54 = arith.constant dense<0.000000e+00> : vector<8x128xf32>
    %276 = tpu.matmul %275, %0, %cst_54 {dimension_numbers = #tpu.dot_dimension_numbers<[1], [0], [0], [1], [0, 0, 1, 1], [], []>} : vector<8x73xbf16>, vector<73x128xbf16>, vector<8x128xf32> -> vector<8x128xf32>
    %277 = tpu.concatenate %250, %272, %256 in 1 : vector<2x160xbf16>, vector<2x32xbf16>, vector<2x1xbf16> -> vector<2x193xbf16>
    %cst_55 = arith.constant dense<0.000000e+00> : vector<2x640xf32>
    %278 = tpu.matmul %277, %1, %cst_55 {dimension_numbers = #tpu.dot_dimension_numbers<[1], [0], [0], [1], [0, 0, 1, 1], [], []>} : vector<2x193xbf16>, vector<193x640xbf16>, vector<2x640xf32> -> vector<2x640xf32>
    %279 = arith.addf %278, %2 : vector<2x640xf32>
    %280 = vector.extract_strided_slice %276 {offsets = [0, 0], sizes = [8, 32], strides = [1, 1]} : vector<8x128xf32> to vector<8x32xf32>
    %281 = arith.negf %280 : vector<8x32xf32>
    %282 = math.exp %281 : vector<8x32xf32>
    %cst_56 = arith.constant 1.000000e+00 : f32
    %283 = vector.broadcast %cst_56 : f32 to vector<8x32xf32>
    %284 = arith.addf %283, %282 : vector<8x32xf32>
    %285 = arith.divf %283, %284 : vector<8x32xf32>
    %286 = vector.extract_strided_slice %276 {offsets = [0, 32], sizes = [8, 32], strides = [1, 1]} : vector<8x128xf32> to vector<8x32xf32>
    %287 = arith.negf %286 : vector<8x32xf32>
    %288 = math.exp %287 : vector<8x32xf32>
    %cst_57 = arith.constant 1.000000e+00 : f32
    %289 = vector.broadcast %cst_57 : f32 to vector<8x32xf32>
    %290 = arith.addf %289, %288 : vector<8x32xf32>
    %291 = arith.divf %289, %290 : vector<8x32xf32>
    %292 = vector.extract_strided_slice %276 {offsets = [0, 64], sizes = [8, 32], strides = [1, 1]} : vector<8x128xf32> to vector<8x32xf32>
    %293 = math.tanh %292 : vector<8x32xf32>
    %294 = vector.extract_strided_slice %276 {offsets = [0, 96], sizes = [8, 32], strides = [1, 1]} : vector<8x128xf32> to vector<8x32xf32>
    %295 = arith.negf %294 : vector<8x32xf32>
    %296 = math.exp %295 : vector<8x32xf32>
    %cst_58 = arith.constant 1.000000e+00 : f32
    %297 = vector.broadcast %cst_58 : f32 to vector<8x32xf32>
    %298 = arith.addf %297, %296 : vector<8x32xf32>
    %299 = arith.divf %297, %298 : vector<8x32xf32>
    %300 = arith.mulf %291, %221 : vector<8x32xf32>
    %301 = arith.mulf %285, %293 : vector<8x32xf32>
    %302 = arith.addf %300, %301 : vector<8x32xf32>
    %303 = math.tanh %302 : vector<8x32xf32>
    %304 = arith.mulf %299, %303 : vector<8x32xf32>
    %305 = arith.truncf %304 : vector<8x32xf32> to vector<8x32xbf16>
    %306 = vector.extract_strided_slice %279 {offsets = [0, 0], sizes = [2, 160], strides = [1, 1]} : vector<2x640xf32> to vector<2x160xf32>
    %307 = arith.negf %306 : vector<2x160xf32>
    %308 = math.exp %307 : vector<2x160xf32>
    %cst_59 = arith.constant 1.000000e+00 : f32
    %309 = vector.broadcast %cst_59 : f32 to vector<2x160xf32>
    %310 = arith.addf %309, %308 : vector<2x160xf32>
    %311 = arith.divf %309, %310 : vector<2x160xf32>
    %312 = vector.extract_strided_slice %279 {offsets = [0, 160], sizes = [2, 160], strides = [1, 1]} : vector<2x640xf32> to vector<2x160xf32>
    %313 = arith.negf %312 : vector<2x160xf32>
    %314 = math.exp %313 : vector<2x160xf32>
    %cst_60 = arith.constant 1.000000e+00 : f32
    %315 = vector.broadcast %cst_60 : f32 to vector<2x160xf32>
    %316 = arith.addf %315, %314 : vector<2x160xf32>
    %317 = arith.divf %315, %316 : vector<2x160xf32>
    %318 = vector.extract_strided_slice %279 {offsets = [0, 320], sizes = [2, 160], strides = [1, 1]} : vector<2x640xf32> to vector<2x160xf32>
    %319 = math.tanh %318 : vector<2x160xf32>
    %320 = vector.extract_strided_slice %279 {offsets = [0, 480], sizes = [2, 160], strides = [1, 1]} : vector<2x640xf32> to vector<2x160xf32>
    %321 = arith.negf %320 : vector<2x160xf32>
    %322 = math.exp %321 : vector<2x160xf32>
    %cst_61 = arith.constant 1.000000e+00 : f32
    %323 = vector.broadcast %cst_61 : f32 to vector<2x160xf32>
    %324 = arith.addf %323, %322 : vector<2x160xf32>
    %325 = arith.divf %323, %324 : vector<2x160xf32>
    %326 = arith.mulf %317, %247 : vector<2x160xf32>
    %327 = arith.mulf %311, %319 : vector<2x160xf32>
    %328 = arith.addf %326, %327 : vector<2x160xf32>
    %329 = math.tanh %328 : vector<2x160xf32>
    %330 = arith.mulf %325, %329 : vector<2x160xf32>
    %331 = arith.truncf %330 : vector<2x160xf32> to vector<2x160xbf16>
    %c4_i32 = arith.constant 4 : i32
    %332 = arith.index_cast %c4_i32 : i32 to index
    %c0_62 = arith.constant 0 : index
    %c0_63 = arith.constant 0 : index
    %333 = vector.load %arg1[%332, %c0_62, %c0_63] : memref<8x8x8xbf16, #tpu.memory_space<vmem>>, vector<1x8x8xbf16>
    %334 = vector.shape_cast %333 : vector<1x8x8xbf16> to vector<8x8xbf16>
    %335 = arith.index_cast %c4_i32 : i32 to index
    %c0_64 = arith.constant 0 : index
    %c0_65 = arith.constant 0 : index
    %336 = vector.load %arg2[%335, %c0_64, %c0_65] : memref<8x2x1xbf16, #tpu.memory_space<vmem>>, vector<1x2x1xbf16>
    %337 = vector.shape_cast %336 : vector<1x2x1xbf16> to vector<2x1xbf16>
    %cst_66 = arith.constant 0.000000e+00 : f32
    %338 = vector.broadcast %cst_66 : f32 to vector<2x32xf32>
    %339 = vector.extract_strided_slice %305 {offsets = [0, 0], sizes = [2, 32], strides = [1, 1]} : vector<8x32xbf16> to vector<2x32xbf16>
    %340 = arith.extf %339 : vector<2x32xbf16> to vector<2x32xf32>
    %341 = arith.addf %338, %340 : vector<2x32xf32>
    %342 = vector.extract_strided_slice %305 {offsets = [2, 0], sizes = [2, 32], strides = [1, 1]} : vector<8x32xbf16> to vector<2x32xbf16>
    %343 = arith.extf %342 : vector<2x32xbf16> to vector<2x32xf32>
    %344 = arith.addf %341, %343 : vector<2x32xf32>
    %345 = vector.extract_strided_slice %305 {offsets = [4, 0], sizes = [2, 32], strides = [1, 1]} : vector<8x32xbf16> to vector<2x32xbf16>
    %346 = arith.extf %345 : vector<2x32xbf16> to vector<2x32xf32>
    %347 = arith.addf %344, %346 : vector<2x32xf32>
    %348 = vector.extract_strided_slice %305 {offsets = [6, 0], sizes = [2, 32], strides = [1, 1]} : vector<8x32xbf16> to vector<2x32xbf16>
    %349 = arith.extf %348 : vector<2x32xbf16> to vector<2x32xf32>
    %350 = arith.addf %347, %349 : vector<2x32xf32>
    %351 = vector.broadcast %cst_9 : f32 to vector<2x32xf32>
    %352 = arith.mulf %350, %351 : vector<2x32xf32>
    %353 = arith.truncf %352 : vector<2x32xf32> to vector<2x32xbf16>
    %354 = vector.extract_strided_slice %331 {offsets = [0, 64], sizes = [2, 32], strides = [1, 1]} : vector<2x160xbf16> to vector<2x32xbf16>
    %355 = tpu.concatenate %354, %354, %354, %354 in 0 : vector<2x32xbf16>, vector<2x32xbf16>, vector<2x32xbf16>, vector<2x32xbf16> -> vector<8x32xbf16>
    %356 = tpu.concatenate %305, %355, %334, %3 in 1 : vector<8x32xbf16>, vector<8x32xbf16>, vector<8x8xbf16>, vector<8x1xbf16> -> vector<8x73xbf16>
    %cst_67 = arith.constant dense<0.000000e+00> : vector<8x128xf32>
    %357 = tpu.matmul %356, %0, %cst_67 {dimension_numbers = #tpu.dot_dimension_numbers<[1], [0], [0], [1], [0, 0, 1, 1], [], []>} : vector<8x73xbf16>, vector<73x128xbf16>, vector<8x128xf32> -> vector<8x128xf32>
    %358 = tpu.concatenate %331, %353, %337 in 1 : vector<2x160xbf16>, vector<2x32xbf16>, vector<2x1xbf16> -> vector<2x193xbf16>
    %cst_68 = arith.constant dense<0.000000e+00> : vector<2x640xf32>
    %359 = tpu.matmul %358, %1, %cst_68 {dimension_numbers = #tpu.dot_dimension_numbers<[1], [0], [0], [1], [0, 0, 1, 1], [], []>} : vector<2x193xbf16>, vector<193x640xbf16>, vector<2x640xf32> -> vector<2x640xf32>
    %360 = arith.addf %359, %2 : vector<2x640xf32>
    %361 = vector.extract_strided_slice %357 {offsets = [0, 0], sizes = [8, 32], strides = [1, 1]} : vector<8x128xf32> to vector<8x32xf32>
    %362 = arith.negf %361 : vector<8x32xf32>
    %363 = math.exp %362 : vector<8x32xf32>
    %cst_69 = arith.constant 1.000000e+00 : f32
    %364 = vector.broadcast %cst_69 : f32 to vector<8x32xf32>
    %365 = arith.addf %364, %363 : vector<8x32xf32>
    %366 = arith.divf %364, %365 : vector<8x32xf32>
    %367 = vector.extract_strided_slice %357 {offsets = [0, 32], sizes = [8, 32], strides = [1, 1]} : vector<8x128xf32> to vector<8x32xf32>
    %368 = arith.negf %367 : vector<8x32xf32>
    %369 = math.exp %368 : vector<8x32xf32>
    %cst_70 = arith.constant 1.000000e+00 : f32
    %370 = vector.broadcast %cst_70 : f32 to vector<8x32xf32>
    %371 = arith.addf %370, %369 : vector<8x32xf32>
    %372 = arith.divf %370, %371 : vector<8x32xf32>
    %373 = vector.extract_strided_slice %357 {offsets = [0, 64], sizes = [8, 32], strides = [1, 1]} : vector<8x128xf32> to vector<8x32xf32>
    %374 = math.tanh %373 : vector<8x32xf32>
    %375 = vector.extract_strided_slice %357 {offsets = [0, 96], sizes = [8, 32], strides = [1, 1]} : vector<8x128xf32> to vector<8x32xf32>
    %376 = arith.negf %375 : vector<8x32xf32>
    %377 = math.exp %376 : vector<8x32xf32>
    %cst_71 = arith.constant 1.000000e+00 : f32
    %378 = vector.broadcast %cst_71 : f32 to vector<8x32xf32>
    %379 = arith.addf %378, %377 : vector<8x32xf32>
    %380 = arith.divf %378, %379 : vector<8x32xf32>
    %381 = arith.mulf %372, %302 : vector<8x32xf32>
    %382 = arith.mulf %366, %374 : vector<8x32xf32>
    %383 = arith.addf %381, %382 : vector<8x32xf32>
    %384 = math.tanh %383 : vector<8x32xf32>
    %385 = arith.mulf %380, %384 : vector<8x32xf32>
    %386 = arith.truncf %385 : vector<8x32xf32> to vector<8x32xbf16>
    %387 = vector.extract_strided_slice %360 {offsets = [0, 0], sizes = [2, 160], strides = [1, 1]} : vector<2x640xf32> to vector<2x160xf32>
    %388 = arith.negf %387 : vector<2x160xf32>
    %389 = math.exp %388 : vector<2x160xf32>
    %cst_72 = arith.constant 1.000000e+00 : f32
    %390 = vector.broadcast %cst_72 : f32 to vector<2x160xf32>
    %391 = arith.addf %390, %389 : vector<2x160xf32>
    %392 = arith.divf %390, %391 : vector<2x160xf32>
    %393 = vector.extract_strided_slice %360 {offsets = [0, 160], sizes = [2, 160], strides = [1, 1]} : vector<2x640xf32> to vector<2x160xf32>
    %394 = arith.negf %393 : vector<2x160xf32>
    %395 = math.exp %394 : vector<2x160xf32>
    %cst_73 = arith.constant 1.000000e+00 : f32
    %396 = vector.broadcast %cst_73 : f32 to vector<2x160xf32>
    %397 = arith.addf %396, %395 : vector<2x160xf32>
    %398 = arith.divf %396, %397 : vector<2x160xf32>
    %399 = vector.extract_strided_slice %360 {offsets = [0, 320], sizes = [2, 160], strides = [1, 1]} : vector<2x640xf32> to vector<2x160xf32>
    %400 = math.tanh %399 : vector<2x160xf32>
    %401 = vector.extract_strided_slice %360 {offsets = [0, 480], sizes = [2, 160], strides = [1, 1]} : vector<2x640xf32> to vector<2x160xf32>
    %402 = arith.negf %401 : vector<2x160xf32>
    %403 = math.exp %402 : vector<2x160xf32>
    %cst_74 = arith.constant 1.000000e+00 : f32
    %404 = vector.broadcast %cst_74 : f32 to vector<2x160xf32>
    %405 = arith.addf %404, %403 : vector<2x160xf32>
    %406 = arith.divf %404, %405 : vector<2x160xf32>
    %407 = arith.mulf %398, %328 : vector<2x160xf32>
    %408 = arith.mulf %392, %400 : vector<2x160xf32>
    %409 = arith.addf %407, %408 : vector<2x160xf32>
    %410 = math.tanh %409 : vector<2x160xf32>
    %411 = arith.mulf %406, %410 : vector<2x160xf32>
    %412 = arith.truncf %411 : vector<2x160xf32> to vector<2x160xbf16>
    %c5_i32 = arith.constant 5 : i32
    %413 = arith.index_cast %c5_i32 : i32 to index
    %c0_75 = arith.constant 0 : index
    %c0_76 = arith.constant 0 : index
    %414 = vector.load %arg1[%413, %c0_75, %c0_76] : memref<8x8x8xbf16, #tpu.memory_space<vmem>>, vector<1x8x8xbf16>
    %415 = vector.shape_cast %414 : vector<1x8x8xbf16> to vector<8x8xbf16>
    %416 = arith.index_cast %c5_i32 : i32 to index
    %c0_77 = arith.constant 0 : index
    %c0_78 = arith.constant 0 : index
    %417 = vector.load %arg2[%416, %c0_77, %c0_78] : memref<8x2x1xbf16, #tpu.memory_space<vmem>>, vector<1x2x1xbf16>
    %418 = vector.shape_cast %417 : vector<1x2x1xbf16> to vector<2x1xbf16>
    %cst_79 = arith.constant 0.000000e+00 : f32
    %419 = vector.broadcast %cst_79 : f32 to vector<2x32xf32>
    %420 = vector.extract_strided_slice %386 {offsets = [0, 0], sizes = [2, 32], strides = [1, 1]} : vector<8x32xbf16> to vector<2x32xbf16>
    %421 = arith.extf %420 : vector<2x32xbf16> to vector<2x32xf32>
    %422 = arith.addf %419, %421 : vector<2x32xf32>
    %423 = vector.extract_strided_slice %386 {offsets = [2, 0], sizes = [2, 32], strides = [1, 1]} : vector<8x32xbf16> to vector<2x32xbf16>
    %424 = arith.extf %423 : vector<2x32xbf16> to vector<2x32xf32>
    %425 = arith.addf %422, %424 : vector<2x32xf32>
    %426 = vector.extract_strided_slice %386 {offsets = [4, 0], sizes = [2, 32], strides = [1, 1]} : vector<8x32xbf16> to vector<2x32xbf16>
    %427 = arith.extf %426 : vector<2x32xbf16> to vector<2x32xf32>
    %428 = arith.addf %425, %427 : vector<2x32xf32>
    %429 = vector.extract_strided_slice %386 {offsets = [6, 0], sizes = [2, 32], strides = [1, 1]} : vector<8x32xbf16> to vector<2x32xbf16>
    %430 = arith.extf %429 : vector<2x32xbf16> to vector<2x32xf32>
    %431 = arith.addf %428, %430 : vector<2x32xf32>
    %432 = vector.broadcast %cst_9 : f32 to vector<2x32xf32>
    %433 = arith.mulf %431, %432 : vector<2x32xf32>
    %434 = arith.truncf %433 : vector<2x32xf32> to vector<2x32xbf16>
    %435 = vector.extract_strided_slice %412 {offsets = [0, 64], sizes = [2, 32], strides = [1, 1]} : vector<2x160xbf16> to vector<2x32xbf16>
    %436 = tpu.concatenate %435, %435, %435, %435 in 0 : vector<2x32xbf16>, vector<2x32xbf16>, vector<2x32xbf16>, vector<2x32xbf16> -> vector<8x32xbf16>
    %437 = tpu.concatenate %386, %436, %415, %3 in 1 : vector<8x32xbf16>, vector<8x32xbf16>, vector<8x8xbf16>, vector<8x1xbf16> -> vector<8x73xbf16>
    %cst_80 = arith.constant dense<0.000000e+00> : vector<8x128xf32>
    %438 = tpu.matmul %437, %0, %cst_80 {dimension_numbers = #tpu.dot_dimension_numbers<[1], [0], [0], [1], [0, 0, 1, 1], [], []>} : vector<8x73xbf16>, vector<73x128xbf16>, vector<8x128xf32> -> vector<8x128xf32>
    %439 = tpu.concatenate %412, %434, %418 in 1 : vector<2x160xbf16>, vector<2x32xbf16>, vector<2x1xbf16> -> vector<2x193xbf16>
    %cst_81 = arith.constant dense<0.000000e+00> : vector<2x640xf32>
    %440 = tpu.matmul %439, %1, %cst_81 {dimension_numbers = #tpu.dot_dimension_numbers<[1], [0], [0], [1], [0, 0, 1, 1], [], []>} : vector<2x193xbf16>, vector<193x640xbf16>, vector<2x640xf32> -> vector<2x640xf32>
    %441 = arith.addf %440, %2 : vector<2x640xf32>
    %442 = vector.extract_strided_slice %438 {offsets = [0, 0], sizes = [8, 32], strides = [1, 1]} : vector<8x128xf32> to vector<8x32xf32>
    %443 = arith.negf %442 : vector<8x32xf32>
    %444 = math.exp %443 : vector<8x32xf32>
    %cst_82 = arith.constant 1.000000e+00 : f32
    %445 = vector.broadcast %cst_82 : f32 to vector<8x32xf32>
    %446 = arith.addf %445, %444 : vector<8x32xf32>
    %447 = arith.divf %445, %446 : vector<8x32xf32>
    %448 = vector.extract_strided_slice %438 {offsets = [0, 32], sizes = [8, 32], strides = [1, 1]} : vector<8x128xf32> to vector<8x32xf32>
    %449 = arith.negf %448 : vector<8x32xf32>
    %450 = math.exp %449 : vector<8x32xf32>
    %cst_83 = arith.constant 1.000000e+00 : f32
    %451 = vector.broadcast %cst_83 : f32 to vector<8x32xf32>
    %452 = arith.addf %451, %450 : vector<8x32xf32>
    %453 = arith.divf %451, %452 : vector<8x32xf32>
    %454 = vector.extract_strided_slice %438 {offsets = [0, 64], sizes = [8, 32], strides = [1, 1]} : vector<8x128xf32> to vector<8x32xf32>
    %455 = math.tanh %454 : vector<8x32xf32>
    %456 = vector.extract_strided_slice %438 {offsets = [0, 96], sizes = [8, 32], strides = [1, 1]} : vector<8x128xf32> to vector<8x32xf32>
    %457 = arith.negf %456 : vector<8x32xf32>
    %458 = math.exp %457 : vector<8x32xf32>
    %cst_84 = arith.constant 1.000000e+00 : f32
    %459 = vector.broadcast %cst_84 : f32 to vector<8x32xf32>
    %460 = arith.addf %459, %458 : vector<8x32xf32>
    %461 = arith.divf %459, %460 : vector<8x32xf32>
    %462 = arith.mulf %453, %383 : vector<8x32xf32>
    %463 = arith.mulf %447, %455 : vector<8x32xf32>
    %464 = arith.addf %462, %463 : vector<8x32xf32>
    %465 = math.tanh %464 : vector<8x32xf32>
    %466 = arith.mulf %461, %465 : vector<8x32xf32>
    %467 = arith.truncf %466 : vector<8x32xf32> to vector<8x32xbf16>
    %468 = vector.extract_strided_slice %441 {offsets = [0, 0], sizes = [2, 160], strides = [1, 1]} : vector<2x640xf32> to vector<2x160xf32>
    %469 = arith.negf %468 : vector<2x160xf32>
    %470 = math.exp %469 : vector<2x160xf32>
    %cst_85 = arith.constant 1.000000e+00 : f32
    %471 = vector.broadcast %cst_85 : f32 to vector<2x160xf32>
    %472 = arith.addf %471, %470 : vector<2x160xf32>
    %473 = arith.divf %471, %472 : vector<2x160xf32>
    %474 = vector.extract_strided_slice %441 {offsets = [0, 160], sizes = [2, 160], strides = [1, 1]} : vector<2x640xf32> to vector<2x160xf32>
    %475 = arith.negf %474 : vector<2x160xf32>
    %476 = math.exp %475 : vector<2x160xf32>
    %cst_86 = arith.constant 1.000000e+00 : f32
    %477 = vector.broadcast %cst_86 : f32 to vector<2x160xf32>
    %478 = arith.addf %477, %476 : vector<2x160xf32>
    %479 = arith.divf %477, %478 : vector<2x160xf32>
    %480 = vector.extract_strided_slice %441 {offsets = [0, 320], sizes = [2, 160], strides = [1, 1]} : vector<2x640xf32> to vector<2x160xf32>
    %481 = math.tanh %480 : vector<2x160xf32>
    %482 = vector.extract_strided_slice %441 {offsets = [0, 480], sizes = [2, 160], strides = [1, 1]} : vector<2x640xf32> to vector<2x160xf32>
    %483 = arith.negf %482 : vector<2x160xf32>
    %484 = math.exp %483 : vector<2x160xf32>
    %cst_87 = arith.constant 1.000000e+00 : f32
    %485 = vector.broadcast %cst_87 : f32 to vector<2x160xf32>
    %486 = arith.addf %485, %484 : vector<2x160xf32>
    %487 = arith.divf %485, %486 : vector<2x160xf32>
    %488 = arith.mulf %479, %409 : vector<2x160xf32>
    %489 = arith.mulf %473, %481 : vector<2x160xf32>
    %490 = arith.addf %488, %489 : vector<2x160xf32>
    %491 = math.tanh %490 : vector<2x160xf32>
    %492 = arith.mulf %487, %491 : vector<2x160xf32>
    %493 = arith.truncf %492 : vector<2x160xf32> to vector<2x160xbf16>
    %c6_i32 = arith.constant 6 : i32
    %494 = arith.index_cast %c6_i32 : i32 to index
    %c0_88 = arith.constant 0 : index
    %c0_89 = arith.constant 0 : index
    %495 = vector.load %arg1[%494, %c0_88, %c0_89] : memref<8x8x8xbf16, #tpu.memory_space<vmem>>, vector<1x8x8xbf16>
    %496 = vector.shape_cast %495 : vector<1x8x8xbf16> to vector<8x8xbf16>
    %497 = arith.index_cast %c6_i32 : i32 to index
    %c0_90 = arith.constant 0 : index
    %c0_91 = arith.constant 0 : index
    %498 = vector.load %arg2[%497, %c0_90, %c0_91] : memref<8x2x1xbf16, #tpu.memory_space<vmem>>, vector<1x2x1xbf16>
    %499 = vector.shape_cast %498 : vector<1x2x1xbf16> to vector<2x1xbf16>
    %cst_92 = arith.constant 0.000000e+00 : f32
    %500 = vector.broadcast %cst_92 : f32 to vector<2x32xf32>
    %501 = vector.extract_strided_slice %467 {offsets = [0, 0], sizes = [2, 32], strides = [1, 1]} : vector<8x32xbf16> to vector<2x32xbf16>
    %502 = arith.extf %501 : vector<2x32xbf16> to vector<2x32xf32>
    %503 = arith.addf %500, %502 : vector<2x32xf32>
    %504 = vector.extract_strided_slice %467 {offsets = [2, 0], sizes = [2, 32], strides = [1, 1]} : vector<8x32xbf16> to vector<2x32xbf16>
    %505 = arith.extf %504 : vector<2x32xbf16> to vector<2x32xf32>
    %506 = arith.addf %503, %505 : vector<2x32xf32>
    %507 = vector.extract_strided_slice %467 {offsets = [4, 0], sizes = [2, 32], strides = [1, 1]} : vector<8x32xbf16> to vector<2x32xbf16>
    %508 = arith.extf %507 : vector<2x32xbf16> to vector<2x32xf32>
    %509 = arith.addf %506, %508 : vector<2x32xf32>
    %510 = vector.extract_strided_slice %467 {offsets = [6, 0], sizes = [2, 32], strides = [1, 1]} : vector<8x32xbf16> to vector<2x32xbf16>
    %511 = arith.extf %510 : vector<2x32xbf16> to vector<2x32xf32>
    %512 = arith.addf %509, %511 : vector<2x32xf32>
    %513 = vector.broadcast %cst_9 : f32 to vector<2x32xf32>
    %514 = arith.mulf %512, %513 : vector<2x32xf32>
    %515 = arith.truncf %514 : vector<2x32xf32> to vector<2x32xbf16>
    %516 = vector.extract_strided_slice %493 {offsets = [0, 64], sizes = [2, 32], strides = [1, 1]} : vector<2x160xbf16> to vector<2x32xbf16>
    %517 = tpu.concatenate %516, %516, %516, %516 in 0 : vector<2x32xbf16>, vector<2x32xbf16>, vector<2x32xbf16>, vector<2x32xbf16> -> vector<8x32xbf16>
    %518 = tpu.concatenate %467, %517, %496, %3 in 1 : vector<8x32xbf16>, vector<8x32xbf16>, vector<8x8xbf16>, vector<8x1xbf16> -> vector<8x73xbf16>
    %cst_93 = arith.constant dense<0.000000e+00> : vector<8x128xf32>
    %519 = tpu.matmul %518, %0, %cst_93 {dimension_numbers = #tpu.dot_dimension_numbers<[1], [0], [0], [1], [0, 0, 1, 1], [], []>} : vector<8x73xbf16>, vector<73x128xbf16>, vector<8x128xf32> -> vector<8x128xf32>
    %520 = tpu.concatenate %493, %515, %499 in 1 : vector<2x160xbf16>, vector<2x32xbf16>, vector<2x1xbf16> -> vector<2x193xbf16>
    %cst_94 = arith.constant dense<0.000000e+00> : vector<2x640xf32>
    %521 = tpu.matmul %520, %1, %cst_94 {dimension_numbers = #tpu.dot_dimension_numbers<[1], [0], [0], [1], [0, 0, 1, 1], [], []>} : vector<2x193xbf16>, vector<193x640xbf16>, vector<2x640xf32> -> vector<2x640xf32>
    %522 = arith.addf %521, %2 : vector<2x640xf32>
    %523 = vector.extract_strided_slice %519 {offsets = [0, 0], sizes = [8, 32], strides = [1, 1]} : vector<8x128xf32> to vector<8x32xf32>
    %524 = arith.negf %523 : vector<8x32xf32>
    %525 = math.exp %524 : vector<8x32xf32>
    %cst_95 = arith.constant 1.000000e+00 : f32
    %526 = vector.broadcast %cst_95 : f32 to vector<8x32xf32>
    %527 = arith.addf %526, %525 : vector<8x32xf32>
    %528 = arith.divf %526, %527 : vector<8x32xf32>
    %529 = vector.extract_strided_slice %519 {offsets = [0, 32], sizes = [8, 32], strides = [1, 1]} : vector<8x128xf32> to vector<8x32xf32>
    %530 = arith.negf %529 : vector<8x32xf32>
    %531 = math.exp %530 : vector<8x32xf32>
    %cst_96 = arith.constant 1.000000e+00 : f32
    %532 = vector.broadcast %cst_96 : f32 to vector<8x32xf32>
    %533 = arith.addf %532, %531 : vector<8x32xf32>
    %534 = arith.divf %532, %533 : vector<8x32xf32>
    %535 = vector.extract_strided_slice %519 {offsets = [0, 64], sizes = [8, 32], strides = [1, 1]} : vector<8x128xf32> to vector<8x32xf32>
    %536 = math.tanh %535 : vector<8x32xf32>
    %537 = vector.extract_strided_slice %519 {offsets = [0, 96], sizes = [8, 32], strides = [1, 1]} : vector<8x128xf32> to vector<8x32xf32>
    %538 = arith.negf %537 : vector<8x32xf32>
    %539 = math.exp %538 : vector<8x32xf32>
    %cst_97 = arith.constant 1.000000e+00 : f32
    %540 = vector.broadcast %cst_97 : f32 to vector<8x32xf32>
    %541 = arith.addf %540, %539 : vector<8x32xf32>
    %542 = arith.divf %540, %541 : vector<8x32xf32>
    %543 = arith.mulf %534, %464 : vector<8x32xf32>
    %544 = arith.mulf %528, %536 : vector<8x32xf32>
    %545 = arith.addf %543, %544 : vector<8x32xf32>
    %546 = math.tanh %545 : vector<8x32xf32>
    %547 = arith.mulf %542, %546 : vector<8x32xf32>
    %548 = arith.truncf %547 : vector<8x32xf32> to vector<8x32xbf16>
    %549 = vector.extract_strided_slice %522 {offsets = [0, 0], sizes = [2, 160], strides = [1, 1]} : vector<2x640xf32> to vector<2x160xf32>
    %550 = arith.negf %549 : vector<2x160xf32>
    %551 = math.exp %550 : vector<2x160xf32>
    %cst_98 = arith.constant 1.000000e+00 : f32
    %552 = vector.broadcast %cst_98 : f32 to vector<2x160xf32>
    %553 = arith.addf %552, %551 : vector<2x160xf32>
    %554 = arith.divf %552, %553 : vector<2x160xf32>
    %555 = vector.extract_strided_slice %522 {offsets = [0, 160], sizes = [2, 160], strides = [1, 1]} : vector<2x640xf32> to vector<2x160xf32>
    %556 = arith.negf %555 : vector<2x160xf32>
    %557 = math.exp %556 : vector<2x160xf32>
    %cst_99 = arith.constant 1.000000e+00 : f32
    %558 = vector.broadcast %cst_99 : f32 to vector<2x160xf32>
    %559 = arith.addf %558, %557 : vector<2x160xf32>
    %560 = arith.divf %558, %559 : vector<2x160xf32>
    %561 = vector.extract_strided_slice %522 {offsets = [0, 320], sizes = [2, 160], strides = [1, 1]} : vector<2x640xf32> to vector<2x160xf32>
    %562 = math.tanh %561 : vector<2x160xf32>
    %563 = vector.extract_strided_slice %522 {offsets = [0, 480], sizes = [2, 160], strides = [1, 1]} : vector<2x640xf32> to vector<2x160xf32>
    %564 = arith.negf %563 : vector<2x160xf32>
    %565 = math.exp %564 : vector<2x160xf32>
    %cst_100 = arith.constant 1.000000e+00 : f32
    %566 = vector.broadcast %cst_100 : f32 to vector<2x160xf32>
    %567 = arith.addf %566, %565 : vector<2x160xf32>
    %568 = arith.divf %566, %567 : vector<2x160xf32>
    %569 = arith.mulf %560, %490 : vector<2x160xf32>
    %570 = arith.mulf %554, %562 : vector<2x160xf32>
    %571 = arith.addf %569, %570 : vector<2x160xf32>
    %572 = math.tanh %571 : vector<2x160xf32>
    %573 = arith.mulf %568, %572 : vector<2x160xf32>
    %574 = arith.truncf %573 : vector<2x160xf32> to vector<2x160xbf16>
    %c7_i32 = arith.constant 7 : i32
    %575 = arith.index_cast %c7_i32 : i32 to index
    %c0_101 = arith.constant 0 : index
    %c0_102 = arith.constant 0 : index
    %576 = vector.load %arg1[%575, %c0_101, %c0_102] : memref<8x8x8xbf16, #tpu.memory_space<vmem>>, vector<1x8x8xbf16>
    %577 = vector.shape_cast %576 : vector<1x8x8xbf16> to vector<8x8xbf16>
    %578 = arith.index_cast %c7_i32 : i32 to index
    %c0_103 = arith.constant 0 : index
    %c0_104 = arith.constant 0 : index
    %579 = vector.load %arg2[%578, %c0_103, %c0_104] : memref<8x2x1xbf16, #tpu.memory_space<vmem>>, vector<1x2x1xbf16>
    %580 = vector.shape_cast %579 : vector<1x2x1xbf16> to vector<2x1xbf16>
    %cst_105 = arith.constant 0.000000e+00 : f32
    %581 = vector.broadcast %cst_105 : f32 to vector<2x32xf32>
    %582 = vector.extract_strided_slice %548 {offsets = [0, 0], sizes = [2, 32], strides = [1, 1]} : vector<8x32xbf16> to vector<2x32xbf16>
    %583 = arith.extf %582 : vector<2x32xbf16> to vector<2x32xf32>
    %584 = arith.addf %581, %583 : vector<2x32xf32>
    %585 = vector.extract_strided_slice %548 {offsets = [2, 0], sizes = [2, 32], strides = [1, 1]} : vector<8x32xbf16> to vector<2x32xbf16>
    %586 = arith.extf %585 : vector<2x32xbf16> to vector<2x32xf32>
    %587 = arith.addf %584, %586 : vector<2x32xf32>
    %588 = vector.extract_strided_slice %548 {offsets = [4, 0], sizes = [2, 32], strides = [1, 1]} : vector<8x32xbf16> to vector<2x32xbf16>
    %589 = arith.extf %588 : vector<2x32xbf16> to vector<2x32xf32>
    %590 = arith.addf %587, %589 : vector<2x32xf32>
    %591 = vector.extract_strided_slice %548 {offsets = [6, 0], sizes = [2, 32], strides = [1, 1]} : vector<8x32xbf16> to vector<2x32xbf16>
    %592 = arith.extf %591 : vector<2x32xbf16> to vector<2x32xf32>
    %593 = arith.addf %590, %592 : vector<2x32xf32>
    %594 = vector.broadcast %cst_9 : f32 to vector<2x32xf32>
    %595 = arith.mulf %593, %594 : vector<2x32xf32>
    %596 = arith.truncf %595 : vector<2x32xf32> to vector<2x32xbf16>
    %597 = vector.extract_strided_slice %574 {offsets = [0, 64], sizes = [2, 32], strides = [1, 1]} : vector<2x160xbf16> to vector<2x32xbf16>
    %598 = tpu.concatenate %597, %597, %597, %597 in 0 : vector<2x32xbf16>, vector<2x32xbf16>, vector<2x32xbf16>, vector<2x32xbf16> -> vector<8x32xbf16>
    %599 = tpu.concatenate %548, %598, %577, %3 in 1 : vector<8x32xbf16>, vector<8x32xbf16>, vector<8x8xbf16>, vector<8x1xbf16> -> vector<8x73xbf16>
    %cst_106 = arith.constant dense<0.000000e+00> : vector<8x128xf32>
    %600 = tpu.matmul %599, %0, %cst_106 {dimension_numbers = #tpu.dot_dimension_numbers<[1], [0], [0], [1], [0, 0, 1, 1], [], []>} : vector<8x73xbf16>, vector<73x128xbf16>, vector<8x128xf32> -> vector<8x128xf32>
    %601 = tpu.concatenate %574, %596, %580 in 1 : vector<2x160xbf16>, vector<2x32xbf16>, vector<2x1xbf16> -> vector<2x193xbf16>
    %cst_107 = arith.constant dense<0.000000e+00> : vector<2x640xf32>
    %602 = tpu.matmul %601, %1, %cst_107 {dimension_numbers = #tpu.dot_dimension_numbers<[1], [0], [0], [1], [0, 0, 1, 1], [], []>} : vector<2x193xbf16>, vector<193x640xbf16>, vector<2x640xf32> -> vector<2x640xf32>
    %603 = arith.addf %602, %2 : vector<2x640xf32>
    %604 = vector.extract_strided_slice %600 {offsets = [0, 0], sizes = [8, 32], strides = [1, 1]} : vector<8x128xf32> to vector<8x32xf32>
    %605 = arith.negf %604 : vector<8x32xf32>
    %606 = math.exp %605 : vector<8x32xf32>
    %cst_108 = arith.constant 1.000000e+00 : f32
    %607 = vector.broadcast %cst_108 : f32 to vector<8x32xf32>
    %608 = arith.addf %607, %606 : vector<8x32xf32>
    %609 = arith.divf %607, %608 : vector<8x32xf32>
    %610 = vector.extract_strided_slice %600 {offsets = [0, 32], sizes = [8, 32], strides = [1, 1]} : vector<8x128xf32> to vector<8x32xf32>
    %611 = arith.negf %610 : vector<8x32xf32>
    %612 = math.exp %611 : vector<8x32xf32>
    %cst_109 = arith.constant 1.000000e+00 : f32
    %613 = vector.broadcast %cst_109 : f32 to vector<8x32xf32>
    %614 = arith.addf %613, %612 : vector<8x32xf32>
    %615 = arith.divf %613, %614 : vector<8x32xf32>
    %616 = vector.extract_strided_slice %600 {offsets = [0, 64], sizes = [8, 32], strides = [1, 1]} : vector<8x128xf32> to vector<8x32xf32>
    %617 = math.tanh %616 : vector<8x32xf32>
    %618 = vector.extract_strided_slice %600 {offsets = [0, 96], sizes = [8, 32], strides = [1, 1]} : vector<8x128xf32> to vector<8x32xf32>
    %619 = arith.negf %618 : vector<8x32xf32>
    %620 = math.exp %619 : vector<8x32xf32>
    %cst_110 = arith.constant 1.000000e+00 : f32
    %621 = vector.broadcast %cst_110 : f32 to vector<8x32xf32>
    %622 = arith.addf %621, %620 : vector<8x32xf32>
    %623 = arith.divf %621, %622 : vector<8x32xf32>
    %624 = arith.mulf %615, %545 : vector<8x32xf32>
    %625 = arith.mulf %609, %617 : vector<8x32xf32>
    %626 = arith.addf %624, %625 : vector<8x32xf32>
    %627 = math.tanh %626 : vector<8x32xf32>
    %628 = arith.mulf %623, %627 : vector<8x32xf32>
    %629 = arith.truncf %628 : vector<8x32xf32> to vector<8x32xbf16>
    %630 = vector.extract_strided_slice %603 {offsets = [0, 0], sizes = [2, 160], strides = [1, 1]} : vector<2x640xf32> to vector<2x160xf32>
    %631 = arith.negf %630 : vector<2x160xf32>
    %632 = math.exp %631 : vector<2x160xf32>
    %cst_111 = arith.constant 1.000000e+00 : f32
    %633 = vector.broadcast %cst_111 : f32 to vector<2x160xf32>
    %634 = arith.addf %633, %632 : vector<2x160xf32>
    %635 = arith.divf %633, %634 : vector<2x160xf32>
    %636 = vector.extract_strided_slice %603 {offsets = [0, 160], sizes = [2, 160], strides = [1, 1]} : vector<2x640xf32> to vector<2x160xf32>
    %637 = arith.negf %636 : vector<2x160xf32>
    %638 = math.exp %637 : vector<2x160xf32>
    %cst_112 = arith.constant 1.000000e+00 : f32
    %639 = vector.broadcast %cst_112 : f32 to vector<2x160xf32>
    %640 = arith.addf %639, %638 : vector<2x160xf32>
    %641 = arith.divf %639, %640 : vector<2x160xf32>
    %642 = vector.extract_strided_slice %603 {offsets = [0, 320], sizes = [2, 160], strides = [1, 1]} : vector<2x640xf32> to vector<2x160xf32>
    %643 = math.tanh %642 : vector<2x160xf32>
    %644 = vector.extract_strided_slice %603 {offsets = [0, 480], sizes = [2, 160], strides = [1, 1]} : vector<2x640xf32> to vector<2x160xf32>
    %645 = arith.negf %644 : vector<2x160xf32>
    %646 = math.exp %645 : vector<2x160xf32>
    %cst_113 = arith.constant 1.000000e+00 : f32
    %647 = vector.broadcast %cst_113 : f32 to vector<2x160xf32>
    %648 = arith.addf %647, %646 : vector<2x160xf32>
    %649 = arith.divf %647, %648 : vector<2x160xf32>
    %650 = arith.mulf %641, %571 : vector<2x160xf32>
    %651 = arith.mulf %635, %643 : vector<2x160xf32>
    %652 = arith.addf %650, %651 : vector<2x160xf32>
    %653 = math.tanh %652 : vector<2x160xf32>
    %654 = arith.mulf %649, %653 : vector<2x160xf32>
    %655 = arith.truncf %654 : vector<2x160xf32> to vector<2x160xbf16>
    %c8_i32 = arith.constant 8 : i32
    %c0_114 = arith.constant 0 : index
    %c0_115 = arith.constant 0 : index
    %656 = vector.load %arg6[%c0_114, %c0_115] : memref<160x128xbf16, #tpu.memory_space<vmem>>, vector<160x128xbf16>
    %cst_116 = arith.constant dense<0.000000e+00> : vector<2x128xf32>
    %657 = tpu.matmul %655, %656, %cst_116 {dimension_numbers = #tpu.dot_dimension_numbers<[1], [0], [0], [1], [0, 0, 1, 1], [], []>} : vector<2x160xbf16>, vector<160x128xbf16>, vector<2x128xf32> -> vector<2x128xf32>
    %c0_117 = arith.constant 0 : index
    %c0_118 = arith.constant 0 : index
    %658 = vector.load %arg7[%c0_117, %c0_118] : memref<1x128xf32, #tpu.memory_space<vmem>>, vector<1x128xf32>
    %659 = vector.broadcast %658 : vector<1x128xf32> to vector<2x128xf32>
    %660 = arith.addf %657, %659 : vector<2x128xf32>
    %c0_119 = arith.constant 0 : index
    %c0_120 = arith.constant 0 : index
    %661 = vector.load %arg8[%c0_119, %c0_120] : memref<2x128xf32, #tpu.memory_space<vmem>>, vector<2x128xf32>
    tpu.vector_store %arg8[%c0_119, %c0_120], %660 {strides = array<i32>} : memref<2x128xf32, #tpu.memory_space<vmem>>, vector<2x128xf32>,
    return
  }
  func.func @transform_0(%arg0: i32) -> (i32, i32, i32) {
    %c0_i32 = arith.constant 0 : i32
    %c0_i32_0 = arith.constant 0 : i32
    %c0_i32_1 = arith.constant 0 : i32
    %c0_i32_2 = arith.constant 0 : i32
    return %c0_i32, %c0_i32_0, %c0_i32_1 : i32, i32, i32
  }
  func.func @transform_1(%arg0: i32) -> (i32, i32, i32) {
    %c0_i32 = arith.constant 0 : i32
    %c0_i32_0 = arith.constant 0 : i32
    %c0_i32_1 = arith.constant 0 : i32
    %c0_i32_2 = arith.constant 0 : i32
    return %c0_i32, %c0_i32_0, %c0_i32_1 : i32, i32, i32
  }
  func.func @transform_2(%arg0: i32) -> (i32, i32) {
    %c0_i32 = arith.constant 0 : i32
    %c0_i32_0 = arith.constant 0 : i32
    %c0_i32_1 = arith.constant 0 : i32
    return %c0_i32, %c0_i32_0 : i32, i32
  }
  func.func @transform_3(%arg0: i32) -> (i32, i32) {
    %c0_i32 = arith.constant 0 : i32
    %c0_i32_0 = arith.constant 0 : i32
    %c0_i32_1 = arith.constant 0 : i32
    return %c0_i32, %c0_i32_0 : i32, i32
  }
  func.func @transform_4(%arg0: i32) -> (i32, i32) {
    %c0_i32 = arith.constant 0 : i32
    %c0_i32_0 = arith.constant 0 : i32
    %c0_i32_1 = arith.constant 0 : i32
    return %c0_i32, %c0_i32_0 : i32, i32
  }
  func.func @transform_5(%arg0: i32) -> (i32, i32) {
    %c0_i32 = arith.constant 0 : i32
    %c0_i32_0 = arith.constant 0 : i32
    %c0_i32_1 = arith.constant 0 : i32
    return %c0_i32, %c0_i32_0 : i32, i32
  }
  func.func @transform_6(%arg0: i32) -> (i32, i32) {
    %c0_i32 = arith.constant 0 : i32
    %c0_i32_0 = arith.constant 0 : i32
    %c0_i32_1 = arith.constant 0 : i32
    return %c0_i32, %c0_i32_0 : i32, i32
  }
  func.func @transform_7(%arg0: i32) -> (i32, i32) {
    %c0_i32 = arith.constant 0 : i32
    %c0_i32_0 = arith.constant 0 : i32
    %c0_i32_1 = arith.constant 0 : i32
    return %c0_i32, %c0_i32_0 : i32, i32
  }
}

</mosaic_0001>

<llo_original>
// kernel: hetero_lstm_pallas.1
$region0: #{hetero_lstm_pallas.1}
  #allocation0 [shape = 'u32[]', space=smem, size = 0x4, offset = 0x4, fixed_abs, tag = 'smem constant byte address 0x4 - core index']
  #allocation1 [shape = 'u32[144,128]{1,0:T(1,128)}', space=vmem, size = 0x12000, scoped, tag = 'internal scratch']
  %s0 = inlined_call_operand.vmem [shape: bf16[8,8,8], index: 0, kind: input, shape index: {}]
  %s1 = inlined_call_operand.vmem [shape: bf16[8,2,1], index: 1, kind: input, shape index: {}]
  %s2 = inlined_call_operand.vmem [shape: bf16[73,128], index: 2, kind: input, shape index: {}]
  %s3 = inlined_call_operand.hbm [shape: bf16[193,640], index: 3, kind: input, shape index: {}]
  %s4 = inlined_call_operand.vmem [shape: f32[2,640], index: 4, kind: input, shape index: {}]
  %s5 = inlined_call_operand.vmem [shape: bf16[160,128], index: 5, kind: input, shape index: {}]
  %s6 = inlined_call_operand.vmem [shape: f32[1,128], index: 6, kind: input, shape index: {}]
  %s7 = inlined_call_operand.hbm [shape: f32[2,128], index: 7, kind: output, shape index: {}]
  %s8 = sld [smem:[#allocation0]]
  $region42: #{hetero_lstm_pallas.1} parent=0
    _
  %s10 = ssub.s32 1, %s8
  %s11 = scalar_select 0, %s10, %s8
  $region1: #{hetero_lstm_pallas.1} parent=0
    #allocation2 [shape = 'u8[256000]{0}', space=vmem, size = 0x3e800, scoped, tag = 'input window, operand 3, single buffered']
    #allocation3 [shape = 's32[1]{0}', space=sflag, size = 0x4, scoped, tag = 'scoped memory for hetero_lstm_pallas.1']
    #allocation4 [shape = 's32[1]{0}', space=sflag, size = 0x4, scoped, tag = 'scoped memory for hetero_lstm_pallas.1']
    #allocation5 [shape = 'u8[1024]{0}', space=vmem, size = 0x400, scoped, tag = 'output window, operand 0, single buffered']
    %12 = vsyncpa [#allocation3], 0
    %13 = vsyncpa [#allocation4], 0
    // Predicated region
    $region2: #{hetero_lstm_pallas.1} parent=1 // pred_check
      _
    $region3: #{hetero_lstm_pallas.1} parent=1 // pred_check_branch
      %15 = sbr.rel (0) target = $region5
    $region4: #{hetero_lstm_pallas.1} parent=1 // pred_region
      _
    $region5: #{hetero_lstm_pallas.1} parent=1 // pred_fallthru
      _
    // Predicated region
    $region6: #{hetero_lstm_pallas.1} parent=1 // pred_check
      _
    $region7: #{hetero_lstm_pallas.1} parent=1 // pred_check_branch
      %17 = sbr.rel (0) target = $region9
    $region8: #{hetero_lstm_pallas.1} parent=1 // pred_region
      _
    $region9: #{hetero_lstm_pallas.1} parent=1 // pred_fallthru
      _
    // Predicated region
    $region10: #{hetero_lstm_pallas.1} parent=1 // pred_check
      _
    $region11: #{hetero_lstm_pallas.1} parent=1 // pred_check_branch
      %19 = sbr.rel (0) target = $region13
    $region12: #{hetero_lstm_pallas.1} parent=1 // pred_region
      _
    $region13: #{hetero_lstm_pallas.1} parent=1 // pred_fallthru
      _
    // Predicated region
    $region14: #{hetero_lstm_pallas.1} parent=1 // pred_check
      _
    $region15: #{hetero_lstm_pallas.1} parent=1 // pred_check_branch
      %21 = sbr.rel (0) target = $region17
    $region16: #{hetero_lstm_pallas.1} parent=1 // pred_region
      %s23 = ssub.s32 8000, 8000
      %24 = vsyncadd [#allocation3], %s23
      %s25 = sshll.u32 [#allocation2], 4
      %s26 = int_to_ptr.vmem [resolvable:$true] %s25
      %31 = dma.hbm_to_vmem [thread:$0]  %s3, 8000, %s26, [#allocation3], 320, 320, 20
    $region17: #{hetero_lstm_pallas.1} parent=1 // pred_fallthru
      _
    // Predicated region
    $region18: #{hetero_lstm_pallas.1} parent=1 // pred_check
      _
    $region19: #{hetero_lstm_pallas.1} parent=1 // pred_check_branch
      %33 = sbr.rel (0) target = $region21
    $region20: #{hetero_lstm_pallas.1} parent=1 // pred_region
      _
    $region21: #{hetero_lstm_pallas.1} parent=1 // pred_fallthru
      _
    // Predicated region
    $region22: #{hetero_lstm_pallas.1} parent=1 // pred_check
      _
    $region23: #{hetero_lstm_pallas.1} parent=1 // pred_check_branch
      %35 = sbr.rel (0) target = $region25
    $region24: #{hetero_lstm_pallas.1} parent=1 // pred_region
      _
    $region25: #{hetero_lstm_pallas.1} parent=1 // pred_fallthru
      _
    // Predicated region
    $region26: #{hetero_lstm_pallas.1} parent=1 // pred_check
      _
    $region27: #{hetero_lstm_pallas.1} parent=1 // pred_check_branch
      %37 = sbr.rel (0) target = $region29
    $region28: #{hetero_lstm_pallas.1} parent=1 // pred_region
      _
    $region29: #{hetero_lstm_pallas.1} parent=1 // pred_fallthru
      _
    // Predicated region
    $region30: #{hetero_lstm_pallas.1} parent=1 // pred_check
      _
    $region31: #{hetero_lstm_pallas.1} parent=1 // pred_check_branch
      %39 = sbr.rel (0) target = $region33
    $region32: #{hetero_lstm_pallas.1} parent=1 // pred_region
      %40 = dma.done [#allocation3], 8000
    $region33: #{hetero_lstm_pallas.1} parent=1 // pred_fallthru
      _
    %v43 = vld [vmem:[%s2] sm:$0xf]
    %v44 = vld [vmem:[%s2 + $0x4] sm:$0xf]
    %v45 = vld [vmem:[%s2 + $0x8] sm:$0xf]
    %v46 = vld [vmem:[%s2 + $0xc] sm:$0xf]
    %v47 = vld [vmem:[%s2 + $0x10] sm:$0xf]
    %v48 = vld [vmem:[%s2 + $0x14] sm:$0xf]
    %v49 = vld [vmem:[%s2 + $0x18] sm:$0xf]
    %v50 = vld [vmem:[%s2 + $0x1c] sm:$0xf]
    %v51 = vld [vmem:[%s2 + $0x20] sm:$0xf]
    %v52 = vld [vmem:[%s2 + $0x24] sm:$0x1]
    %v53 = vld [vmem:[#allocation2] sm:$0xff]
    %v54 = vld [vmem:[#allocation2 + $0x8] sm:$0xff]
    %v55 = vld [vmem:[#allocation2 + $0x10] sm:$0xf]
    %v56 = vld [vmem:[#allocation2 + $0x14] sm:$0xff]
    %v57 = vld [vmem:[#allocation2 + $0x1c] sm:$0xff]
    %v58 = vld [vmem:[#allocation2 + $0x24] sm:$0xf]
    %v59 = vld [vmem:[#allocation2 + $0x28] sm:$0xff]
    %v60 = vld [vmem:[#allocation2 + $0x30] sm:$0xff]
    %v61 = vld [vmem:[#allocation2 + $0x38] sm:$0xf]
    %v62 = vld [vmem:[#allocation2 + $0x3c] sm:$0xff]
    %v63 = vld [vmem:[#allocation2 + $0x44] sm:$0xff]
    %v64 = vld [vmem:[#allocation2 + $0x4c] sm:$0xf]
    %v65 = vld [vmem:[#allocation2 + $0x50] sm:$0xff]
    %v66 = vld [vmem:[#allocation2 + $0x58] sm:$0xff]
    %v67 = vld [vmem:[#allocation2 + $0x60] sm:$0xf]
    %v68 = vld [vmem:[#allocation2 + $0x64] sm:$0xff]
    %v69 = vld [vmem:[#allocation2 + $0x6c] sm:$0xff]
    %v70 = vld [vmem:[#allocation2 + $0x74] sm:$0xf]
    %v71 = vld [vmem:[#allocation2 + $0x78] sm:$0xff]
    %v72 = vld [vmem:[#allocation2 + $0x80] sm:$0xff]
    %v73 = vld [vmem:[#allocation2 + $0x88] sm:$0xf]
    %v74 = vld [vmem:[#allocation2 + $0x8c] sm:$0xff]
    %v75 = vld [vmem:[#allocation2 + $0x94] sm:$0xff]
    %v76 = vld [vmem:[#allocation2 + $0x9c] sm:$0xf]
    %v77 = vld [vmem:[#allocation2 + $0xa0] sm:$0xff]
    %v78 = vld [vmem:[#allocation2 + $0xa8] sm:$0xff]
    %v79 = vld [vmem:[#allocation2 + $0xb0] sm:$0xf]
    %v80 = vld [vmem:[#allocation2 + $0xb4] sm:$0xff]
    %v81 = vld [vmem:[#allocation2 + $0xbc] sm:$0xff]
    %v82 = vld [vmem:[#allocation2 + $0xc4] sm:$0xf]
    %v83 = vld [vmem:[#allocation2 + $0xc8] sm:$0xff]
    %v84 = vld [vmem:[#allocation2 + $0xd0] sm:$0xff]
    %v85 = vld [vmem:[#allocation2 + $0xd8] sm:$0xf]
    %v86 = vld [vmem:[#allocation2 + $0xdc] sm:$0xff]
    %v87 = vld [vmem:[#allocation2 + $0xe4] sm:$0xff]
    %v88 = vld [vmem:[#allocation2 + $0xec] sm:$0xf]
    %v89 = vld [vmem:[#allocation2 + $0xf0] sm:$0xff]
    %v90 = vld [vmem:[#allocation2 + $0xf8] sm:$0xff]
    %v91 = vld [vmem:[#allocation2 + $0x100] sm:$0xf]
    %v92 = vld [vmem:[#allocation2 + $0x104] sm:$0xff]
    %v93 = vld [vmem:[#allocation2 + $0x10c] sm:$0xff]
    %v94 = vld [vmem:[#allocation2 + $0x114] sm:$0xf]
    %v95 = vld [vmem:[#allocation2 + $0x118] sm:$0xff]
    %v96 = vld [vmem:[#allocation2 + $0x120] sm:$0xff]
    %v97 = vld [vmem:[#allocation2 + $0x128] sm:$0xf]
    %v98 = vld [vmem:[#allocation2 + $0x12c] sm:$0xff]
    %v99 = vld [vmem:[#allocation2 + $0x134] sm:$0xff]
    %v100 = vld [vmem:[#allocation2 + $0x13c] sm:$0xf]
    %v101 = vld [vmem:[#allocation2 + $0x140] sm:$0xff]
    %v102 = vld [vmem:[#allocation2 + $0x148] sm:$0xff]
    %v103 = vld [vmem:[#allocation2 + $0x150] sm:$0xf]
    %v104 = vld [vmem:[#allocation2 + $0x154] sm:$0xff]
    %v105 = vld [vmem:[#allocation2 + $0x15c] sm:$0xff]
    %v106 = vld [vmem:[#allocation2 + $0x164] sm:$0xf]
    %v107 = vld [vmem:[#allocation2 + $0x168] sm:$0xff]
    %v108 = vld [vmem:[#allocation2 + $0x170] sm:$0xff]
    %v109 = vld [vmem:[#allocation2 + $0x178] sm:$0xf]
    %v110 = vld [vmem:[#allocation2 + $0x17c] sm:$0xff]
    %v111 = vld [vmem:[#allocation2 + $0x184] sm:$0xff]
    %v112 = vld [vmem:[#allocation2 + $0x18c] sm:$0xf]
    %v113 = vld [vmem:[#allocation2 + $0x190] sm:$0xff]
    %v114 = vld [vmem:[#allocation2 + $0x198] sm:$0xff]
    %v115 = vld [vmem:[#allocation2 + $0x1a0] sm:$0xf]
    %v116 = vld [vmem:[#allocation2 + $0x1a4] sm:$0xff]
    %v117 = vld [vmem:[#allocation2 + $0x1ac] sm:$0xff]
    %v118 = vld [vmem:[#allocation2 + $0x1b4] sm:$0xf]
    %v119 = vld [vmem:[#allocation2 + $0x1b8] sm:$0xff]
    %v120 = vld [vmem:[#allocation2 + $0x1c0] sm:$0xff]
    %v121 = vld [vmem:[#allocation2 + $0x1c8] sm:$0xf]
    %v122 = vld [vmem:[#allocation2 + $0x1cc] sm:$0xff]
    %v123 = vld [vmem:[#allocation2 + $0x1d4] sm:$0xff]
    %v124 = vld [vmem:[#allocation2 + $0x1dc] sm:$0xf]
    %v125 = vld [vmem:[#allocation2 + $0x1e0] sm:$0x11]
    %v126 = vld [vmem:[#allocation2 + $0x1e8] sm:$0x11]
    %v127 = vld [vmem:[#allocation2 + $0x1f0] sm:$0x1]
    %v128 = vld [vmem:[%s4] sm:$0xff]
    %v129 = vld [vmem:[%s4 + $0x8] sm:$0x3]
    %v130 = vld [vmem:[%s0] sm:$0xf]
    %v131 = vld [vmem:[%s1] sm:$0x1]
    %vm132 = vcmask 1040384
    %vm134 = vcmask 1041408
    %v135 = vsel %vm134, 0, 0
    %vm136 = vcmask 1042432
    %v137 = vsel %vm136, %v135, 0
    %139 = vrot.lane.b32.xlu0 %v137, 32
    %v140 = vpop.permute.xlu0 %139
    %v142 = vunpack.c.l.b16 %v130
    %v143 = vpack.c.b16 %v142, %v142
    %144 = vrot.lane.b32.xlu0 %v143, 64
    %v145 = vpop.permute.xlu0 %144
    %vm146 = vcmask 261120
    %v148 = vsel %vm146, 0, %v140
    %vm149 = vcmask 523264
    %v151 = vsel %vm149, %v148, %v145
    %vm152 = vcmask 588800
    %v154 = vsel %vm152, %v151, 1065369472
    %v165 = vunpack.c.l.b16 %v43
    %v166 = vunpack.c.l.b16 %v44
    %v167 = vunpack.c.l.b16 %v45
    %v168 = vunpack.c.l.b16 %v46
    %v169 = vunpack.c.l.b16 %v47
    %v170 = vunpack.c.l.b16 %v48
    %v171 = vunpack.c.l.b16 %v49
    %v172 = vunpack.c.l.b16 %v50
    %v173 = vunpack.c.l.b16 %v51
    %v174 = vunpack.c.l.b16 %v52
    %v175 = vpack.c.b16 %v166, %v165
    %v176 = vpack.c.b16 %v168, %v167
    %v177 = vpack.c.b16 %v170, %v169
    %v178 = vpack.c.b16 %v172, %v171
    %v179 = vpack.c.b16 %v174, %v173
    %vm184 = vcmask 596992
    %v185 = vsel %vm184, %v154, 0
    %vm187 = vcmask 1043456
    %vm188 = vcmask 1044480
    %v189 = vsel %vm187, 4294967295, 65535
    %v190 = vsel %vm188, %v189, 0
    %v192 = vand.u32 %v179, %v190
    %194 = vmatprep.subr.bf16.mxu0 0
    %195 = vmatpush1.bf16.msra.mxu0 0
    %196 = vmatprep.subr.bf16.mxu0 0
    %197 = vmatpush1.bf16.msra.mxu0 0
    %198 = vmatprep.subr.bf16.mxu0 0
    %199 = vmatpush1.bf16.msra.mxu0 0
    %200 = vmatprep.subr.bf16.mxu0 0
    %201 = vmatpush1.bf16.msra.mxu0 %v192
    %202 = vmatprep.subr.bf16.mxu0 0
    %203 = vmatpush1.bf16.msra.mxu0 %v178
    %204 = vmatprep.subr.bf16.mxu0 0
    %205 = vmatpush1.bf16.msra.mxu0 %v177
    %206 = vmatprep.subr.bf16.mxu0 0
    %207 = vmatpush1.bf16.msra.mxu0 %v176
    %208 = vmatprep.subr.bf16.mxu0 0
    %209 = vmatpush1.bf16.msra.mxu0 %v175
    %210 = vmatprep.subr.bf16.mxu0 0
    %211 = vmatpush2.bf16.msra.mxu0 0
    %212 = vmatprep.subr.bf16.mxu0 0
    %213 = vmatpush2.bf16.msra.mxu0 0
    %214 = vmatprep.subr.bf16.mxu0 0
    %215 = vmatpush2.bf16.msra.mxu0 0
    %216 = vmatprep.subr.bf16.mxu0 0
    %217 = vmatpush2.bf16.msra.mxu0 0
    %218 = vmatprep.subr.bf16.mxu0 0
    %219 = vmatpush2.bf16.msra.mxu0 0
    %220 = vmatprep.subr.bf16.mxu0 0
    %221 = vmatpush2.bf16.msra.mxu0 0
    %222 = vmatprep.subr.bf16.mxu0 0
    %223 = vmatpush2.bf16.msra.mxu0 0
    %224 = vmatprep.subr.bf16.mxu0 0
    %225 = vmatpush2.bf16.msra.mxu0 0
    %226 = vmatprep.mubr.bf16.mxu0 0
    %227 = vmatmul.mubr.bf16.gmra.mxu0 %v185
    %v228 = vpop.f32.mrf.mxu0
    %v229 = vadd.f32 0.0, %v228
    %v230 = vpop.f32.mrf.mxu0
    %v231 = vpop.f32.mrf.mxu0
    %v232 = vpop.f32.mrf.mxu0
    %233 = vdwg.mxu0
    %v236 = vunpack.c.l.s4 1966171168
    %v237 = vunpack.c.0.s8 %v236
    %v238 = vlaneseq
    %v239 = vshrl.u32 %v238, 7
    %v240 = vsub.s32 %v237, %v239
    %v241 = vrot.slane %v131, %v240
    %v243 = vunpack.c.l.s4 1966171168
    %v244 = vunpack.c.0.s8 %v243
    %v245 = vlaneseq
    %v246 = vshrl.u32 %v245, 7
    %v247 = vsub.s32 %v244, %v246
    %v248 = vrot.slane %v241, %v247
    %249 = vrot.lane.b32.xlu0 %v248, 64
    %v250 = vpop.permute.xlu0 %249
    %v252 = vsel %vm149, 0, %v250
    %v328 = vunpack.c.l.b16 %v53
    %v329 = vunpack.c.h.b16 %v53
    %v330 = vunpack.c.l.b16 %v54
    %v331 = vunpack.c.h.b16 %v54
    %v332 = vunpack.c.l.b16 %v55
    %v333 = vunpack.c.l.b16 %v56
    %v334 = vunpack.c.h.b16 %v56
    %v335 = vunpack.c.l.b16 %v57
    %v336 = vunpack.c.h.b16 %v57
    %v337 = vunpack.c.l.b16 %v58
    %v338 = vunpack.c.l.b16 %v59
    %v339 = vunpack.c.h.b16 %v59
    %v340 = vunpack.c.l.b16 %v60
    %v341 = vunpack.c.h.b16 %v60
    %v342 = vunpack.c.l.b16 %v61
    %v343 = vunpack.c.l.b16 %v62
    %v344 = vunpack.c.h.b16 %v62
    %v345 = vunpack.c.l.b16 %v63
    %v346 = vunpack.c.h.b16 %v63
    %v347 = vunpack.c.l.b16 %v64
    %v348 = vunpack.c.l.b16 %v65
    %v349 = vunpack.c.h.b16 %v65
    %v350 = vunpack.c.l.b16 %v66
    %v351 = vunpack.c.h.b16 %v66
    %v352 = vunpack.c.l.b16 %v67
    %v353 = vunpack.c.l.b16 %v68
    %v354 = vunpack.c.h.b16 %v68
    %v355 = vunpack.c.l.b16 %v69
    %v356 = vunpack.c.h.b16 %v69
    %v357 = vunpack.c.l.b16 %v70
    %v358 = vunpack.c.l.b16 %v71
    %v359 = vunpack.c.h.b16 %v71
    %v360 = vunpack.c.l.b16 %v72
    %v361 = vunpack.c.h.b16 %v72
    %v362 = vunpack.c.l.b16 %v73
    %v363 = vunpack.c.l.b16 %v74
    %v364 = vunpack.c.h.b16 %v74
    %v365 = vunpack.c.l.b16 %v75
    %v366 = vunpack.c.h.b16 %v75
    %v367 = vunpack.c.l.b16 %v76
    %v368 = vunpack.c.l.b16 %v77
    %v369 = vunpack.c.h.b16 %v77
    %v370 = vunpack.c.l.b16 %v78
    %v371 = vunpack.c.h.b16 %v78
    %v372 = vunpack.c.l.b16 %v79
    %v373 = vunpack.c.l.b16 %v80
    %v374 = vunpack.c.h.b16 %v80
    %v375 = vunpack.c.l.b16 %v81
    %v376 = vunpack.c.h.b16 %v81
    %v377 = vunpack.c.l.b16 %v82
    %v378 = vunpack.c.l.b16 %v83
    %v379 = vunpack.c.h.b16 %v83
    %v380 = vunpack.c.l.b16 %v84
    %v381 = vunpack.c.h.b16 %v84
    %v382 = vunpack.c.l.b16 %v85
    %v383 = vunpack.c.l.b16 %v86
    %v384 = vunpack.c.h.b16 %v86
    %v385 = vunpack.c.l.b16 %v87
    %v386 = vunpack.c.h.b16 %v87
    %v387 = vunpack.c.l.b16 %v88
    %v388 = vunpack.c.l.b16 %v89
    %v389 = vunpack.c.h.b16 %v89
    %v390 = vunpack.c.l.b16 %v90
    %v391 = vunpack.c.h.b16 %v90
    %v392 = vunpack.c.l.b16 %v91
    %v393 = vunpack.c.l.b16 %v92
    %v394 = vunpack.c.h.b16 %v92
    %v395 = vunpack.c.l.b16 %v93
    %v396 = vunpack.c.h.b16 %v93
    %v397 = vunpack.c.l.b16 %v94
    %v398 = vunpack.c.l.b16 %v95
    %v399 = vunpack.c.h.b16 %v95
    %v400 = vunpack.c.l.b16 %v96
    %v401 = vunpack.c.h.b16 %v96
    %v402 = vunpack.c.l.b16 %v97
    %v403 = vunpack.c.l.b16 %v98
    %v404 = vunpack.c.h.b16 %v98
    %v405 = vunpack.c.l.b16 %v99
    %v406 = vunpack.c.h.b16 %v99
    %v407 = vunpack.c.l.b16 %v100
    %v408 = vunpack.c.l.b16 %v101
    %v409 = vunpack.c.h.b16 %v101
    %v410 = vunpack.c.l.b16 %v102
    %v411 = vunpack.c.h.b16 %v102
    %v412 = vunpack.c.l.b16 %v103
    %v413 = vunpack.c.l.b16 %v104
    %v414 = vunpack.c.h.b16 %v104
    %v415 = vunpack.c.l.b16 %v105
    %v416 = vunpack.c.h.b16 %v105
    %v417 = vunpack.c.l.b16 %v106
    %v418 = vunpack.c.l.b16 %v107
    %v419 = vunpack.c.h.b16 %v107
    %v420 = vunpack.c.l.b16 %v108
    %v421 = vunpack.c.h.b16 %v108
    %v422 = vunpack.c.l.b16 %v109
    %v423 = vunpack.c.l.b16 %v110
    %v424 = vunpack.c.h.b16 %v110
    %v425 = vunpack.c.l.b16 %v111
    %v426 = vunpack.c.h.b16 %v111
    %v427 = vunpack.c.l.b16 %v112
    %v428 = vunpack.c.l.b16 %v113
    %v429 = vunpack.c.h.b16 %v113
    %v430 = vunpack.c.l.b16 %v114
    %v431 = vunpack.c.h.b16 %v114
    %v432 = vunpack.c.l.b16 %v115
    %v433 = vunpack.c.l.b16 %v116
    %v434 = vunpack.c.h.b16 %v116
    %v435 = vunpack.c.l.b16 %v117
    %v436 = vunpack.c.h.b16 %v117
    %v437 = vunpack.c.l.b16 %v118
    %v438 = vunpack.c.l.b16 %v119
    %v439 = vunpack.c.h.b16 %v119
    %v440 = vunpack.c.l.b16 %v120
    %v441 = vunpack.c.h.b16 %v120
    %v442 = vunpack.c.l.b16 %v121
    %v443 = vunpack.c.l.b16 %v122
    %v444 = vunpack.c.h.b16 %v122
    %v445 = vunpack.c.l.b16 %v123
    %v446 = vunpack.c.h.b16 %v123
    %v447 = vunpack.c.l.b16 %v124
    %v448 = vunpack.c.l.b16 %v125
    %v449 = vunpack.c.h.b16 %v125
    %v450 = vunpack.c.l.b16 %v126
    %v451 = vunpack.c.h.b16 %v126
    %v452 = vunpack.c.l.b16 %v127
    %v453 = vpack.c.b16 %v333, %v328
    %v454 = vpack.c.b16 %v334, %v329
    %v455 = vpack.c.b16 %v335, %v330
    %v456 = vpack.c.b16 %v336, %v331
    %v457 = vpack.c.b16 %v337, %v332
    %v458 = vpack.c.b16 %v343, %v338
    %v459 = vpack.c.b16 %v344, %v339
    %v460 = vpack.c.b16 %v345, %v340
    %v461 = vpack.c.b16 %v346, %v341
    %v462 = vpack.c.b16 %v347, %v342
    %v463 = vpack.c.b16 %v353, %v348
    %v464 = vpack.c.b16 %v354, %v349
    %v465 = vpack.c.b16 %v355, %v350
    %v466 = vpack.c.b16 %v356, %v351
    %v467 = vpack.c.b16 %v357, %v352
    %v468 = vpack.c.b16 %v363, %v358
    %v469 = vpack.c.b16 %v364, %v359
    %v470 = vpack.c.b16 %v365, %v360
    %v471 = vpack.c.b16 %v366, %v361
    %v472 = vpack.c.b16 %v367, %v362
    %v473 = vpack.c.b16 %v373, %v368
    %v474 = vpack.c.b16 %v374, %v369
    %v475 = vpack.c.b16 %v375, %v370
    %v476 = vpack.c.b16 %v376, %v371
    %v477 = vpack.c.b16 %v377, %v372
    %v478 = vpack.c.b16 %v383, %v378
    %v479 = vpack.c.b16 %v384, %v379
    %v480 = vpack.c.b16 %v385, %v380
    %v481 = vpack.c.b16 %v386, %v381
    %v482 = vpack.c.b16 %v387, %v382
    %v483 = vpack.c.b16 %v393, %v388
    %v484 = vpack.c.b16 %v394, %v389
    %v485 = vpack.c.b16 %v395, %v390
    %v486 = vpack.c.b16 %v396, %v391
    %v487 = vpack.c.b16 %v397, %v392
    %v488 = vpack.c.b16 %v403, %v398
    %v489 = vpack.c.b16 %v404, %v399
    %v490 = vpack.c.b16 %v405, %v400
    %v491 = vpack.c.b16 %v406, %v401
    %v492 = vpack.c.b16 %v407, %v402
    %v493 = vpack.c.b16 %v413, %v408
    %v494 = vpack.c.b16 %v414, %v409
    %v495 = vpack.c.b16 %v415, %v410
    %v496 = vpack.c.b16 %v416, %v411
    %v497 = vpack.c.b16 %v417, %v412
    %v498 = vpack.c.b16 %v423, %v418
    %v499 = vpack.c.b16 %v424, %v419
    %v500 = vpack.c.b16 %v425, %v420
    %v501 = vpack.c.b16 %v426, %v421
    %v502 = vpack.c.b16 %v427, %v422
    %v503 = vpack.c.b16 %v433, %v428
    %v504 = vpack.c.b16 %v434, %v429
    %v505 = vpack.c.b16 %v435, %v430
    %v506 = vpack.c.b16 %v436, %v431
    %v507 = vpack.c.b16 %v437, %v432
    %v508 = vpack.c.b16 %v443, %v438
    %v509 = vpack.c.b16 %v444, %v439
    %v510 = vpack.c.b16 %v445, %v440
    %v511 = vpack.c.b16 %v446, %v441
    %v512 = vpack.c.b16 %v447, %v442
    %v513 = vpack.c.b16 %v448, %v448
    %v514 = vpack.c.b16 %v449, %v449
    %v515 = vpack.c.b16 %v450, %v450
    %v516 = vpack.c.b16 %v451, %v451
    %v517 = vpack.c.b16 %v452, %v452
    %v580 = vcombine.high %v128, %v128
    %v582 = vunpack.c.l.s4 1983009808
    %v583 = vunpack.c.0.s8 %v582
    %v584 = vlaneseq
    %v585 = vshrl.u32 %v584, 7
    %v586 = vsub.s32 %v583, %v585
    %v587 = vrot.slane %v128, %v586
    %v589 = vunpack.c.l.s4 1983009808
    %v590 = vunpack.c.0.s8 %v589
    %v591 = vlaneseq
    %v592 = vshrl.u32 %v591, 7
    %v593 = vsub.s32 %v590, %v592
    %v594 = vrot.slane %v580, %v593
    %v595 = vcombine.high %v587, %v587
    %v596 = vcombine.high %v594, %v594
    %v598 = vunpack.c.l.s4 1983009808
    %v599 = vunpack.c.0.s8 %v598
    %v600 = vlaneseq
    %v601 = vshrl.u32 %v600, 7
    %v602 = vsub.s32 %v599, %v601
    %v603 = vrot.slane %v129, %v602
    %vm609 = vcmask 531456
    %v610 = vsel %vm609, %v252, 0
    %v612 = vsel 0, 4294967295, 65535
    %v613 = vsel %vm132, %v612, 0
    %v615 = vand.u32 %v513, %v613
    %v618 = vand.u32 %v514, %v613
    %v621 = vand.u32 %v515, %v613
    %v624 = vand.u32 %v516, %v613
    %v627 = vand.u32 %v517, %v613
    %629 = vmatprep.subr.bf16.mxu0 %v489
    %630 = vmatpush1.bf16.msra.mxu0 %v488
    %631 = vmatprep.subr.bf16.mxu0 %v484
    %632 = vmatpush1.bf16.msra.mxu0 %v483
    %633 = vmatprep.subr.bf16.mxu0 %v479
    %634 = vmatpush1.bf16.msra.mxu0 %v478
    %635 = vmatprep.subr.bf16.mxu0 %v474
    %636 = vmatpush1.bf16.msra.mxu0 %v473
    %637 = vmatprep.subr.bf16.mxu0 %v469
    %638 = vmatpush1.bf16.msra.mxu0 %v468
    %639 = vmatprep.subr.bf16.mxu0 %v464
    %640 = vmatpush1.bf16.msra.mxu0 %v463
    %641 = vmatprep.subr.bf16.mxu0 %v459
    %642 = vmatpush1.bf16.msra.mxu0 %v458
    %643 = vmatprep.subr.bf16.mxu0 %v454
    %644 = vmatpush1.bf16.msra.mxu0 %v453
    %645 = vmatprep.subr.bf16.mxu0 0
    %646 = vmatpush2.bf16.msra.mxu0 0
    %647 = vmatprep.subr.bf16.mxu0 0
    %648 = vmatpush2.bf16.msra.mxu0 0
    %649 = vmatprep.subr.bf16.mxu0 0
    %650 = vmatpush2.bf16.msra.mxu0 0
    %651 = vmatprep.subr.bf16.mxu0 %v618
    %652 = vmatpush2.bf16.msra.mxu0 %v615
    %653 = vmatprep.subr.bf16.mxu0 %v509
    %654 = vmatpush2.bf16.msra.mxu0 %v508
    %655 = vmatprep.subr.bf16.mxu0 %v504
    %656 = vmatpush2.bf16.msra.mxu0 %v503
    %657 = vmatprep.subr.bf16.mxu0 %v499
    %658 = vmatpush2.bf16.msra.mxu0 %v498
    %659 = vmatprep.subr.bf16.mxu0 %v494
    %660 = vmatpush2.bf16.msra.mxu0 %v493
    %661 = vmatprep.mubr.bf16.mxu0 %v610
    %662 = vmatmul.mubr.bf16.gmra.mxu0 0
    %v663 = vpop.f32.mrf.mxu0
    %v664 = vadd.f32 %v587, %v663
    %v665 = vpop.f32.mrf.mxu0
    %v666 = vadd.f32 %v595, %v665
    %v667 = vpop.f32.mrf.mxu0
    %v668 = vpop.f32.mrf.mxu0
    %669 = vdwg.mxu0
    %670 = vmatprep.subr.bf16.mxu0 %v491
    %671 = vmatpush1.bf16.msra.mxu0 %v490
    %672 = vmatprep.subr.bf16.mxu0 %v486
    %673 = vmatpush1.bf16.msra.mxu0 %v485
    %674 = vmatprep.subr.bf16.mxu0 %v481
    %675 = vmatpush1.bf16.msra.mxu0 %v480
    %676 = vmatprep.subr.bf16.mxu0 %v476
    %677 = vmatpush1.bf16.msra.mxu0 %v475
    %678 = vmatprep.subr.bf16.mxu0 %v471
    %679 = vmatpush1.bf16.msra.mxu0 %v470
    %680 = vmatprep.subr.bf16.mxu0 %v466
    %681 = vmatpush1.bf16.msra.mxu0 %v465
    %682 = vmatprep.subr.bf16.mxu0 %v461
    %683 = vmatpush1.bf16.msra.mxu0 %v460
    %684 = vmatprep.subr.bf16.mxu0 %v456
    %685 = vmatpush1.bf16.msra.mxu0 %v455
    %686 = vmatprep.subr.bf16.mxu0 0
    %687 = vmatpush2.bf16.msra.mxu0 0
    %688 = vmatprep.subr.bf16.mxu0 0
    %689 = vmatpush2.bf16.msra.mxu0 0
    %690 = vmatprep.subr.bf16.mxu0 0
    %691 = vmatpush2.bf16.msra.mxu0 0
    %692 = vmatprep.subr.bf16.mxu0 %v624
    %693 = vmatpush2.bf16.msra.mxu0 %v621
    %694 = vmatprep.subr.bf16.mxu0 %v511
    %695 = vmatpush2.bf16.msra.mxu0 %v510
    %696 = vmatprep.subr.bf16.mxu0 %v506
    %697 = vmatpush2.bf16.msra.mxu0 %v505
    %698 = vmatprep.subr.bf16.mxu0 %v501
    %699 = vmatpush2.bf16.msra.mxu0 %v500
    %700 = vmatprep.subr.bf16.mxu0 %v496
    %701 = vmatpush2.bf16.msra.mxu0 %v495
    %702 = vmatprep.mubr.bf16.mxu0 %v610
    %703 = vmatmul.mubr.bf16.gmra.mxu0 0
    %v704 = vpop.f32.mrf.mxu0
    %v705 = vadd.f32 %v594, %v704
    %v706 = vpop.f32.mrf.mxu0
    %v707 = vadd.f32 %v596, %v706
    %v708 = vpop.f32.mrf.mxu0
    %v709 = vpop.f32.mrf.mxu0
    %710 = vdwg.mxu0
    %711 = vmatprep.subr.bf16.mxu0 0
    %712 = vmatpush1.bf16.msra.mxu0 %v492
    %713 = vmatprep.subr.bf16.mxu0 0
    %714 = vmatpush1.bf16.msra.mxu0 %v487
    %715 = vmatprep.subr.bf16.mxu0 0
    %716 = vmatpush1.bf16.msra.mxu0 %v482
    %717 = vmatprep.subr.bf16.mxu0 0
    %718 = vmatpush1.bf16.msra.mxu0 %v477
    %719 = vmatprep.subr.bf16.mxu0 0
    %720 = vmatpush1.bf16.msra.mxu0 %v472
    %721 = vmatprep.subr.bf16.mxu0 0
    %722 = vmatpush1.bf16.msra.mxu0 %v467
    %723 = vmatprep.subr.bf16.mxu0 0
    %724 = vmatpush1.bf16.msra.mxu0 %v462
    %725 = vmatprep.subr.bf16.mxu0 0
    %726 = vmatpush1.bf16.msra.mxu0 %v457
    %727 = vmatprep.subr.bf16.mxu0 0
    %728 = vmatpush2.bf16.msra.mxu0 0
    %729 = vmatprep.subr.bf16.mxu0 0
    %730 = vmatpush2.bf16.msra.mxu0 0
    %731 = vmatprep.subr.bf16.mxu0 0
    %732 = vmatpush2.bf16.msra.mxu0 0
    %733 = vmatprep.subr.bf16.mxu0 0
    %734 = vmatpush2.bf16.msra.mxu0 %v627
    %735 = vmatprep.subr.bf16.mxu0 0
    %736 = vmatpush2.bf16.msra.mxu0 %v512
    %737 = vmatprep.subr.bf16.mxu0 0
    %738 = vmatpush2.bf16.msra.mxu0 %v507
    %739 = vmatprep.subr.bf16.mxu0 0
    %740 = vmatpush2.bf16.msra.mxu0 %v502
    %741 = vmatprep.subr.bf16.mxu0 0
    %742 = vmatpush2.bf16.msra.mxu0 %v497
    %743 = vmatprep.mubr.bf16.mxu0 %v610
    %744 = vmatmul.mubr.bf16.gmra.mxu0 0
    %v745 = vpop.f32.mrf.mxu0
    %v746 = vadd.f32 %v603, %v745
    %v747 = vpop.f32.mrf.mxu0
    %v748 = vpop.f32.mrf.mxu0
    %v749 = vpop.f32.mrf.mxu0
    %750 = vdwg.mxu0
    %v751 = vxor.u32 %v229, 2147483648
    %v752 = vmul.f32 %v751, 1.442695
    %v753 = vpow.pop %v752
    %v754 = vadd.f32 %v753, 1.0
    %v755 = vrcp.pop %v754
    %v756 = vmul.f32 1.0, %v755
    %v757 = vtanh.pop %v229
    %v758 = vmul.f32 %v756, 0.0
    %760 = vrot.lane.b32.xlu0 %v757, 64
    %v761 = vpop.permute.xlu0 %760
    %v763 = vmul.f32 %v756, %v761
    %765 = vrot.lane.b32.xlu0 %v763, 32
    %v766 = vpop.permute.xlu0 %765
    %v768 = vadd.f32 %v758, %v766
    %v769 = vtanh.pop %v768
    %771 = vrot.lane.b32.xlu0 %v769, 64
    %v772 = vpop.permute.xlu0 %771
    %v774 = vmul.f32 %v756, %v772
    %v775 = vpack.c.bf16 %v774, %v774
    %v776 = vxor.u32 %v664, 2147483648
    %v777 = vxor.u32 %v666, 2147483648
    %v778 = vmul.f32 %v776, 1.442695
    %v779 = vpow.pop %v778
    %v780 = vmul.f32 %v777, 1.442695
    %v781 = vpow.pop %v780
    %v782 = vadd.f32 %v779, 1.0
    %v783 = vadd.f32 %v781, 1.0
    %v784 = vrcp.pop %v782
    %v785 = vmul.f32 1.0, %v784
    %v786 = vrcp.pop %v783
    %v787 = vmul.f32 1.0, %v786
    %v788 = vxor.u32 %v705, 2147483648
    %v789 = vmul.f32 %v788, 1.442695
    %v790 = vpow.pop %v789
    %v791 = vadd.f32 %v790, 1.0
    %v792 = vrcp.pop %v791
    %v793 = vmul.f32 1.0, %v792
    %v794 = vtanh.pop %v705
    %v795 = vtanh.pop %v707
    %v796 = vxor.u32 %v707, 2147483648
    %v797 = vxor.u32 %v746, 2147483648
    %v798 = vmul.f32 %v796, 1.442695
    %v799 = vpow.pop %v798
    %v800 = vmul.f32 %v797, 1.442695
    %v801 = vpow.pop %v800
    %v802 = vadd.f32 %v799, 1.0
    %v803 = vadd.f32 %v801, 1.0
    %v804 = vrcp.pop %v802
    %v805 = vmul.f32 1.0, %v804
    %v806 = vrcp.pop %v803
    %v807 = vmul.f32 1.0, %v806
    %v808 = vmul.f32 %v787, 0.0
    %v809 = vmul.f32 %v793, 0.0
    %812 = vrot.lane.b32.xlu0 %v794, 64
    %v813 = vpop.permute.xlu0 %812
    %814 = vrot.lane.b32.xlu0 %v795, 64
    %v815 = vpop.permute.xlu0 %814
    %v816 = vsel %vm149, %v813, %v815
    %v819 = vmul.f32 %v785, %v816
    %v820 = vmul.f32 %v787, %v815
    %823 = vrot.lane.b32.xlu0 %v819, 32
    %v824 = vpop.permute.xlu0 %823
    %825 = vrot.lane.b32.xlu0 %v820, 32
    %v826 = vpop.permute.xlu0 %825
    %v827 = vsel %vm146, %v824, %v826
    %v830 = vadd.f32 %v808, %v824
    %v831 = vadd.f32 %v809, %v827
    %v832 = vtanh.pop %v830
    %v833 = vtanh.pop %v831
    %836 = vrot.lane.b32.xlu0 %v832, 64
    %v837 = vpop.permute.xlu0 %836
    %838 = vrot.lane.b32.xlu0 %v833, 64
    %v839 = vpop.permute.xlu0 %838
    %v840 = vsel %vm149, %v837, %v839
    %v843 = vmul.f32 %v805, %v837
    %v844 = vmul.f32 %v807, %v840
    %v845 = vpack.c.bf16 %v843, %v843
    %v846 = vpack.c.bf16 %v844, %v844
    %s847 = scalar_lea.vmem %s0, 4
    %v848 = vld [vmem:[%s847] sm:$0xf]
    %s849 = scalar_lea.vmem %s1, 1
    %v850 = vld [vmem:[%s849] sm:$0x1]
    %v851 = vunpack.c.l.bf16 %v775
    %v852 = vadd.f32 %v851, 0.0
    %v854 = vrot.slane %v851, 2
    %v856 = vadd.f32 %v852, %v854
    %v857 = vrot.slane %v851, 4
    %v859 = vadd.f32 %v856, %v857
    %v860 = vrot.slane %v851, 6
    %v862 = vadd.f32 %v859, %v860
    %v863 = vmul.f32 %v862, 0.25
    %v864 = vpack.c.bf16 %v863, %v863
    %v866 = vrot.slane %v846, 7
    %v867 = vrot.slane %v846, 6
    %v868 = vrot.slane %v846, 5
    %v871 = vsel %vm132, %v846, %v866
    %v873 = vsel %vm134, %v871, %v867
    %v875 = vsel %vm136, %v873, %v868
    %877 = vrot.lane.b32.xlu0 %v775, 32
    %v878 = vpop.permute.xlu0 %877
    %v880 = vunpack.c.l.b16 %v848
    %v881 = vpack.c.b16 %v880, %v880
    %882 = vrot.lane.b32.xlu0 %v881, 64
    %v883 = vpop.permute.xlu0 %882
    %v885 = vsel %vm146, %v878, %v875
    %v887 = vsel %vm149, %v885, %v883
    %v888 = vsel %vm152, %v887, 1065369472
    %v889 = vsel %vm184, %v888, 0
    %891 = vmatprep.subr.bf16.mxu0 0
    %892 = vmatpush1.bf16.msra.mxu0 0
    %893 = vmatprep.subr.bf16.mxu0 0
    %894 = vmatpush1.bf16.msra.mxu0 0
    %895 = vmatprep.subr.bf16.mxu0 0
    %896 = vmatpush1.bf16.msra.mxu0 0
    %897 = vmatprep.subr.bf16.mxu0 0
    %898 = vmatpush1.bf16.msra.mxu0 %v192
    %899 = vmatprep.subr.bf16.mxu0 0
    %900 = vmatpush1.bf16.msra.mxu0 %v178
    %901 = vmatprep.subr.bf16.mxu0 0
    %902 = vmatpush1.bf16.msra.mxu0 %v177
    %903 = vmatprep.subr.bf16.mxu0 0
    %904 = vmatpush1.bf16.msra.mxu0 %v176
    %905 = vmatprep.subr.bf16.mxu0 0
    %906 = vmatpush1.bf16.msra.mxu0 %v175
    %907 = vmatprep.subr.bf16.mxu0 0
    %908 = vmatpush2.bf16.msra.mxu0 0
    %909 = vmatprep.subr.bf16.mxu0 0
    %910 = vmatpush2.bf16.msra.mxu0 0
    %911 = vmatprep.subr.bf16.mxu0 0
    %912 = vmatpush2.bf16.msra.mxu0 0
    %913 = vmatprep.subr.bf16.mxu0 0
    %914 = vmatpush2.bf16.msra.mxu0 0
    %915 = vmatprep.subr.bf16.mxu0 0
    %916 = vmatpush2.bf16.msra.mxu0 0
    %917 = vmatprep.subr.bf16.mxu0 0
    %918 = vmatpush2.bf16.msra.mxu0 0
    %919 = vmatprep.subr.bf16.mxu0 0
    %920 = vmatpush2.bf16.msra.mxu0 0
    %921 = vmatprep.subr.bf16.mxu0 0
    %922 = vmatpush2.bf16.msra.mxu0 0
    %923 = vmatprep.mubr.bf16.mxu0 0
    %924 = vmatmul.mubr.bf16.gmra.mxu0 %v889
    %v925 = vpop.f32.mrf.mxu0
    %v926 = vadd.f32 0.0, %v925
    %v927 = vpop.f32.mrf.mxu0
    %v928 = vpop.f32.mrf.mxu0
    %v929 = vpop.f32.mrf.mxu0
    %930 = vdwg.mxu0
    %932 = vrot.lane.b32.xlu0 %v845, 32
    %v933 = vpop.permute.xlu0 %932
    %934 = vrot.lane.b32.xlu0 %v846, 32
    %v935 = vpop.permute.xlu0 %934
    %vm936 = vcmask 261120
    %v937 = vsel %vm936, %v933, %v935
    %940 = vrot.lane.b32.xlu0 %v864, 64
    %v941 = vpop.permute.xlu0 %940
    %v944 = vunpack.c.l.s4 1966171168
    %v945 = vunpack.c.0.s8 %v944
    %v946 = vlaneseq
    %v947 = vshrl.u32 %v946, 7
    %v948 = vsub.s32 %v945, %v947
    %v949 = vrot.slane %v850, %v948
    %v951 = vunpack.c.l.s4 1966171168
    %v952 = vunpack.c.0.s8 %v951
    %v953 = vlaneseq
    %v954 = vshrl.u32 %v953, 7
    %v955 = vsub.s32 %v952, %v954
    %v956 = vrot.slane %v949, %v955
    %957 = vrot.lane.b32.xlu0 %v956, 64
    %v958 = vpop.permute.xlu0 %957
    %v961 = vsel %vm146, %v935, %v941
    %v963 = vsel %vm149, %v961, %v958
    %v964 = vsel %vm609, %v963, 0
    %966 = vmatprep.subr.bf16.mxu0 %v489
    %967 = vmatpush1.bf16.msra.mxu0 %v488
    %968 = vmatprep.subr.bf16.mxu0 %v484
    %969 = vmatpush1.bf16.msra.mxu0 %v483
    %970 = vmatprep.subr.bf16.mxu0 %v479
    %971 = vmatpush1.bf16.msra.mxu0 %v478
    %972 = vmatprep.subr.bf16.mxu0 %v474
    %973 = vmatpush1.bf16.msra.mxu0 %v473
    %974 = vmatprep.subr.bf16.mxu0 %v469
    %975 = vmatpush1.bf16.msra.mxu0 %v468
    %976 = vmatprep.subr.bf16.mxu0 %v464
    %977 = vmatpush1.bf16.msra.mxu0 %v463
    %978 = vmatprep.subr.bf16.mxu0 %v459
    %979 = vmatpush1.bf16.msra.mxu0 %v458
    %980 = vmatprep.subr.bf16.mxu0 %v454
    %981 = vmatpush1.bf16.msra.mxu0 %v453
    %982 = vmatprep.subr.bf16.mxu0 0
    %983 = vmatpush2.bf16.msra.mxu0 0
    %984 = vmatprep.subr.bf16.mxu0 0
    %985 = vmatpush2.bf16.msra.mxu0 0
    %986 = vmatprep.subr.bf16.mxu0 0
    %987 = vmatpush2.bf16.msra.mxu0 0
    %988 = vmatprep.subr.bf16.mxu0 %v618
    %989 = vmatpush2.bf16.msra.mxu0 %v615
    %990 = vmatprep.subr.bf16.mxu0 %v509
    %991 = vmatpush2.bf16.msra.mxu0 %v508
    %992 = vmatprep.subr.bf16.mxu0 %v504
    %993 = vmatpush2.bf16.msra.mxu0 %v503
    %994 = vmatprep.subr.bf16.mxu0 %v499
    %995 = vmatpush2.bf16.msra.mxu0 %v498
    %996 = vmatprep.subr.bf16.mxu0 %v494
    %997 = vmatpush2.bf16.msra.mxu0 %v493
    %998 = vmatprep.mubr.bf16.mxu0 %v964
    %999 = vmatmul.mubr.bf16.gmra.mxu0 %v937
    %v1000 = vpop.f32.mrf.mxu0
    %v1001 = vadd.f32 %v587, %v1000
    %v1002 = vpop.f32.mrf.mxu0
    %v1003 = vadd.f32 %v595, %v1002
    %v1004 = vpop.f32.mrf.mxu0
    %v1005 = vpop.f32.mrf.mxu0
    %1006 = vdwg.mxu0
    %1007 = vmatprep.subr.bf16.mxu0 %v491
    %1008 = vmatpush1.bf16.msra.mxu0 %v490
    %1009 = vmatprep.subr.bf16.mxu0 %v486
    %1010 = vmatpush1.bf16.msra.mxu0 %v485
    %1011 = vmatprep.subr.bf16.mxu0 %v481
    %1012 = vmatpush1.bf16.msra.mxu0 %v480
    %1013 = vmatprep.subr.bf16.mxu0 %v476
    %1014 = vmatpush1.bf16.msra.mxu0 %v475
    %1015 = vmatprep.subr.bf16.mxu0 %v471
    %1016 = vmatpush1.bf16.msra.mxu0 %v470
    %1017 = vmatprep.subr.bf16.mxu0 %v466
    %1018 = vmatpush1.bf16.msra.mxu0 %v465
    %1019 = vmatprep.subr.bf16.mxu0 %v461
    %1020 = vmatpush1.bf16.msra.mxu0 %v460
    %1021 = vmatprep.subr.bf16.mxu0 %v456
    %1022 = vmatpush1.bf16.msra.mxu0 %v455
    %1023 = vmatprep.subr.bf16.mxu0 0
    %1024 = vmatpush2.bf16.msra.mxu0 0
    %1025 = vmatprep.subr.bf16.mxu0 0
    %1026 = vmatpush2.bf16.msra.mxu0 0
    %1027 = vmatprep.subr.bf16.mxu0 0
    %1028 = vmatpush2.bf16.msra.mxu0 0
    %1029 = vmatprep.subr.bf16.mxu0 %v624
    %1030 = vmatpush2.bf16.msra.mxu0 %v621
    %1031 = vmatprep.subr.bf16.mxu0 %v511
    %1032 = vmatpush2.bf16.msra.mxu0 %v510
    %1033 = vmatprep.subr.bf16.mxu0 %v506
    %1034 = vmatpush2.bf16.msra.mxu0 %v505
    %1035 = vmatprep.subr.bf16.mxu0 %v501
    %1036 = vmatpush2.bf16.msra.mxu0 %v500
    %1037 = vmatprep.subr.bf16.mxu0 %v496
    %1038 = vmatpush2.bf16.msra.mxu0 %v495
    %1039 = vmatprep.mubr.bf16.mxu0 %v964
    %1040 = vmatmul.mubr.bf16.gmra.mxu0 %v937
    %v1041 = vpop.f32.mrf.mxu0
    %v1042 = vadd.f32 %v594, %v1041
    %v1043 = vpop.f32.mrf.mxu0
    %v1044 = vadd.f32 %v596, %v1043
    %v1045 = vpop.f32.mrf.mxu0
    %v1046 = vpop.f32.mrf.mxu0
    %1047 = vdwg.mxu0
    %1048 = vmatprep.subr.bf16.mxu0 0
    %1049 = vmatpush1.bf16.msra.mxu0 %v492
    %1050 = vmatprep.subr.bf16.mxu0 0
    %1051 = vmatpush1.bf16.msra.mxu0 %v487
    %1052 = vmatprep.subr.bf16.mxu0 0
    %1053 = vmatpush1.bf16.msra.mxu0 %v482
    %1054 = vmatprep.subr.bf16.mxu0 0
    %1055 = vmatpush1.bf16.msra.mxu0 %v477
    %1056 = vmatprep.subr.bf16.mxu0 0
    %1057 = vmatpush1.bf16.msra.mxu0 %v472
    %1058 = vmatprep.subr.bf16.mxu0 0
    %1059 = vmatpush1.bf16.msra.mxu0 %v467
    %1060 = vmatprep.subr.bf16.mxu0 0
    %1061 = vmatpush1.bf16.msra.mxu0 %v462
    %1062 = vmatprep.subr.bf16.mxu0 0
    %1063 = vmatpush1.bf16.msra.mxu0 %v457
    %1064 = vmatprep.subr.bf16.mxu0 0
    %1065 = vmatpush2.bf16.msra.mxu0 0
    %1066 = vmatprep.subr.bf16.mxu0 0
    %1067 = vmatpush2.bf16.msra.mxu0 0
    %1068 = vmatprep.subr.bf16.mxu0 0
    %1069 = vmatpush2.bf16.msra.mxu0 0
    %1070 = vmatprep.subr.bf16.mxu0 0
    %1071 = vmatpush2.bf16.msra.mxu0 %v627
    %1072 = vmatprep.subr.bf16.mxu0 0
    %1073 = vmatpush2.bf16.msra.mxu0 %v512
    %1074 = vmatprep.subr.bf16.mxu0 0
    %1075 = vmatpush2.bf16.msra.mxu0 %v507
    %1076 = vmatprep.subr.bf16.mxu0 0
    %1077 = vmatpush2.bf16.msra.mxu0 %v502
    %1078 = vmatprep.subr.bf16.mxu0 0
    %1079 = vmatpush2.bf16.msra.mxu0 %v497
    %1080 = vmatprep.mubr.bf16.mxu0 %v964
    %1081 = vmatmul.mubr.bf16.gmra.mxu0 %v937
    %v1082 = vpop.f32.mrf.mxu0
    %v1083 = vadd.f32 %v603, %v1082
    %v1084 = vpop.f32.mrf.mxu0
    %v1085 = vpop.f32.mrf.mxu0
    %v1086 = vpop.f32.mrf.mxu0
    %1087 = vdwg.mxu0
    %v1088 = vxor.u32 %v926, 2147483648
    %v1089 = vmul.f32 %v1088, 1.442695
    %v1090 = vpow.pop %v1089
    %v1091 = vadd.f32 %v1090, 1.0
    %v1092 = vrcp.pop %v1091
    %v1093 = vmul.f32 1.0, %v1092
    %v1094 = vtanh.pop %v926
    %v1095 = vmul.f32 %v1093, %v768
    %1097 = vrot.lane.b32.xlu0 %v1094, 64
    %v1098 = vpop.permute.xlu0 %1097
    %v1100 = vmul.f32 %v1093, %v1098
    %1102 = vrot.lane.b32.xlu0 %v1100, 32
    %v1103 = vpop.permute.xlu0 %1102
    %v1105 = vadd.f32 %v1095, %v1103
    %v1106 = vtanh.pop %v1105
    %1108 = vrot.lane.b32.xlu0 %v1106, 64
    %v1109 = vpop.permute.xlu0 %1108
    %v1111 = vmul.f32 %v1093, %v1109
    %v1112 = vpack.c.bf16 %v1111, %v1111
    %v1113 = vxor.u32 %v1001, 2147483648
    %v1114 = vxor.u32 %v1003, 2147483648
    %v1115 = vmul.f32 %v1113, 1.442695
    %v1116 = vpow.pop %v1115
    %v1117 = vmul.f32 %v1114, 1.442695
    %v1118 = vpow.pop %v1117
    %v1119 = vadd.f32 %v1116, 1.0
    %v1120 = vadd.f32 %v1118, 1.0
    %v1121 = vrcp.pop %v1119
    %v1122 = vmul.f32 1.0, %v1121
    %v1123 = vrcp.pop %v1120
    %v1124 = vmul.f32 1.0, %v1123
    %v1125 = vxor.u32 %v1042, 2147483648
    %v1126 = vmul.f32 %v1125, 1.442695
    %v1127 = vpow.pop %v1126
    %v1128 = vadd.f32 %v1127, 1.0
    %v1129 = vrcp.pop %v1128
    %v1130 = vmul.f32 1.0, %v1129
    %v1131 = vtanh.pop %v1042
    %v1132 = vtanh.pop %v1044
    %v1133 = vxor.u32 %v1044, 2147483648
    %v1134 = vxor.u32 %v1083, 2147483648
    %v1135 = vmul.f32 %v1133, 1.442695
    %v1136 = vpow.pop %v1135
    %v1137 = vmul.f32 %v1134, 1.442695
    %v1138 = vpow.pop %v1137
    %v1139 = vadd.f32 %v1136, 1.0
    %v1140 = vadd.f32 %v1138, 1.0
    %v1141 = vrcp.pop %v1139
    %v1142 = vmul.f32 1.0, %v1141
    %v1143 = vrcp.pop %v1140
    %v1144 = vmul.f32 1.0, %v1143
    %v1145 = vmul.f32 %v1124, %v830
    %v1146 = vmul.f32 %v1130, %v831
    %1149 = vrot.lane.b32.xlu0 %v1131, 64
    %v1150 = vpop.permute.xlu0 %1149
    %1151 = vrot.lane.b32.xlu0 %v1132, 64
    %v1152 = vpop.permute.xlu0 %1151
    %v1153 = vsel %vm149, %v1150, %v1152
    %v1156 = vmul.f32 %v1122, %v1153
    %v1157 = vmul.f32 %v1124, %v1152
    %1160 = vrot.lane.b32.xlu0 %v1156, 32
    %v1161 = vpop.permute.xlu0 %1160
    %1162 = vrot.lane.b32.xlu0 %v1157, 32
    %v1163 = vpop.permute.xlu0 %1162
    %v1164 = vsel %vm146, %v1161, %v1163
    %v1167 = vadd.f32 %v1145, %v1161
    %v1168 = vadd.f32 %v1146, %v1164
    %v1169 = vtanh.pop %v1167
    %v1170 = vtanh.pop %v1168
    %1173 = vrot.lane.b32.xlu0 %v1169, 64
    %v1174 = vpop.permute.xlu0 %1173
    %1175 = vrot.lane.b32.xlu0 %v1170, 64
    %v1176 = vpop.permute.xlu0 %1175
    %v1177 = vsel %vm149, %v1174, %v1176
    %v1180 = vmul.f32 %v1142, %v1174
    %v1181 = vmul.f32 %v1144, %v1177
    %v1182 = vpack.c.bf16 %v1180, %v1180
    %v1183 = vpack.c.bf16 %v1181, %v1181
    %s1184 = scalar_lea.vmem %s0, 8
    %v1185 = vld [vmem:[%s1184] sm:$0xf]
    %s1186 = scalar_lea.vmem %s1, 2
    %v1187 = vld [vmem:[%s1186] sm:$0x1]
    %v1188 = vunpack.c.l.bf16 %v1112
    %v1189 = vadd.f32 %v1188, 0.0
    %v1191 = vrot.slane %v1188, 2
    %v1193 = vadd.f32 %v1189, %v1191
    %v1194 = vrot.slane %v1188, 4
    %v1196 = vadd.f32 %v1193, %v1194
    %v1197 = vrot.slane %v1188, 6
    %v1199 = vadd.f32 %v1196, %v1197
    %v1200 = vmul.f32 %v1199, 0.25
    %v1201 = vpack.c.bf16 %v1200, %v1200
    %v1203 = vrot.slane %v1183, 7
    %v1204 = vrot.slane %v1183, 6
    %v1205 = vrot.slane %v1183, 5
    %v1208 = vsel %vm132, %v1183, %v1203
    %v1210 = vsel %vm134, %v1208, %v1204
    %v1212 = vsel %vm136, %v1210, %v1205
    %1214 = vrot.lane.b32.xlu0 %v1112, 32
    %v1215 = vpop.permute.xlu0 %1214
    %v1217 = vunpack.c.l.b16 %v1185
    %v1218 = vpack.c.b16 %v1217, %v1217
    %1219 = vrot.lane.b32.xlu0 %v1218, 64
    %v1220 = vpop.permute.xlu0 %1219
    %v1222 = vsel %vm146, %v1215, %v1212
    %v1224 = vsel %vm149, %v1222, %v1220
    %v1225 = vsel %vm152, %v1224, 1065369472
    %v1226 = vsel %vm184, %v1225, 0
    %1228 = vmatprep.subr.bf16.mxu0 0
    %1229 = vmatpush1.bf16.msra.mxu0 0
    %1230 = vmatprep.subr.bf16.mxu0 0
    %1231 = vmatpush1.bf16.msra.mxu0 0
    %1232 = vmatprep.subr.bf16.mxu0 0
    %1233 = vmatpush1.bf16.msra.mxu0 0
    %1234 = vmatprep.subr.bf16.mxu0 0
    %1235 = vmatpush1.bf16.msra.mxu0 %v192
    %1236 = vmatprep.subr.bf16.mxu0 0
    %1237 = vmatpush1.bf16.msra.mxu0 %v178
    %1238 = vmatprep.subr.bf16.mxu0 0
    %1239 = vmatpush1.bf16.msra.mxu0 %v177
    %1240 = vmatprep.subr.bf16.mxu0 0
    %1241 = vmatpush1.bf16.msra.mxu0 %v176
    %1242 = vmatprep.subr.bf16.mxu0 0
    %1243 = vmatpush1.bf16.msra.mxu0 %v175
    %1244 = vmatprep.subr.bf16.mxu0 0
    %1245 = vmatpush2.bf16.msra.mxu0 0
    %1246 = vmatprep.subr.bf16.mxu0 0
    %1247 = vmatpush2.bf16.msra.mxu0 0
    %1248 = vmatprep.subr.bf16.mxu0 0
    %1249 = vmatpush2.bf16.msra.mxu0 0
    %1250 = vmatprep.subr.bf16.mxu0 0
    %1251 = vmatpush2.bf16.msra.mxu0 0
    %1252 = vmatprep.subr.bf16.mxu0 0
    %1253 = vmatpush2.bf16.msra.mxu0 0
    %1254 = vmatprep.subr.bf16.mxu0 0
    %1255 = vmatpush2.bf16.msra.mxu0 0
    %1256 = vmatprep.subr.bf16.mxu0 0
    %1257 = vmatpush2.bf16.msra.mxu0 0
    %1258 = vmatprep.subr.bf16.mxu0 0
    %1259 = vmatpush2.bf16.msra.mxu0 0
    %1260 = vmatprep.mubr.bf16.mxu0 0
    %1261 = vmatmul.mubr.bf16.gmra.mxu0 %v1226
    %v1262 = vpop.f32.mrf.mxu0
    %v1263 = vadd.f32 0.0, %v1262
    %v1264 = vpop.f32.mrf.mxu0
    %v1265 = vpop.f32.mrf.mxu0
    %v1266 = vpop.f32.mrf.mxu0
    %1267 = vdwg.mxu0
    %1269 = vrot.lane.b32.xlu0 %v1182, 32
    %v1270 = vpop.permute.xlu0 %1269
    %1271 = vrot.lane.b32.xlu0 %v1183, 32
    %v1272 = vpop.permute.xlu0 %1271
    %v1273 = vsel %vm936, %v1270, %v1272
    %1276 = vrot.lane.b32.xlu0 %v1201, 64
    %v1277 = vpop.permute.xlu0 %1276
    %v1280 = vunpack.c.l.s4 1966171168
    %v1281 = vunpack.c.0.s8 %v1280
    %v1282 = vlaneseq
    %v1283 = vshrl.u32 %v1282, 7
    %v1284 = vsub.s32 %v1281, %v1283
    %v1285 = vrot.slane %v1187, %v1284
    %v1287 = vunpack.c.l.s4 1966171168
    %v1288 = vunpack.c.0.s8 %v1287
    %v1289 = vlaneseq
    %v1290 = vshrl.u32 %v1289, 7
    %v1291 = vsub.s32 %v1288, %v1290
    %v1292 = vrot.slane %v1285, %v1291
    %1293 = vrot.lane.b32.xlu0 %v1292, 64
    %v1294 = vpop.permute.xlu0 %1293
    %v1297 = vsel %vm146, %v1272, %v1277
    %v1299 = vsel %vm149, %v1297, %v1294
    %v1300 = vsel %vm609, %v1299, 0
    %1302 = vmatprep.subr.bf16.mxu0 %v489
    %1303 = vmatpush1.bf16.msra.mxu0 %v488
    %1304 = vmatprep.subr.bf16.mxu0 %v484
    %1305 = vmatpush1.bf16.msra.mxu0 %v483
    %1306 = vmatprep.subr.bf16.mxu0 %v479
    %1307 = vmatpush1.bf16.msra.mxu0 %v478
    %1308 = vmatprep.subr.bf16.mxu0 %v474
    %1309 = vmatpush1.bf16.msra.mxu0 %v473
    %1310 = vmatprep.subr.bf16.mxu0 %v469
    %1311 = vmatpush1.bf16.msra.mxu0 %v468
    %1312 = vmatprep.subr.bf16.mxu0 %v464
    %1313 = vmatpush1.bf16.msra.mxu0 %v463
    %1314 = vmatprep.subr.bf16.mxu0 %v459
    %1315 = vmatpush1.bf16.msra.mxu0 %v458
    %1316 = vmatprep.subr.bf16.mxu0 %v454
    %1317 = vmatpush1.bf16.msra.mxu0 %v453
    %1318 = vmatprep.subr.bf16.mxu0 0
    %1319 = vmatpush2.bf16.msra.mxu0 0
    %1320 = vmatprep.subr.bf16.mxu0 0
    %1321 = vmatpush2.bf16.msra.mxu0 0
    %1322 = vmatprep.subr.bf16.mxu0 0
    %1323 = vmatpush2.bf16.msra.mxu0 0
    %1324 = vmatprep.subr.bf16.mxu0 %v618
    %1325 = vmatpush2.bf16.msra.mxu0 %v615
    %1326 = vmatprep.subr.bf16.mxu0 %v509
    %1327 = vmatpush2.bf16.msra.mxu0 %v508
    %1328 = vmatprep.subr.bf16.mxu0 %v504
    %1329 = vmatpush2.bf16.msra.mxu0 %v503
    %1330 = vmatprep.subr.bf16.mxu0 %v499
    %1331 = vmatpush2.bf16.msra.mxu0 %v498
    %1332 = vmatprep.subr.bf16.mxu0 %v494
    %1333 = vmatpush2.bf16.msra.mxu0 %v493
    %1334 = vmatprep.mubr.bf16.mxu0 %v1300
    %1335 = vmatmul.mubr.bf16.gmra.mxu0 %v1273
    %v1336 = vpop.f32.mrf.mxu0
    %v1337 = vadd.f32 %v587, %v1336
    %v1338 = vpop.f32.mrf.mxu0
    %v1339 = vadd.f32 %v595, %v1338
    %v1340 = vpop.f32.mrf.mxu0
    %v1341 = vpop.f32.mrf.mxu0
    %1342 = vdwg.mxu0
    %1343 = vmatprep.subr.bf16.mxu0 %v491
    %1344 = vmatpush1.bf16.msra.mxu0 %v490
    %1345 = vmatprep.subr.bf16.mxu0 %v486
    %1346 = vmatpush1.bf16.msra.mxu0 %v485
    %1347 = vmatprep.subr.bf16.mxu0 %v481
    %1348 = vmatpush1.bf16.msra.mxu0 %v480
    %1349 = vmatprep.subr.bf16.mxu0 %v476
    %1350 = vmatpush1.bf16.msra.mxu0 %v475
    %1351 = vmatprep.subr.bf16.mxu0 %v471
    %1352 = vmatpush1.bf16.msra.mxu0 %v470
    %1353 = vmatprep.subr.bf16.mxu0 %v466
    %1354 = vmatpush1.bf16.msra.mxu0 %v465
    %1355 = vmatprep.subr.bf16.mxu0 %v461
    %1356 = vmatpush1.bf16.msra.mxu0 %v460
    %1357 = vmatprep.subr.bf16.mxu0 %v456
    %1358 = vmatpush1.bf16.msra.mxu0 %v455
    %1359 = vmatprep.subr.bf16.mxu0 0
    %1360 = vmatpush2.bf16.msra.mxu0 0
    %1361 = vmatprep.subr.bf16.mxu0 0
    %1362 = vmatpush2.bf16.msra.mxu0 0
    %1363 = vmatprep.subr.bf16.mxu0 0
    %1364 = vmatpush2.bf16.msra.mxu0 0
    %1365 = vmatprep.subr.bf16.mxu0 %v624
    %1366 = vmatpush2.bf16.msra.mxu0 %v621
    %1367 = vmatprep.subr.bf16.mxu0 %v511
    %1368 = vmatpush2.bf16.msra.mxu0 %v510
    %1369 = vmatprep.subr.bf16.mxu0 %v506
    %1370 = vmatpush2.bf16.msra.mxu0 %v505
    %1371 = vmatprep.subr.bf16.mxu0 %v501
    %1372 = vmatpush2.bf16.msra.mxu0 %v500
    %1373 = vmatprep.subr.bf16.mxu0 %v496
    %1374 = vmatpush2.bf16.msra.mxu0 %v495
    %1375 = vmatprep.mubr.bf16.mxu0 %v1300
    %1376 = vmatmul.mubr.bf16.gmra.mxu0 %v1273
    %v1377 = vpop.f32.mrf.mxu0
    %v1378 = vadd.f32 %v594, %v1377
    %v1379 = vpop.f32.mrf.mxu0
    %v1380 = vadd.f32 %v596, %v1379
    %v1381 = vpop.f32.mrf.mxu0
    %v1382 = vpop.f32.mrf.mxu0
    %1383 = vdwg.mxu0
    %1384 = vmatprep.subr.bf16.mxu0 0
    %1385 = vmatpush1.bf16.msra.mxu0 %v492
    %1386 = vmatprep.subr.bf16.mxu0 0
    %1387 = vmatpush1.bf16.msra.mxu0 %v487
    %1388 = vmatprep.subr.bf16.mxu0 0
    %1389 = vmatpush1.bf16.msra.mxu0 %v482
    %1390 = vmatprep.subr.bf16.mxu0 0
    %1391 = vmatpush1.bf16.msra.mxu0 %v477
    %1392 = vmatprep.subr.bf16.mxu0 0
    %1393 = vmatpush1.bf16.msra.mxu0 %v472
    %1394 = vmatprep.subr.bf16.mxu0 0
    %1395 = vmatpush1.bf16.msra.mxu0 %v467
    %1396 = vmatprep.subr.bf16.mxu0 0
    %1397 = vmatpush1.bf16.msra.mxu0 %v462
    %1398 = vmatprep.subr.bf16.mxu0 0
    %1399 = vmatpush1.bf16.msra.mxu0 %v457
    %1400 = vmatprep.subr.bf16.mxu0 0
    %1401 = vmatpush2.bf16.msra.mxu0 0
    %1402 = vmatprep.subr.bf16.mxu0 0
    %1403 = vmatpush2.bf16.msra.mxu0 0
    %1404 = vmatprep.subr.bf16.mxu0 0
    %1405 = vmatpush2.bf16.msra.mxu0 0
    %1406 = vmatprep.subr.bf16.mxu0 0
    %1407 = vmatpush2.bf16.msra.mxu0 %v627
    %1408 = vmatprep.subr.bf16.mxu0 0
    %1409 = vmatpush2.bf16.msra.mxu0 %v512
    %1410 = vmatprep.subr.bf16.mxu0 0
    %1411 = vmatpush2.bf16.msra.mxu0 %v507
    %1412 = vmatprep.subr.bf16.mxu0 0
    %1413 = vmatpush2.bf16.msra.mxu0 %v502
    %1414 = vmatprep.subr.bf16.mxu0 0
    %1415 = vmatpush2.bf16.msra.mxu0 %v497
    %1416 = vmatprep.mubr.bf16.mxu0 %v1300
    %1417 = vmatmul.mubr.bf16.gmra.mxu0 %v1273
    %v1418 = vpop.f32.mrf.mxu0
    %v1419 = vadd.f32 %v603, %v1418
    %v1420 = vpop.f32.mrf.mxu0
    %v1421 = vpop.f32.mrf.mxu0
    %v1422 = vpop.f32.mrf.mxu0
    %1423 = vdwg.mxu0
    %v1424 = vxor.u32 %v1263, 2147483648
    %v1425 = vmul.f32 %v1424, 1.442695
    %v1426 = vpow.pop %v1425
    %v1427 = vadd.f32 %v1426, 1.0
    %v1428 = vrcp.pop %v1427
    %v1429 = vmul.f32 1.0, %v1428
    %v1430 = vtanh.pop %v1263
    %v1431 = vmul.f32 %v1429, %v1105
    %1433 = vrot.lane.b32.xlu0 %v1430, 64
    %v1434 = vpop.permute.xlu0 %1433
    %v1436 = vmul.f32 %v1429, %v1434
    %1438 = vrot.lane.b32.xlu0 %v1436, 32
    %v1439 = vpop.permute.xlu0 %1438
    %v1441 = vadd.f32 %v1431, %v1439
    %v1442 = vtanh.pop %v1441
    %1444 = vrot.lane.b32.xlu0 %v1442, 64
    %v1445 = vpop.permute.xlu0 %1444
    %v1447 = vmul.f32 %v1429, %v1445
    %v1448 = vpack.c.bf16 %v1447, %v1447
    %v1449 = vxor.u32 %v1337, 2147483648
    %v1450 = vxor.u32 %v1339, 2147483648
    %v1451 = vmul.f32 %v1449, 1.442695
    %v1452 = vpow.pop %v1451
    %v1453 = vmul.f32 %v1450, 1.442695
    %v1454 = vpow.pop %v1453
    %v1455 = vadd.f32 %v1452, 1.0
    %v1456 = vadd.f32 %v1454, 1.0
    %v1457 = vrcp.pop %v1455
    %v1458 = vmul.f32 1.0, %v1457
    %v1459 = vrcp.pop %v1456
    %v1460 = vmul.f32 1.0, %v1459
    %v1461 = vxor.u32 %v1378, 2147483648
    %v1462 = vmul.f32 %v1461, 1.442695
    %v1463 = vpow.pop %v1462
    %v1464 = vadd.f32 %v1463, 1.0
    %v1465 = vrcp.pop %v1464
    %v1466 = vmul.f32 1.0, %v1465
    %v1467 = vtanh.pop %v1378
    %v1468 = vtanh.pop %v1380
    %v1469 = vxor.u32 %v1380, 2147483648
    %v1470 = vxor.u32 %v1419, 2147483648
    %v1471 = vmul.f32 %v1469, 1.442695
    %v1472 = vpow.pop %v1471
    %v1473 = vmul.f32 %v1470, 1.442695
    %v1474 = vpow.pop %v1473
    %v1475 = vadd.f32 %v1472, 1.0
    %v1476 = vadd.f32 %v1474, 1.0
    %v1477 = vrcp.pop %v1475
    %v1478 = vmul.f32 1.0, %v1477
    %v1479 = vrcp.pop %v1476
    %v1480 = vmul.f32 1.0, %v1479
    %v1481 = vmul.f32 %v1460, %v1167
    %v1482 = vmul.f32 %v1466, %v1168
    %1485 = vrot.lane.b32.xlu0 %v1467, 64
    %v1486 = vpop.permute.xlu0 %1485
    %1487 = vrot.lane.b32.xlu0 %v1468, 64
    %v1488 = vpop.permute.xlu0 %1487
    %v1489 = vsel %vm149, %v1486, %v1488
    %v1492 = vmul.f32 %v1458, %v1489
    %v1493 = vmul.f32 %v1460, %v1488
    %1496 = vrot.lane.b32.xlu0 %v1492, 32
    %v1497 = vpop.permute.xlu0 %1496
    %1498 = vrot.lane.b32.xlu0 %v1493, 32
    %v1499 = vpop.permute.xlu0 %1498
    %v1500 = vsel %vm146, %v1497, %v1499
    %v1503 = vadd.f32 %v1481, %v1497
    %v1504 = vadd.f32 %v1482, %v1500
    %v1505 = vtanh.pop %v1503
    %v1506 = vtanh.pop %v1504
    %1509 = vrot.lane.b32.xlu0 %v1505, 64
    %v1510 = vpop.permute.xlu0 %1509
    %1511 = vrot.lane.b32.xlu0 %v1506, 64
    %v1512 = vpop.permute.xlu0 %1511
    %v1513 = vsel %vm149, %v1510, %v1512
    %v1516 = vmul.f32 %v1478, %v1510
    %v1517 = vmul.f32 %v1480, %v1513
    %v1518 = vpack.c.bf16 %v1516, %v1516
    %v1519 = vpack.c.bf16 %v1517, %v1517
    %s1520 = scalar_lea.vmem %s0, 12
    %v1521 = vld [vmem:[%s1520] sm:$0xf]
    %s1522 = scalar_lea.vmem %s1, 3
    %v1523 = vld [vmem:[%s1522] sm:$0x1]
    %v1524 = vunpack.c.l.bf16 %v1448
    %v1525 = vadd.f32 %v1524, 0.0
    %v1527 = vrot.slane %v1524, 2
    %v1529 = vadd.f32 %v1525, %v1527
    %v1530 = vrot.slane %v1524, 4
    %v1532 = vadd.f32 %v1529, %v1530
    %v1533 = vrot.slane %v1524, 6
    %v1535 = vadd.f32 %v1532, %v1533
    %v1536 = vmul.f32 %v1535, 0.25
    %v1537 = vpack.c.bf16 %v1536, %v1536
    %v1539 = vrot.slane %v1519, 7
    %v1540 = vrot.slane %v1519, 6
    %v1541 = vrot.slane %v1519, 5
    %v1544 = vsel %vm132, %v1519, %v1539
    %v1546 = vsel %vm134, %v1544, %v1540
    %v1548 = vsel %vm136, %v1546, %v1541
    %1550 = vrot.lane.b32.xlu0 %v1448, 32
    %v1551 = vpop.permute.xlu0 %1550
    %v1553 = vunpack.c.l.b16 %v1521
    %v1554 = vpack.c.b16 %v1553, %v1553
    %1555 = vrot.lane.b32.xlu0 %v1554, 64
    %v1556 = vpop.permute.xlu0 %1555
    %v1558 = vsel %vm146, %v1551, %v1548
    %v1560 = vsel %vm149, %v1558, %v1556
    %v1561 = vsel %vm152, %v1560, 1065369472
    %v1562 = vsel %vm184, %v1561, 0
    %1564 = vmatprep.subr.bf16.mxu0 0
    %1565 = vmatpush1.bf16.msra.mxu0 0
    %1566 = vmatprep.subr.bf16.mxu0 0
    %1567 = vmatpush1.bf16.msra.mxu0 0
    %1568 = vmatprep.subr.bf16.mxu0 0
    %1569 = vmatpush1.bf16.msra.mxu0 0
    %1570 = vmatprep.subr.bf16.mxu0 0
    %1571 = vmatpush1.bf16.msra.mxu0 %v192
    %1572 = vmatprep.subr.bf16.mxu0 0
    %1573 = vmatpush1.bf16.msra.mxu0 %v178
    %1574 = vmatprep.subr.bf16.mxu0 0
    %1575 = vmatpush1.bf16.msra.mxu0 %v177
    %1576 = vmatprep.subr.bf16.mxu0 0
    %1577 = vmatpush1.bf16.msra.mxu0 %v176
    %1578 = vmatprep.subr.bf16.mxu0 0
    %1579 = vmatpush1.bf16.msra.mxu0 %v175
    %1580 = vmatprep.subr.bf16.mxu0 0
    %1581 = vmatpush2.bf16.msra.mxu0 0
    %1582 = vmatprep.subr.bf16.mxu0 0
    %1583 = vmatpush2.bf16.msra.mxu0 0
    %1584 = vmatprep.subr.bf16.mxu0 0
    %1585 = vmatpush2.bf16.msra.mxu0 0
    %1586 = vmatprep.subr.bf16.mxu0 0
    %1587 = vmatpush2.bf16.msra.mxu0 0
    %1588 = vmatprep.subr.bf16.mxu0 0
    %1589 = vmatpush2.bf16.msra.mxu0 0
    %1590 = vmatprep.subr.bf16.mxu0 0
    %1591 = vmatpush2.bf16.msra.mxu0 0
    %1592 = vmatprep.subr.bf16.mxu0 0
    %1593 = vmatpush2.bf16.msra.mxu0 0
    %1594 = vmatprep.subr.bf16.mxu0 0
    %1595 = vmatpush2.bf16.msra.mxu0 0
    %1596 = vmatprep.mubr.bf16.mxu0 0
    %1597 = vmatmul.mubr.bf16.gmra.mxu0 %v1562
    %v1598 = vpop.f32.mrf.mxu0
    %v1599 = vadd.f32 0.0, %v1598
    %v1600 = vpop.f32.mrf.mxu0
    %v1601 = vpop.f32.mrf.mxu0
    %v1602 = vpop.f32.mrf.mxu0
    %1603 = vdwg.mxu0
    %1605 = vrot.lane.b32.xlu0 %v1518, 32
    %v1606 = vpop.permute.xlu0 %1605
    %1607 = vrot.lane.b32.xlu0 %v1519, 32
    %v1608 = vpop.permute.xlu0 %1607
    %v1609 = vsel %vm936, %v1606, %v1608
    %1612 = vrot.lane.b32.xlu0 %v1537, 64
    %v1613 = vpop.permute.xlu0 %1612
    %v1616 = vunpack.c.l.s4 1966171168
    %v1617 = vunpack.c.0.s8 %v1616
    %v1618 = vlaneseq
    %v1619 = vshrl.u32 %v1618, 7
    %v1620 = vsub.s32 %v1617, %v1619
    %v1621 = vrot.slane %v1523, %v1620
    %v1623 = vunpack.c.l.s4 1966171168
    %v1624 = vunpack.c.0.s8 %v1623
    %v1625 = vlaneseq
    %v1626 = vshrl.u32 %v1625, 7
    %v1627 = vsub.s32 %v1624, %v1626
    %v1628 = vrot.slane %v1621, %v1627
    %1629 = vrot.lane.b32.xlu0 %v1628, 64
    %v1630 = vpop.permute.xlu0 %1629
    %v1633 = vsel %vm146, %v1608, %v1613
    %v1635 = vsel %vm149, %v1633, %v1630
    %v1636 = vsel %vm609, %v1635, 0
    %1638 = vmatprep.subr.bf16.mxu0 %v489
    %1639 = vmatpush1.bf16.msra.mxu0 %v488
    %1640 = vmatprep.subr.bf16.mxu0 %v484
    %1641 = vmatpush1.bf16.msra.mxu0 %v483
    %1642 = vmatprep.subr.bf16.mxu0 %v479
    %1643 = vmatpush1.bf16.msra.mxu0 %v478
    %1644 = vmatprep.subr.bf16.mxu0 %v474
    %1645 = vmatpush1.bf16.msra.mxu0 %v473
    %1646 = vmatprep.subr.bf16.mxu0 %v469
    %1647 = vmatpush1.bf16.msra.mxu0 %v468
    %1648 = vmatprep.subr.bf16.mxu0 %v464
    %1649 = vmatpush1.bf16.msra.mxu0 %v463
    %1650 = vmatprep.subr.bf16.mxu0 %v459
    %1651 = vmatpush1.bf16.msra.mxu0 %v458
    %1652 = vmatprep.subr.bf16.mxu0 %v454
    %1653 = vmatpush1.bf16.msra.mxu0 %v453
    %1654 = vmatprep.subr.bf16.mxu0 0
    %1655 = vmatpush2.bf16.msra.mxu0 0
    %1656 = vmatprep.subr.bf16.mxu0 0
    %1657 = vmatpush2.bf16.msra.mxu0 0
    %1658 = vmatprep.subr.bf16.mxu0 0
    %1659 = vmatpush2.bf16.msra.mxu0 0
    %1660 = vmatprep.subr.bf16.mxu0 %v618
    %1661 = vmatpush2.bf16.msra.mxu0 %v615
    %1662 = vmatprep.subr.bf16.mxu0 %v509
    %1663 = vmatpush2.bf16.msra.mxu0 %v508
    %1664 = vmatprep.subr.bf16.mxu0 %v504
    %1665 = vmatpush2.bf16.msra.mxu0 %v503
    %1666 = vmatprep.subr.bf16.mxu0 %v499
    %1667 = vmatpush2.bf16.msra.mxu0 %v498
    %1668 = vmatprep.subr.bf16.mxu0 %v494
    %1669 = vmatpush2.bf16.msra.mxu0 %v493
    %1670 = vmatprep.mubr.bf16.mxu0 %v1636
    %1671 = vmatmul.mubr.bf16.gmra.mxu0 %v1609
    %v1672 = vpop.f32.mrf.mxu0
    %v1673 = vadd.f32 %v587, %v1672
    %v1674 = vpop.f32.mrf.mxu0
    %v1675 = vadd.f32 %v595, %v1674
    %v1676 = vpop.f32.mrf.mxu0
    %v1677 = vpop.f32.mrf.mxu0
    %1678 = vdwg.mxu0
    %1679 = vmatprep.subr.bf16.mxu0 %v491
    %1680 = vmatpush1.bf16.msra.mxu0 %v490
    %1681 = vmatprep.subr.bf16.mxu0 %v486
    %1682 = vmatpush1.bf16.msra.mxu0 %v485
    %1683 = vmatprep.subr.bf16.mxu0 %v481
    %1684 = vmatpush1.bf16.msra.mxu0 %v480
    %1685 = vmatprep.subr.bf16.mxu0 %v476
    %1686 = vmatpush1.bf16.msra.mxu0 %v475
    %1687 = vmatprep.subr.bf16.mxu0 %v471
    %1688 = vmatpush1.bf16.msra.mxu0 %v470
    %1689 = vmatprep.subr.bf16.mxu0 %v466
    %1690 = vmatpush1.bf16.msra.mxu0 %v465
    %1691 = vmatprep.subr.bf16.mxu0 %v461
    %1692 = vmatpush1.bf16.msra.mxu0 %v460
    %1693 = vmatprep.subr.bf16.mxu0 %v456
    %1694 = vmatpush1.bf16.msra.mxu0 %v455
    %1695 = vmatprep.subr.bf16.mxu0 0
    %1696 = vmatpush2.bf16.msra.mxu0 0
    %1697 = vmatprep.subr.bf16.mxu0 0
    %1698 = vmatpush2.bf16.msra.mxu0 0
    %1699 = vmatprep.subr.bf16.mxu0 0
    %1700 = vmatpush2.bf16.msra.mxu0 0
    %1701 = vmatprep.subr.bf16.mxu0 %v624
    %1702 = vmatpush2.bf16.msra.mxu0 %v621
    %1703 = vmatprep.subr.bf16.mxu0 %v511
    %1704 = vmatpush2.bf16.msra.mxu0 %v510
    %1705 = vmatprep.subr.bf16.mxu0 %v506
    %1706 = vmatpush2.bf16.msra.mxu0 %v505
    %1707 = vmatprep.subr.bf16.mxu0 %v501
    %1708 = vmatpush2.bf16.msra.mxu0 %v500
    %1709 = vmatprep.subr.bf16.mxu0 %v496
    %1710 = vmatpush2.bf16.msra.mxu0 %v495
    %1711 = vmatprep.mubr.bf16.mxu0 %v1636
    %1712 = vmatmul.mubr.bf16.gmra.mxu0 %v1609
    %v1713 = vpop.f32.mrf.mxu0
    %v1714 = vadd.f32 %v594, %v1713
    %v1715 = vpop.f32.mrf.mxu0
    %v1716 = vadd.f32 %v596, %v1715
    %v1717 = vpop.f32.mrf.mxu0
    %v1718 = vpop.f32.mrf.mxu0
    %1719 = vdwg.mxu0
    %1720 = vmatprep.subr.bf16.mxu0 0
    %1721 = vmatpush1.bf16.msra.mxu0 %v492
    %1722 = vmatprep.subr.bf16.mxu0 0
    %1723 = vmatpush1.bf16.msra.mxu0 %v487
    %1724 = vmatprep.subr.bf16.mxu0 0
    %1725 = vmatpush1.bf16.msra.mxu0 %v482
    %1726 = vmatprep.subr.bf16.mxu0 0
    %1727 = vmatpush1.bf16.msra.mxu0 %v477
    %1728 = vmatprep.subr.bf16.mxu0 0
    %1729 = vmatpush1.bf16.msra.mxu0 %v472
    %1730 = vmatprep.subr.bf16.mxu0 0
    %1731 = vmatpush1.bf16.msra.mxu0 %v467
    %1732 = vmatprep.subr.bf16.mxu0 0
    %1733 = vmatpush1.bf16.msra.mxu0 %v462
    %1734 = vmatprep.subr.bf16.mxu0 0
    %1735 = vmatpush1.bf16.msra.mxu0 %v457
    %1736 = vmatprep.subr.bf16.mxu0 0
    %1737 = vmatpush2.bf16.msra.mxu0 0
    %1738 = vmatprep.subr.bf16.mxu0 0
    %1739 = vmatpush2.bf16.msra.mxu0 0
    %1740 = vmatprep.subr.bf16.mxu0 0
    %1741 = vmatpush2.bf16.msra.mxu0 0
    %1742 = vmatprep.subr.bf16.mxu0 0
    %1743 = vmatpush2.bf16.msra.mxu0 %v627
    %1744 = vmatprep.subr.bf16.mxu0 0
    %1745 = vmatpush2.bf16.msra.mxu0 %v512
    %1746 = vmatprep.subr.bf16.mxu0 0
    %1747 = vmatpush2.bf16.msra.mxu0 %v507
    %1748 = vmatprep.subr.bf16.mxu0 0
    %1749 = vmatpush2.bf16.msra.mxu0 %v502
    %1750 = vmatprep.subr.bf16.mxu0 0
    %1751 = vmatpush2.bf16.msra.mxu0 %v497
    %1752 = vmatprep.mubr.bf16.mxu0 %v1636
    %1753 = vmatmul.mubr.bf16.gmra.mxu0 %v1609
    %v1754 = vpop.f32.mrf.mxu0
    %v1755 = vadd.f32 %v603, %v1754
    %v1756 = vpop.f32.mrf.mxu0
    %v1757 = vpop.f32.mrf.mxu0
    %v1758 = vpop.f32.mrf.mxu0
    %1759 = vdwg.mxu0
    %v1760 = vxor.u32 %v1599, 2147483648
    %v1761 = vmul.f32 %v1760, 1.442695
    %v1762 = vpow.pop %v1761
    %v1763 = vadd.f32 %v1762, 1.0
    %v1764 = vrcp.pop %v1763
    %v1765 = vmul.f32 1.0, %v1764
    %v1766 = vtanh.pop %v1599
    %v1767 = vmul.f32 %v1765, %v1441
    %1769 = vrot.lane.b32.xlu0 %v1766, 64
    %v1770 = vpop.permute.xlu0 %1769
    %v1772 = vmul.f32 %v1765, %v1770
    %1774 = vrot.lane.b32.xlu0 %v1772, 32
    %v1775 = vpop.permute.xlu0 %1774
    %v1777 = vadd.f32 %v1767, %v1775
    %v1778 = vtanh.pop %v1777
    %1780 = vrot.lane.b32.xlu0 %v1778, 64
    %v1781 = vpop.permute.xlu0 %1780
    %v1783 = vmul.f32 %v1765, %v1781
    %v1784 = vpack.c.bf16 %v1783, %v1783
    %v1785 = vxor.u32 %v1673, 2147483648
    %v1786 = vxor.u32 %v1675, 2147483648
    %v1787 = vmul.f32 %v1785, 1.442695
    %v1788 = vpow.pop %v1787
    %v1789 = vmul.f32 %v1786, 1.442695
    %v1790 = vpow.pop %v1789
    %v1791 = vadd.f32 %v1788, 1.0
    %v1792 = vadd.f32 %v1790, 1.0
    %v1793 = vrcp.pop %v1791
    %v1794 = vmul.f32 1.0, %v1793
    %v1795 = vrcp.pop %v1792
    %v1796 = vmul.f32 1.0, %v1795
    %v1797 = vxor.u32 %v1714, 2147483648
    %v1798 = vmul.f32 %v1797, 1.442695
    %v1799 = vpow.pop %v1798
    %v1800 = vadd.f32 %v1799, 1.0
    %v1801 = vrcp.pop %v1800
    %v1802 = vmul.f32 1.0, %v1801
    %v1803 = vtanh.pop %v1714
    %v1804 = vtanh.pop %v1716
    %v1805 = vxor.u32 %v1716, 2147483648
    %v1806 = vxor.u32 %v1755, 2147483648
    %v1807 = vmul.f32 %v1805, 1.442695
    %v1808 = vpow.pop %v1807
    %v1809 = vmul.f32 %v1806, 1.442695
    %v1810 = vpow.pop %v1809
    %v1811 = vadd.f32 %v1808, 1.0
    %v1812 = vadd.f32 %v1810, 1.0
    %v1813 = vrcp.pop %v1811
    %v1814 = vmul.f32 1.0, %v1813
    %v1815 = vrcp.pop %v1812
    %v1816 = vmul.f32 1.0, %v1815
    %v1817 = vmul.f32 %v1796, %v1503
    %v1818 = vmul.f32 %v1802, %v1504
    %1821 = vrot.lane.b32.xlu0 %v1803, 64
    %v1822 = vpop.permute.xlu0 %1821
    %1823 = vrot.lane.b32.xlu0 %v1804, 64
    %v1824 = vpop.permute.xlu0 %1823
    %v1825 = vsel %vm149, %v1822, %v1824
    %v1828 = vmul.f32 %v1794, %v1825
    %v1829 = vmul.f32 %v1796, %v1824
    %1832 = vrot.lane.b32.xlu0 %v1828, 32
    %v1833 = vpop.permute.xlu0 %1832
    %1834 = vrot.lane.b32.xlu0 %v1829, 32
    %v1835 = vpop.permute.xlu0 %1834
    %v1836 = vsel %vm146, %v1833, %v1835
    %v1839 = vadd.f32 %v1817, %v1833
    %v1840 = vadd.f32 %v1818, %v1836
    %v1841 = vtanh.pop %v1839
    %v1842 = vtanh.pop %v1840
    %1845 = vrot.lane.b32.xlu0 %v1841, 64
    %v1846 = vpop.permute.xlu0 %1845
    %1847 = vrot.lane.b32.xlu0 %v1842, 64
    %v1848 = vpop.permute.xlu0 %1847
    %v1849 = vsel %vm149, %v1846, %v1848
    %v1852 = vmul.f32 %v1814, %v1846
    %v1853 = vmul.f32 %v1816, %v1849
    %v1854 = vpack.c.bf16 %v1852, %v1852
    %v1855 = vpack.c.bf16 %v1853, %v1853
    %s1856 = scalar_lea.vmem %s0, 16
    %v1857 = vld [vmem:[%s1856] sm:$0xf]
    %s1858 = scalar_lea.vmem %s1, 4
    %v1859 = vld [vmem:[%s1858] sm:$0x1]
    %v1860 = vunpack.c.l.bf16 %v1784
    %v1861 = vadd.f32 %v1860, 0.0
    %v1863 = vrot.slane %v1860, 2
    %v1865 = vadd.f32 %v1861, %v1863
    %v1866 = vrot.slane %v1860, 4
    %v1868 = vadd.f32 %v1865, %v1866
    %v1869 = vrot.slane %v1860, 6
    %v1871 = vadd.f32 %v1868, %v1869
    %v1872 = vmul.f32 %v1871, 0.25
    %v1873 = vpack.c.bf16 %v1872, %v1872
    %v1875 = vrot.slane %v1855, 7
    %v1876 = vrot.slane %v1855, 6
    %v1877 = vrot.slane %v1855, 5
    %v1880 = vsel %vm132, %v1855, %v1875
    %v1882 = vsel %vm134, %v1880, %v1876
    %v1884 = vsel %vm136, %v1882, %v1877
    %1886 = vrot.lane.b32.xlu0 %v1784, 32
    %v1887 = vpop.permute.xlu0 %1886
    %v1889 = vunpack.c.l.b16 %v1857
    %v1890 = vpack.c.b16 %v1889, %v1889
    %1891 = vrot.lane.b32.xlu0 %v1890, 64
    %v1892 = vpop.permute.xlu0 %1891
    %v1894 = vsel %vm146, %v1887, %v1884
    %v1896 = vsel %vm149, %v1894, %v1892
    %v1897 = vsel %vm152, %v1896, 1065369472
    %v1898 = vsel %vm184, %v1897, 0
    %1900 = vmatprep.subr.bf16.mxu0 0
    %1901 = vmatpush1.bf16.msra.mxu0 0
    %1902 = vmatprep.subr.bf16.mxu0 0
    %1903 = vmatpush1.bf16.msra.mxu0 0
    %1904 = vmatprep.subr.bf16.mxu0 0
    %1905 = vmatpush1.bf16.msra.mxu0 0
    %1906 = vmatprep.subr.bf16.mxu0 0
    %1907 = vmatpush1.bf16.msra.mxu0 %v192
    %1908 = vmatprep.subr.bf16.mxu0 0
    %1909 = vmatpush1.bf16.msra.mxu0 %v178
    %1910 = vmatprep.subr.bf16.mxu0 0
    %1911 = vmatpush1.bf16.msra.mxu0 %v177
    %1912 = vmatprep.subr.bf16.mxu0 0
    %1913 = vmatpush1.bf16.msra.mxu0 %v176
    %1914 = vmatprep.subr.bf16.mxu0 0
    %1915 = vmatpush1.bf16.msra.mxu0 %v175
    %1916 = vmatprep.subr.bf16.mxu0 0
    %1917 = vmatpush2.bf16.msra.mxu0 0
    %1918 = vmatprep.subr.bf16.mxu0 0
    %1919 = vmatpush2.bf16.msra.mxu0 0
    %1920 = vmatprep.subr.bf16.mxu0 0
    %1921 = vmatpush2.bf16.msra.mxu0 0
    %1922 = vmatprep.subr.bf16.mxu0 0
    %1923 = vmatpush2.bf16.msra.mxu0 0
    %1924 = vmatprep.subr.bf16.mxu0 0
    %1925 = vmatpush2.bf16.msra.mxu0 0
    %1926 = vmatprep.subr.bf16.mxu0 0
    %1927 = vmatpush2.bf16.msra.mxu0 0
    %1928 = vmatprep.subr.bf16.mxu0 0
    %1929 = vmatpush2.bf16.msra.mxu0 0
    %1930 = vmatprep.subr.bf16.mxu0 0
    %1931 = vmatpush2.bf16.msra.mxu0 0
    %1932 = vmatprep.mubr.bf16.mxu0 0
    %1933 = vmatmul.mubr.bf16.gmra.mxu0 %v1898
    %v1934 = vpop.f32.mrf.mxu0
    %v1935 = vadd.f32 0.0, %v1934
    %v1936 = vpop.f32.mrf.mxu0
    %v1937 = vpop.f32.mrf.mxu0
    %v1938 = vpop.f32.mrf.mxu0
    %1939 = vdwg.mxu0
    %1941 = vrot.lane.b32.xlu0 %v1854, 32
    %v1942 = vpop.permute.xlu0 %1941
    %1943 = vrot.lane.b32.xlu0 %v1855, 32
    %v1944 = vpop.permute.xlu0 %1943
    %v1945 = vsel %vm936, %v1942, %v1944
    %1948 = vrot.lane.b32.xlu0 %v1873, 64
    %v1949 = vpop.permute.xlu0 %1948
    %v1952 = vunpack.c.l.s4 1966171168
    %v1953 = vunpack.c.0.s8 %v1952
    %v1954 = vlaneseq
    %v1955 = vshrl.u32 %v1954, 7
    %v1956 = vsub.s32 %v1953, %v1955
    %v1957 = vrot.slane %v1859, %v1956
    %v1959 = vunpack.c.l.s4 1966171168
    %v1960 = vunpack.c.0.s8 %v1959
    %v1961 = vlaneseq
    %v1962 = vshrl.u32 %v1961, 7
    %v1963 = vsub.s32 %v1960, %v1962
    %v1964 = vrot.slane %v1957, %v1963
    %1965 = vrot.lane.b32.xlu0 %v1964, 64
    %v1966 = vpop.permute.xlu0 %1965
    %v1969 = vsel %vm146, %v1944, %v1949
    %v1971 = vsel %vm149, %v1969, %v1966
    %v1972 = vsel %vm609, %v1971, 0
    %1974 = vmatprep.subr.bf16.mxu0 %v489
    %1975 = vmatpush1.bf16.msra.mxu0 %v488
    %1976 = vmatprep.subr.bf16.mxu0 %v484
    %1977 = vmatpush1.bf16.msra.mxu0 %v483
    %1978 = vmatprep.subr.bf16.mxu0 %v479
    %1979 = vmatpush1.bf16.msra.mxu0 %v478
    %1980 = vmatprep.subr.bf16.mxu0 %v474
    %1981 = vmatpush1.bf16.msra.mxu0 %v473
    %1982 = vmatprep.subr.bf16.mxu0 %v469
    %1983 = vmatpush1.bf16.msra.mxu0 %v468
    %1984 = vmatprep.subr.bf16.mxu0 %v464
    %1985 = vmatpush1.bf16.msra.mxu0 %v463
    %1986 = vmatprep.subr.bf16.mxu0 %v459
    %1987 = vmatpush1.bf16.msra.mxu0 %v458
    %1988 = vmatprep.subr.bf16.mxu0 %v454
    %1989 = vmatpush1.bf16.msra.mxu0 %v453
    %1990 = vmatprep.subr.bf16.mxu0 0
    %1991 = vmatpush2.bf16.msra.mxu0 0
    %1992 = vmatprep.subr.bf16.mxu0 0
    %1993 = vmatpush2.bf16.msra.mxu0 0
    %1994 = vmatprep.subr.bf16.mxu0 0
    %1995 = vmatpush2.bf16.msra.mxu0 0
    %1996 = vmatprep.subr.bf16.mxu0 %v618
    %1997 = vmatpush2.bf16.msra.mxu0 %v615
    %1998 = vmatprep.subr.bf16.mxu0 %v509
    %1999 = vmatpush2.bf16.msra.mxu0 %v508
    %2000 = vmatprep.subr.bf16.mxu0 %v504
    %2001 = vmatpush2.bf16.msra.mxu0 %v503
    %2002 = vmatprep.subr.bf16.mxu0 %v499
    %2003 = vmatpush2.bf16.msra.mxu0 %v498
    %2004 = vmatprep.subr.bf16.mxu0 %v494
    %2005 = vmatpush2.bf16.msra.mxu0 %v493
    %2006 = vmatprep.mubr.bf16.mxu0 %v1972
    %2007 = vmatmul.mubr.bf16.gmra.mxu0 %v1945
    %v2008 = vpop.f32.mrf.mxu0
    %v2009 = vadd.f32 %v587, %v2008
    %v2010 = vpop.f32.mrf.mxu0
    %v2011 = vadd.f32 %v595, %v2010
    %v2012 = vpop.f32.mrf.mxu0
    %v2013 = vpop.f32.mrf.mxu0
    %2014 = vdwg.mxu0
    %2015 = vmatprep.subr.bf16.mxu0 %v491
    %2016 = vmatpush1.bf16.msra.mxu0 %v490
    %2017 = vmatprep.subr.bf16.mxu0 %v486
    %2018 = vmatpush1.bf16.msra.mxu0 %v485
    %2019 = vmatprep.subr.bf16.mxu0 %v481
    %2020 = vmatpush1.bf16.msra.mxu0 %v480
    %2021 = vmatprep.subr.bf16.mxu0 %v476
    %2022 = vmatpush1.bf16.msra.mxu0 %v475
    %2023 = vmatprep.subr.bf16.mxu0 %v471
    %2024 = vmatpush1.bf16.msra.mxu0 %v470
    %2025 = vmatprep.subr.bf16.mxu0 %v466
    %2026 = vmatpush1.bf16.msra.mxu0 %v465
    %2027 = vmatprep.subr.bf16.mxu0 %v461
    %2028 = vmatpush1.bf16.msra.mxu0 %v460
    %2029 = vmatprep.subr.bf16.mxu0 %v456
    %2030 = vmatpush1.bf16.msra.mxu0 %v455
    %2031 = vmatprep.subr.bf16.mxu0 0
    %2032 = vmatpush2.bf16.msra.mxu0 0
    %2033 = vmatprep.subr.bf16.mxu0 0
    %2034 = vmatpush2.bf16.msra.mxu0 0
    %2035 = vmatprep.subr.bf16.mxu0 0
    %2036 = vmatpush2.bf16.msra.mxu0 0
    %2037 = vmatprep.subr.bf16.mxu0 %v624
    %2038 = vmatpush2.bf16.msra.mxu0 %v621
    %2039 = vmatprep.subr.bf16.mxu0 %v511
    %2040 = vmatpush2.bf16.msra.mxu0 %v510
    %2041 = vmatprep.subr.bf16.mxu0 %v506
    %2042 = vmatpush2.bf16.msra.mxu0 %v505
    %2043 = vmatprep.subr.bf16.mxu0 %v501
    %2044 = vmatpush2.bf16.msra.mxu0 %v500
    %2045 = vmatprep.subr.bf16.mxu0 %v496
    %2046 = vmatpush2.bf16.msra.mxu0 %v495
    %2047 = vmatprep.mubr.bf16.mxu0 %v1972
    %2048 = vmatmul.mubr.bf16.gmra.mxu0 %v1945
    %v2049 = vpop.f32.mrf.mxu0
    %v2050 = vadd.f32 %v594, %v2049
    %v2051 = vpop.f32.mrf.mxu0
    %v2052 = vadd.f32 %v596, %v2051
    %v2053 = vpop.f32.mrf.mxu0
    %v2054 = vpop.f32.mrf.mxu0
    %2055 = vdwg.mxu0
    %2056 = vmatprep.subr.bf16.mxu0 0
    %2057 = vmatpush1.bf16.msra.mxu0 %v492
    %2058 = vmatprep.subr.bf16.mxu0 0
    %2059 = vmatpush1.bf16.msra.mxu0 %v487
    %2060 = vmatprep.subr.bf16.mxu0 0
    %2061 = vmatpush1.bf16.msra.mxu0 %v482
    %2062 = vmatprep.subr.bf16.mxu0 0
    %2063 = vmatpush1.bf16.msra.mxu0 %v477
    %2064 = vmatprep.subr.bf16.mxu0 0
    %2065 = vmatpush1.bf16.msra.mxu0 %v472
    %2066 = vmatprep.subr.bf16.mxu0 0
    %2067 = vmatpush1.bf16.msra.mxu0 %v467
    %2068 = vmatprep.subr.bf16.mxu0 0
    %2069 = vmatpush1.bf16.msra.mxu0 %v462
    %2070 = vmatprep.subr.bf16.mxu0 0
    %2071 = vmatpush1.bf16.msra.mxu0 %v457
    %2072 = vmatprep.subr.bf16.mxu0 0
    %2073 = vmatpush2.bf16.msra.mxu0 0
    %2074 = vmatprep.subr.bf16.mxu0 0
    %2075 = vmatpush2.bf16.msra.mxu0 0
    %2076 = vmatprep.subr.bf16.mxu0 0
    %2077 = vmatpush2.bf16.msra.mxu0 0
    %2078 = vmatprep.subr.bf16.mxu0 0
    %2079 = vmatpush2.bf16.msra.mxu0 %v627
    %2080 = vmatprep.subr.bf16.mxu0 0
    %2081 = vmatpush2.bf16.msra.mxu0 %v512
    %2082 = vmatprep.subr.bf16.mxu0 0
    %2083 = vmatpush2.bf16.msra.mxu0 %v507
    %2084 = vmatprep.subr.bf16.mxu0 0
    %2085 = vmatpush2.bf16.msra.mxu0 %v502
    %2086 = vmatprep.subr.bf16.mxu0 0
    %2087 = vmatpush2.bf16.msra.mxu0 %v497
    %2088 = vmatprep.mubr.bf16.mxu0 %v1972
    %2089 = vmatmul.mubr.bf16.gmra.mxu0 %v1945
    %v2090 = vpop.f32.mrf.mxu0
    %v2091 = vadd.f32 %v603, %v2090
    %v2092 = vpop.f32.mrf.mxu0
    %v2093 = vpop.f32.mrf.mxu0
    %v2094 = vpop.f32.mrf.mxu0
    %2095 = vdwg.mxu0
    %v2096 = vxor.u32 %v1935, 2147483648
    %v2097 = vmul.f32 %v2096, 1.442695
    %v2098 = vpow.pop %v2097
    %v2099 = vadd.f32 %v2098, 1.0
    %v2100 = vrcp.pop %v2099
    %v2101 = vmul.f32 1.0, %v2100
    %v2102 = vtanh.pop %v1935
    %v2103 = vmul.f32 %v2101, %v1777
    %2105 = vrot.lane.b32.xlu0 %v2102, 64
    %v2106 = vpop.permute.xlu0 %2105
    %v2108 = vmul.f32 %v2101, %v2106
    %2110 = vrot.lane.b32.xlu0 %v2108, 32
    %v2111 = vpop.permute.xlu0 %2110
    %v2113 = vadd.f32 %v2103, %v2111
    %v2114 = vtanh.pop %v2113
    %2116 = vrot.lane.b32.xlu0 %v2114, 64
    %v2117 = vpop.permute.xlu0 %2116
    %v2119 = vmul.f32 %v2101, %v2117
    %v2120 = vpack.c.bf16 %v2119, %v2119
    %v2121 = vxor.u32 %v2009, 2147483648
    %v2122 = vxor.u32 %v2011, 2147483648
    %v2123 = vmul.f32 %v2121, 1.442695
    %v2124 = vpow.pop %v2123
    %v2125 = vmul.f32 %v2122, 1.442695
    %v2126 = vpow.pop %v2125
    %v2127 = vadd.f32 %v2124, 1.0
    %v2128 = vadd.f32 %v2126, 1.0
    %v2129 = vrcp.pop %v2127
    %v2130 = vmul.f32 1.0, %v2129
    %v2131 = vrcp.pop %v2128
    %v2132 = vmul.f32 1.0, %v2131
    %v2133 = vxor.u32 %v2050, 2147483648
    %v2134 = vmul.f32 %v2133, 1.442695
    %v2135 = vpow.pop %v2134
    %v2136 = vadd.f32 %v2135, 1.0
    %v2137 = vrcp.pop %v2136
    %v2138 = vmul.f32 1.0, %v2137
    %v2139 = vtanh.pop %v2050
    %v2140 = vtanh.pop %v2052
    %v2141 = vxor.u32 %v2052, 2147483648
    %v2142 = vxor.u32 %v2091, 2147483648
    %v2143 = vmul.f32 %v2141, 1.442695
    %v2144 = vpow.pop %v2143
    %v2145 = vmul.f32 %v2142, 1.442695
    %v2146 = vpow.pop %v2145
    %v2147 = vadd.f32 %v2144, 1.0
    %v2148 = vadd.f32 %v2146, 1.0
    %v2149 = vrcp.pop %v2147
    %v2150 = vmul.f32 1.0, %v2149
    %v2151 = vrcp.pop %v2148
    %v2152 = vmul.f32 1.0, %v2151
    %v2153 = vmul.f32 %v2132, %v1839
    %v2154 = vmul.f32 %v2138, %v1840
    %2157 = vrot.lane.b32.xlu0 %v2139, 64
    %v2158 = vpop.permute.xlu0 %2157
    %2159 = vrot.lane.b32.xlu0 %v2140, 64
    %v2160 = vpop.permute.xlu0 %2159
    %v2161 = vsel %vm149, %v2158, %v2160
    %v2164 = vmul.f32 %v2130, %v2161
    %v2165 = vmul.f32 %v2132, %v2160
    %2168 = vrot.lane.b32.xlu0 %v2164, 32
    %v2169 = vpop.permute.xlu0 %2168
    %2170 = vrot.lane.b32.xlu0 %v2165, 32
    %v2171 = vpop.permute.xlu0 %2170
    %v2172 = vsel %vm146, %v2169, %v2171
    %v2175 = vadd.f32 %v2153, %v2169
    %v2176 = vadd.f32 %v2154, %v2172
    %v2177 = vtanh.pop %v2175
    %v2178 = vtanh.pop %v2176
    %2181 = vrot.lane.b32.xlu0 %v2177, 64
    %v2182 = vpop.permute.xlu0 %2181
    %2183 = vrot.lane.b32.xlu0 %v2178, 64
    %v2184 = vpop.permute.xlu0 %2183
    %v2185 = vsel %vm149, %v2182, %v2184
    %v2188 = vmul.f32 %v2150, %v2182
    %v2189 = vmul.f32 %v2152, %v2185
    %v2190 = vpack.c.bf16 %v2188, %v2188
    %v2191 = vpack.c.bf16 %v2189, %v2189
    %s2192 = scalar_lea.vmem %s0, 20
    %v2193 = vld [vmem:[%s2192] sm:$0xf]
    %s2194 = scalar_lea.vmem %s1, 5
    %v2195 = vld [vmem:[%s2194] sm:$0x1]
    %v2196 = vunpack.c.l.bf16 %v2120
    %v2197 = vadd.f32 %v2196, 0.0
    %v2199 = vrot.slane %v2196, 2
    %v2201 = vadd.f32 %v2197, %v2199
    %v2202 = vrot.slane %v2196, 4
    %v2204 = vadd.f32 %v2201, %v2202
    %v2205 = vrot.slane %v2196, 6
    %v2207 = vadd.f32 %v2204, %v2205
    %v2208 = vmul.f32 %v2207, 0.25
    %v2209 = vpack.c.bf16 %v2208, %v2208
    %v2211 = vrot.slane %v2191, 7
    %v2212 = vrot.slane %v2191, 6
    %v2213 = vrot.slane %v2191, 5
    %v2216 = vsel %vm132, %v2191, %v2211
    %v2218 = vsel %vm134, %v2216, %v2212
    %v2220 = vsel %vm136, %v2218, %v2213
    %2222 = vrot.lane.b32.xlu0 %v2120, 32
    %v2223 = vpop.permute.xlu0 %2222
    %v2225 = vunpack.c.l.b16 %v2193
    %v2226 = vpack.c.b16 %v2225, %v2225
    %2227 = vrot.lane.b32.xlu0 %v2226, 64
    %v2228 = vpop.permute.xlu0 %2227
    %v2230 = vsel %vm146, %v2223, %v2220
    %v2232 = vsel %vm149, %v2230, %v2228
    %v2233 = vsel %vm152, %v2232, 1065369472
    %v2234 = vsel %vm184, %v2233, 0
    %2236 = vmatprep.subr.bf16.mxu0 0
    %2237 = vmatpush1.bf16.msra.mxu0 0
    %2238 = vmatprep.subr.bf16.mxu0 0
    %2239 = vmatpush1.bf16.msra.mxu0 0
    %2240 = vmatprep.subr.bf16.mxu0 0
    %2241 = vmatpush1.bf16.msra.mxu0 0
    %2242 = vmatprep.subr.bf16.mxu0 0
    %2243 = vmatpush1.bf16.msra.mxu0 %v192
    %2244 = vmatprep.subr.bf16.mxu0 0
    %2245 = vmatpush1.bf16.msra.mxu0 %v178
    %2246 = vmatprep.subr.bf16.mxu0 0
    %2247 = vmatpush1.bf16.msra.mxu0 %v177
    %2248 = vmatprep.subr.bf16.mxu0 0
    %2249 = vmatpush1.bf16.msra.mxu0 %v176
    %2250 = vmatprep.subr.bf16.mxu0 0
    %2251 = vmatpush1.bf16.msra.mxu0 %v175
    %2252 = vmatprep.subr.bf16.mxu0 0
    %2253 = vmatpush2.bf16.msra.mxu0 0
    %2254 = vmatprep.subr.bf16.mxu0 0
    %2255 = vmatpush2.bf16.msra.mxu0 0
    %2256 = vmatprep.subr.bf16.mxu0 0
    %2257 = vmatpush2.bf16.msra.mxu0 0
    %2258 = vmatprep.subr.bf16.mxu0 0
    %2259 = vmatpush2.bf16.msra.mxu0 0
    %2260 = vmatprep.subr.bf16.mxu0 0
    %2261 = vmatpush2.bf16.msra.mxu0 0
    %2262 = vmatprep.subr.bf16.mxu0 0
    %2263 = vmatpush2.bf16.msra.mxu0 0
    %2264 = vmatprep.subr.bf16.mxu0 0
    %2265 = vmatpush2.bf16.msra.mxu0 0
    %2266 = vmatprep.subr.bf16.mxu0 0
    %2267 = vmatpush2.bf16.msra.mxu0 0
    %2268 = vmatprep.mubr.bf16.mxu0 0
    %2269 = vmatmul.mubr.bf16.gmra.mxu0 %v2234
    %v2270 = vpop.f32.mrf.mxu0
    %v2271 = vadd.f32 0.0, %v2270
    %v2272 = vpop.f32.mrf.mxu0
    %v2273 = vpop.f32.mrf.mxu0
    %v2274 = vpop.f32.mrf.mxu0
    %2275 = vdwg.mxu0
    %2277 = vrot.lane.b32.xlu0 %v2190, 32
    %v2278 = vpop.permute.xlu0 %2277
    %2279 = vrot.lane.b32.xlu0 %v2191, 32
    %v2280 = vpop.permute.xlu0 %2279
    %v2281 = vsel %vm936, %v2278, %v2280
    %2284 = vrot.lane.b32.xlu0 %v2209, 64
    %v2285 = vpop.permute.xlu0 %2284
    %v2288 = vunpack.c.l.s4 1966171168
    %v2289 = vunpack.c.0.s8 %v2288
    %v2290 = vlaneseq
    %v2291 = vshrl.u32 %v2290, 7
    %v2292 = vsub.s32 %v2289, %v2291
    %v2293 = vrot.slane %v2195, %v2292
    %v2295 = vunpack.c.l.s4 1966171168
    %v2296 = vunpack.c.0.s8 %v2295
    %v2297 = vlaneseq
    %v2298 = vshrl.u32 %v2297, 7
    %v2299 = vsub.s32 %v2296, %v2298
    %v2300 = vrot.slane %v2293, %v2299
    %2301 = vrot.lane.b32.xlu0 %v2300, 64
    %v2302 = vpop.permute.xlu0 %2301
    %v2305 = vsel %vm146, %v2280, %v2285
    %v2307 = vsel %vm149, %v2305, %v2302
    %v2308 = vsel %vm609, %v2307, 0
    %2310 = vmatprep.subr.bf16.mxu0 %v489
    %2311 = vmatpush1.bf16.msra.mxu0 %v488
    %2312 = vmatprep.subr.bf16.mxu0 %v484
    %2313 = vmatpush1.bf16.msra.mxu0 %v483
    %2314 = vmatprep.subr.bf16.mxu0 %v479
    %2315 = vmatpush1.bf16.msra.mxu0 %v478
    %2316 = vmatprep.subr.bf16.mxu0 %v474
    %2317 = vmatpush1.bf16.msra.mxu0 %v473
    %2318 = vmatprep.subr.bf16.mxu0 %v469
    %2319 = vmatpush1.bf16.msra.mxu0 %v468
    %2320 = vmatprep.subr.bf16.mxu0 %v464
    %2321 = vmatpush1.bf16.msra.mxu0 %v463
    %2322 = vmatprep.subr.bf16.mxu0 %v459
    %2323 = vmatpush1.bf16.msra.mxu0 %v458
    %2324 = vmatprep.subr.bf16.mxu0 %v454
    %2325 = vmatpush1.bf16.msra.mxu0 %v453
    %2326 = vmatprep.subr.bf16.mxu0 0
    %2327 = vmatpush2.bf16.msra.mxu0 0
    %2328 = vmatprep.subr.bf16.mxu0 0
    %2329 = vmatpush2.bf16.msra.mxu0 0
    %2330 = vmatprep.subr.bf16.mxu0 0
    %2331 = vmatpush2.bf16.msra.mxu0 0
    %2332 = vmatprep.subr.bf16.mxu0 %v618
    %2333 = vmatpush2.bf16.msra.mxu0 %v615
    %2334 = vmatprep.subr.bf16.mxu0 %v509
    %2335 = vmatpush2.bf16.msra.mxu0 %v508
    %2336 = vmatprep.subr.bf16.mxu0 %v504
    %2337 = vmatpush2.bf16.msra.mxu0 %v503
    %2338 = vmatprep.subr.bf16.mxu0 %v499
    %2339 = vmatpush2.bf16.msra.mxu0 %v498
    %2340 = vmatprep.subr.bf16.mxu0 %v494
    %2341 = vmatpush2.bf16.msra.mxu0 %v493
    %2342 = vmatprep.mubr.bf16.mxu0 %v2308
    %2343 = vmatmul.mubr.bf16.gmra.mxu0 %v2281
    %v2344 = vpop.f32.mrf.mxu0
    %v2345 = vadd.f32 %v587, %v2344
    %v2346 = vpop.f32.mrf.mxu0
    %v2347 = vadd.f32 %v595, %v2346
    %v2348 = vpop.f32.mrf.mxu0
    %v2349 = vpop.f32.mrf.mxu0
    %2350 = vdwg.mxu0
    %2351 = vmatprep.subr.bf16.mxu0 %v491
    %2352 = vmatpush1.bf16.msra.mxu0 %v490
    %2353 = vmatprep.subr.bf16.mxu0 %v486
    %2354 = vmatpush1.bf16.msra.mxu0 %v485
    %2355 = vmatprep.subr.bf16.mxu0 %v481
    %2356 = vmatpush1.bf16.msra.mxu0 %v480
    %2357 = vmatprep.subr.bf16.mxu0 %v476
    %2358 = vmatpush1.bf16.msra.mxu0 %v475
    %2359 = vmatprep.subr.bf16.mxu0 %v471
    %2360 = vmatpush1.bf16.msra.mxu0 %v470
    %2361 = vmatprep.subr.bf16.mxu0 %v466
    %2362 = vmatpush1.bf16.msra.mxu0 %v465
    %2363 = vmatprep.subr.bf16.mxu0 %v461
    %2364 = vmatpush1.bf16.msra.mxu0 %v460
    %2365 = vmatprep.subr.bf16.mxu0 %v456
    %2366 = vmatpush1.bf16.msra.mxu0 %v455
    %2367 = vmatprep.subr.bf16.mxu0 0
    %2368 = vmatpush2.bf16.msra.mxu0 0
    %2369 = vmatprep.subr.bf16.mxu0 0
    %2370 = vmatpush2.bf16.msra.mxu0 0
    %2371 = vmatprep.subr.bf16.mxu0 0
    %2372 = vmatpush2.bf16.msra.mxu0 0
    %2373 = vmatprep.subr.bf16.mxu0 %v624
    %2374 = vmatpush2.bf16.msra.mxu0 %v621
    %2375 = vmatprep.subr.bf16.mxu0 %v511
    %2376 = vmatpush2.bf16.msra.mxu0 %v510
    %2377 = vmatprep.subr.bf16.mxu0 %v506
    %2378 = vmatpush2.bf16.msra.mxu0 %v505
    %2379 = vmatprep.subr.bf16.mxu0 %v501
    %2380 = vmatpush2.bf16.msra.mxu0 %v500
    %2381 = vmatprep.subr.bf16.mxu0 %v496
    %2382 = vmatpush2.bf16.msra.mxu0 %v495
    %2383 = vmatprep.mubr.bf16.mxu0 %v2308
    %2384 = vmatmul.mubr.bf16.gmra.mxu0 %v2281
    %v2385 = vpop.f32.mrf.mxu0
    %v2386 = vadd.f32 %v594, %v2385
    %v2387 = vpop.f32.mrf.mxu0
    %v2388 = vadd.f32 %v596, %v2387
    %v2389 = vpop.f32.mrf.mxu0
    %v2390 = vpop.f32.mrf.mxu0
    %2391 = vdwg.mxu0
    %2392 = vmatprep.subr.bf16.mxu0 0
    %2393 = vmatpush1.bf16.msra.mxu0 %v492
    %2394 = vmatprep.subr.bf16.mxu0 0
    %2395 = vmatpush1.bf16.msra.mxu0 %v487
    %2396 = vmatprep.subr.bf16.mxu0 0
    %2397 = vmatpush1.bf16.msra.mxu0 %v482
    %2398 = vmatprep.subr.bf16.mxu0 0
    %2399 = vmatpush1.bf16.msra.mxu0 %v477
    %2400 = vmatprep.subr.bf16.mxu0 0
    %2401 = vmatpush1.bf16.msra.mxu0 %v472
    %2402 = vmatprep.subr.bf16.mxu0 0
    %2403 = vmatpush1.bf16.msra.mxu0 %v467
    %2404 = vmatprep.subr.bf16.mxu0 0
    %2405 = vmatpush1.bf16.msra.mxu0 %v462
    %2406 = vmatprep.subr.bf16.mxu0 0
    %2407 = vmatpush1.bf16.msra.mxu0 %v457
    %2408 = vmatprep.subr.bf16.mxu0 0
    %2409 = vmatpush2.bf16.msra.mxu0 0
    %2410 = vmatprep.subr.bf16.mxu0 0
    %2411 = vmatpush2.bf16.msra.mxu0 0
    %2412 = vmatprep.subr.bf16.mxu0 0
    %2413 = vmatpush2.bf16.msra.mxu0 0
    %2414 = vmatprep.subr.bf16.mxu0 0
    %2415 = vmatpush2.bf16.msra.mxu0 %v627
    %2416 = vmatprep.subr.bf16.mxu0 0
    %2417 = vmatpush2.bf16.msra.mxu0 %v512
    %2418 = vmatprep.subr.bf16.mxu0 0
    %2419 = vmatpush2.bf16.msra.mxu0 %v507
    %2420 = vmatprep.subr.bf16.mxu0 0
    %2421 = vmatpush2.bf16.msra.mxu0 %v502
    %2422 = vmatprep.subr.bf16.mxu0 0
    %2423 = vmatpush2.bf16.msra.mxu0 %v497
    %2424 = vmatprep.mubr.bf16.mxu0 %v2308
    %2425 = vmatmul.mubr.bf16.gmra.mxu0 %v2281
    %v2426 = vpop.f32.mrf.mxu0
    %v2427 = vadd.f32 %v603, %v2426
    %v2428 = vpop.f32.mrf.mxu0
    %v2429 = vpop.f32.mrf.mxu0
    %v2430 = vpop.f32.mrf.mxu0
    %2431 = vdwg.mxu0
    %v2432 = vxor.u32 %v2271, 2147483648
    %v2433 = vmul.f32 %v2432, 1.442695
    %v2434 = vpow.pop %v2433
    %v2435 = vadd.f32 %v2434, 1.0
    %v2436 = vrcp.pop %v2435
    %v2437 = vmul.f32 1.0, %v2436
    %v2438 = vtanh.pop %v2271
    %v2439 = vmul.f32 %v2437, %v2113
    %2441 = vrot.lane.b32.xlu0 %v2438, 64
    %v2442 = vpop.permute.xlu0 %2441
    %v2444 = vmul.f32 %v2437, %v2442
    %2446 = vrot.lane.b32.xlu0 %v2444, 32
    %v2447 = vpop.permute.xlu0 %2446
    %v2449 = vadd.f32 %v2439, %v2447
    %v2450 = vtanh.pop %v2449
    %2452 = vrot.lane.b32.xlu0 %v2450, 64
    %v2453 = vpop.permute.xlu0 %2452
    %v2455 = vmul.f32 %v2437, %v2453
    %v2456 = vpack.c.bf16 %v2455, %v2455
    %v2457 = vxor.u32 %v2345, 2147483648
    %v2458 = vxor.u32 %v2347, 2147483648
    %v2459 = vmul.f32 %v2457, 1.442695
    %v2460 = vpow.pop %v2459
    %v2461 = vmul.f32 %v2458, 1.442695
    %v2462 = vpow.pop %v2461
    %v2463 = vadd.f32 %v2460, 1.0
    %v2464 = vadd.f32 %v2462, 1.0
    %v2465 = vrcp.pop %v2463
    %v2466 = vmul.f32 1.0, %v2465
    %v2467 = vrcp.pop %v2464
    %v2468 = vmul.f32 1.0, %v2467
    %v2469 = vxor.u32 %v2386, 2147483648
    %v2470 = vmul.f32 %v2469, 1.442695
    %v2471 = vpow.pop %v2470
    %v2472 = vadd.f32 %v2471, 1.0
    %v2473 = vrcp.pop %v2472
    %v2474 = vmul.f32 1.0, %v2473
    %v2475 = vtanh.pop %v2386
    %v2476 = vtanh.pop %v2388
    %v2477 = vxor.u32 %v2388, 2147483648
    %v2478 = vxor.u32 %v2427, 2147483648
    %v2479 = vmul.f32 %v2477, 1.442695
    %v2480 = vpow.pop %v2479
    %v2481 = vmul.f32 %v2478, 1.442695
    %v2482 = vpow.pop %v2481
    %v2483 = vadd.f32 %v2480, 1.0
    %v2484 = vadd.f32 %v2482, 1.0
    %v2485 = vrcp.pop %v2483
    %v2486 = vmul.f32 1.0, %v2485
    %v2487 = vrcp.pop %v2484
    %v2488 = vmul.f32 1.0, %v2487
    %v2489 = vmul.f32 %v2468, %v2175
    %v2490 = vmul.f32 %v2474, %v2176
    %2493 = vrot.lane.b32.xlu0 %v2475, 64
    %v2494 = vpop.permute.xlu0 %2493
    %2495 = vrot.lane.b32.xlu0 %v2476, 64
    %v2496 = vpop.permute.xlu0 %2495
    %v2497 = vsel %vm149, %v2494, %v2496
    %v2500 = vmul.f32 %v2466, %v2497
    %v2501 = vmul.f32 %v2468, %v2496
    %2504 = vrot.lane.b32.xlu0 %v2500, 32
    %v2505 = vpop.permute.xlu0 %2504
    %2506 = vrot.lane.b32.xlu0 %v2501, 32
    %v2507 = vpop.permute.xlu0 %2506
    %v2508 = vsel %vm146, %v2505, %v2507
    %v2511 = vadd.f32 %v2489, %v2505
    %v2512 = vadd.f32 %v2490, %v2508
    %v2513 = vtanh.pop %v2511
    %v2514 = vtanh.pop %v2512
    %2517 = vrot.lane.b32.xlu0 %v2513, 64
    %v2518 = vpop.permute.xlu0 %2517
    %2519 = vrot.lane.b32.xlu0 %v2514, 64
    %v2520 = vpop.permute.xlu0 %2519
    %v2521 = vsel %vm149, %v2518, %v2520
    %v2524 = vmul.f32 %v2486, %v2518
    %v2525 = vmul.f32 %v2488, %v2521
    %v2526 = vpack.c.bf16 %v2524, %v2524
    %v2527 = vpack.c.bf16 %v2525, %v2525
    %s2528 = scalar_lea.vmem %s0, 24
    %v2529 = vld [vmem:[%s2528] sm:$0xf]
    %s2530 = scalar_lea.vmem %s1, 6
    %v2531 = vld [vmem:[%s2530] sm:$0x1]
    %v2532 = vunpack.c.l.bf16 %v2456
    %v2533 = vadd.f32 %v2532, 0.0
    %v2535 = vrot.slane %v2532, 2
    %v2537 = vadd.f32 %v2533, %v2535
    %v2538 = vrot.slane %v2532, 4
    %v2540 = vadd.f32 %v2537, %v2538
    %v2541 = vrot.slane %v2532, 6
    %v2543 = vadd.f32 %v2540, %v2541
    %v2544 = vmul.f32 %v2543, 0.25
    %v2545 = vpack.c.bf16 %v2544, %v2544
    %v2547 = vrot.slane %v2527, 7
    %v2548 = vrot.slane %v2527, 6
    %v2549 = vrot.slane %v2527, 5
    %v2552 = vsel %vm132, %v2527, %v2547
    %v2554 = vsel %vm134, %v2552, %v2548
    %v2556 = vsel %vm136, %v2554, %v2549
    %2558 = vrot.lane.b32.xlu0 %v2456, 32
    %v2559 = vpop.permute.xlu0 %2558
    %v2561 = vunpack.c.l.b16 %v2529
    %v2562 = vpack.c.b16 %v2561, %v2561
    %2563 = vrot.lane.b32.xlu0 %v2562, 64
    %v2564 = vpop.permute.xlu0 %2563
    %v2566 = vsel %vm146, %v2559, %v2556
    %v2568 = vsel %vm149, %v2566, %v2564
    %v2569 = vsel %vm152, %v2568, 1065369472
    %v2570 = vsel %vm184, %v2569, 0
    %2572 = vmatprep.subr.bf16.mxu0 0
    %2573 = vmatpush1.bf16.msra.mxu0 0
    %2574 = vmatprep.subr.bf16.mxu0 0
    %2575 = vmatpush1.bf16.msra.mxu0 0
    %2576 = vmatprep.subr.bf16.mxu0 0
    %2577 = vmatpush1.bf16.msra.mxu0 0
    %2578 = vmatprep.subr.bf16.mxu0 0
    %2579 = vmatpush1.bf16.msra.mxu0 %v192
    %2580 = vmatprep.subr.bf16.mxu0 0
    %2581 = vmatpush1.bf16.msra.mxu0 %v178
    %2582 = vmatprep.subr.bf16.mxu0 0
    %2583 = vmatpush1.bf16.msra.mxu0 %v177
    %2584 = vmatprep.subr.bf16.mxu0 0
    %2585 = vmatpush1.bf16.msra.mxu0 %v176
    %2586 = vmatprep.subr.bf16.mxu0 0
    %2587 = vmatpush1.bf16.msra.mxu0 %v175
    %2588 = vmatprep.subr.bf16.mxu0 0
    %2589 = vmatpush2.bf16.msra.mxu0 0
    %2590 = vmatprep.subr.bf16.mxu0 0
    %2591 = vmatpush2.bf16.msra.mxu0 0
    %2592 = vmatprep.subr.bf16.mxu0 0
    %2593 = vmatpush2.bf16.msra.mxu0 0
    %2594 = vmatprep.subr.bf16.mxu0 0
    %2595 = vmatpush2.bf16.msra.mxu0 0
    %2596 = vmatprep.subr.bf16.mxu0 0
    %2597 = vmatpush2.bf16.msra.mxu0 0
    %2598 = vmatprep.subr.bf16.mxu0 0
    %2599 = vmatpush2.bf16.msra.mxu0 0
    %2600 = vmatprep.subr.bf16.mxu0 0
    %2601 = vmatpush2.bf16.msra.mxu0 0
    %2602 = vmatprep.subr.bf16.mxu0 0
    %2603 = vmatpush2.bf16.msra.mxu0 0
    %2604 = vmatprep.mubr.bf16.mxu0 0
    %2605 = vmatmul.mubr.bf16.gmra.mxu0 %v2570
    %v2606 = vpop.f32.mrf.mxu0
    %v2607 = vadd.f32 0.0, %v2606
    %v2608 = vpop.f32.mrf.mxu0
    %v2609 = vpop.f32.mrf.mxu0
    %v2610 = vpop.f32.mrf.mxu0
    %2611 = vdwg.mxu0
    %2613 = vrot.lane.b32.xlu0 %v2526, 32
    %v2614 = vpop.permute.xlu0 %2613
    %2615 = vrot.lane.b32.xlu0 %v2527, 32
    %v2616 = vpop.permute.xlu0 %2615
    %v2617 = vsel %vm936, %v2614, %v2616
    %2620 = vrot.lane.b32.xlu0 %v2545, 64
    %v2621 = vpop.permute.xlu0 %2620
    %v2624 = vunpack.c.l.s4 1966171168
    %v2625 = vunpack.c.0.s8 %v2624
    %v2626 = vlaneseq
    %v2627 = vshrl.u32 %v2626, 7
    %v2628 = vsub.s32 %v2625, %v2627
    %v2629 = vrot.slane %v2531, %v2628
    %v2631 = vunpack.c.l.s4 1966171168
    %v2632 = vunpack.c.0.s8 %v2631
    %v2633 = vlaneseq
    %v2634 = vshrl.u32 %v2633, 7
    %v2635 = vsub.s32 %v2632, %v2634
    %v2636 = vrot.slane %v2629, %v2635
    %2637 = vrot.lane.b32.xlu0 %v2636, 64
    %v2638 = vpop.permute.xlu0 %2637
    %v2641 = vsel %vm146, %v2616, %v2621
    %v2643 = vsel %vm149, %v2641, %v2638
    %v2644 = vsel %vm609, %v2643, 0
    %2646 = vmatprep.subr.bf16.mxu0 %v489
    %2647 = vmatpush1.bf16.msra.mxu0 %v488
    %2648 = vmatprep.subr.bf16.mxu0 %v484
    %2649 = vmatpush1.bf16.msra.mxu0 %v483
    %2650 = vmatprep.subr.bf16.mxu0 %v479
    %2651 = vmatpush1.bf16.msra.mxu0 %v478
    %2652 = vmatprep.subr.bf16.mxu0 %v474
    %2653 = vmatpush1.bf16.msra.mxu0 %v473
    %2654 = vmatprep.subr.bf16.mxu0 %v469
    %2655 = vmatpush1.bf16.msra.mxu0 %v468
    %2656 = vmatprep.subr.bf16.mxu0 %v464
    %2657 = vmatpush1.bf16.msra.mxu0 %v463
    %2658 = vmatprep.subr.bf16.mxu0 %v459
    %2659 = vmatpush1.bf16.msra.mxu0 %v458
    %2660 = vmatprep.subr.bf16.mxu0 %v454
    %2661 = vmatpush1.bf16.msra.mxu0 %v453
    %2662 = vmatprep.subr.bf16.mxu0 0
    %2663 = vmatpush2.bf16.msra.mxu0 0
    %2664 = vmatprep.subr.bf16.mxu0 0
    %2665 = vmatpush2.bf16.msra.mxu0 0
    %2666 = vmatprep.subr.bf16.mxu0 0
    %2667 = vmatpush2.bf16.msra.mxu0 0
    %2668 = vmatprep.subr.bf16.mxu0 %v618
    %2669 = vmatpush2.bf16.msra.mxu0 %v615
    %2670 = vmatprep.subr.bf16.mxu0 %v509
    %2671 = vmatpush2.bf16.msra.mxu0 %v508
    %2672 = vmatprep.subr.bf16.mxu0 %v504
    %2673 = vmatpush2.bf16.msra.mxu0 %v503
    %2674 = vmatprep.subr.bf16.mxu0 %v499
    %2675 = vmatpush2.bf16.msra.mxu0 %v498
    %2676 = vmatprep.subr.bf16.mxu0 %v494
    %2677 = vmatpush2.bf16.msra.mxu0 %v493
    %2678 = vmatprep.mubr.bf16.mxu0 %v2644
    %2679 = vmatmul.mubr.bf16.gmra.mxu0 %v2617
    %v2680 = vpop.f32.mrf.mxu0
    %v2681 = vadd.f32 %v587, %v2680
    %v2682 = vpop.f32.mrf.mxu0
    %v2683 = vadd.f32 %v595, %v2682
    %v2684 = vpop.f32.mrf.mxu0
    %v2685 = vpop.f32.mrf.mxu0
    %2686 = vdwg.mxu0
    %2687 = vmatprep.subr.bf16.mxu0 %v491
    %2688 = vmatpush1.bf16.msra.mxu0 %v490
    %2689 = vmatprep.subr.bf16.mxu0 %v486
    %2690 = vmatpush1.bf16.msra.mxu0 %v485
    %2691 = vmatprep.subr.bf16.mxu0 %v481
    %2692 = vmatpush1.bf16.msra.mxu0 %v480
    %2693 = vmatprep.subr.bf16.mxu0 %v476
    %2694 = vmatpush1.bf16.msra.mxu0 %v475
    %2695 = vmatprep.subr.bf16.mxu0 %v471
    %2696 = vmatpush1.bf16.msra.mxu0 %v470
    %2697 = vmatprep.subr.bf16.mxu0 %v466
    %2698 = vmatpush1.bf16.msra.mxu0 %v465
    %2699 = vmatprep.subr.bf16.mxu0 %v461
    %2700 = vmatpush1.bf16.msra.mxu0 %v460
    %2701 = vmatprep.subr.bf16.mxu0 %v456
    %2702 = vmatpush1.bf16.msra.mxu0 %v455
    %2703 = vmatprep.subr.bf16.mxu0 0
    %2704 = vmatpush2.bf16.msra.mxu0 0
    %2705 = vmatprep.subr.bf16.mxu0 0
    %2706 = vmatpush2.bf16.msra.mxu0 0
    %2707 = vmatprep.subr.bf16.mxu0 0
    %2708 = vmatpush2.bf16.msra.mxu0 0
    %2709 = vmatprep.subr.bf16.mxu0 %v624
    %2710 = vmatpush2.bf16.msra.mxu0 %v621
    %2711 = vmatprep.subr.bf16.mxu0 %v511
    %2712 = vmatpush2.bf16.msra.mxu0 %v510
    %2713 = vmatprep.subr.bf16.mxu0 %v506
    %2714 = vmatpush2.bf16.msra.mxu0 %v505
    %2715 = vmatprep.subr.bf16.mxu0 %v501
    %2716 = vmatpush2.bf16.msra.mxu0 %v500
    %2717 = vmatprep.subr.bf16.mxu0 %v496
    %2718 = vmatpush2.bf16.msra.mxu0 %v495
    %2719 = vmatprep.mubr.bf16.mxu0 %v2644
    %2720 = vmatmul.mubr.bf16.gmra.mxu0 %v2617
    %v2721 = vpop.f32.mrf.mxu0
    %v2722 = vadd.f32 %v594, %v2721
    %v2723 = vpop.f32.mrf.mxu0
    %v2724 = vadd.f32 %v596, %v2723
    %v2725 = vpop.f32.mrf.mxu0
    %v2726 = vpop.f32.mrf.mxu0
    %2727 = vdwg.mxu0
    %2728 = vmatprep.subr.bf16.mxu0 0
    %2729 = vmatpush1.bf16.msra.mxu0 %v492
    %2730 = vmatprep.subr.bf16.mxu0 0
    %2731 = vmatpush1.bf16.msra.mxu0 %v487
    %2732 = vmatprep.subr.bf16.mxu0 0
    %2733 = vmatpush1.bf16.msra.mxu0 %v482
    %2734 = vmatprep.subr.bf16.mxu0 0
    %2735 = vmatpush1.bf16.msra.mxu0 %v477
    %2736 = vmatprep.subr.bf16.mxu0 0
    %2737 = vmatpush1.bf16.msra.mxu0 %v472
    %2738 = vmatprep.subr.bf16.mxu0 0
    %2739 = vmatpush1.bf16.msra.mxu0 %v467
    %2740 = vmatprep.subr.bf16.mxu0 0
    %2741 = vmatpush1.bf16.msra.mxu0 %v462
    %2742 = vmatprep.subr.bf16.mxu0 0
    %2743 = vmatpush1.bf16.msra.mxu0 %v457
    %2744 = vmatprep.subr.bf16.mxu0 0
    %2745 = vmatpush2.bf16.msra.mxu0 0
    %2746 = vmatprep.subr.bf16.mxu0 0
    %2747 = vmatpush2.bf16.msra.mxu0 0
    %2748 = vmatprep.subr.bf16.mxu0 0
    %2749 = vmatpush2.bf16.msra.mxu0 0
    %2750 = vmatprep.subr.bf16.mxu0 0
    %2751 = vmatpush2.bf16.msra.mxu0 %v627
    %2752 = vmatprep.subr.bf16.mxu0 0
    %2753 = vmatpush2.bf16.msra.mxu0 %v512
    %2754 = vmatprep.subr.bf16.mxu0 0
    %2755 = vmatpush2.bf16.msra.mxu0 %v507
    %2756 = vmatprep.subr.bf16.mxu0 0
    %2757 = vmatpush2.bf16.msra.mxu0 %v502
    %2758 = vmatprep.subr.bf16.mxu0 0
    %2759 = vmatpush2.bf16.msra.mxu0 %v497
    %2760 = vmatprep.mubr.bf16.mxu0 %v2644
    %2761 = vmatmul.mubr.bf16.gmra.mxu0 %v2617
    %v2762 = vpop.f32.mrf.mxu0
    %v2763 = vadd.f32 %v603, %v2762
    %v2764 = vpop.f32.mrf.mxu0
    %v2765 = vpop.f32.mrf.mxu0
    %v2766 = vpop.f32.mrf.mxu0
    %2767 = vdwg.mxu0
    %v2768 = vxor.u32 %v2607, 2147483648
    %v2769 = vmul.f32 %v2768, 1.442695
    %v2770 = vpow.pop %v2769
    %v2771 = vadd.f32 %v2770, 1.0
    %v2772 = vrcp.pop %v2771
    %v2773 = vmul.f32 1.0, %v2772
    %v2774 = vtanh.pop %v2607
    %v2775 = vmul.f32 %v2773, %v2449
    %2777 = vrot.lane.b32.xlu0 %v2774, 64
    %v2778 = vpop.permute.xlu0 %2777
    %v2780 = vmul.f32 %v2773, %v2778
    %2782 = vrot.lane.b32.xlu0 %v2780, 32
    %v2783 = vpop.permute.xlu0 %2782
    %v2785 = vadd.f32 %v2775, %v2783
    %v2786 = vtanh.pop %v2785
    %2788 = vrot.lane.b32.xlu0 %v2786, 64
    %v2789 = vpop.permute.xlu0 %2788
    %v2791 = vmul.f32 %v2773, %v2789
    %v2792 = vpack.c.bf16 %v2791, %v2791
    %v2793 = vxor.u32 %v2681, 2147483648
    %v2794 = vxor.u32 %v2683, 2147483648
    %v2795 = vmul.f32 %v2793, 1.442695
    %v2796 = vpow.pop %v2795
    %v2797 = vmul.f32 %v2794, 1.442695
    %v2798 = vpow.pop %v2797
    %v2799 = vadd.f32 %v2796, 1.0
    %v2800 = vadd.f32 %v2798, 1.0
    %v2801 = vrcp.pop %v2799
    %v2802 = vmul.f32 1.0, %v2801
    %v2803 = vrcp.pop %v2800
    %v2804 = vmul.f32 1.0, %v2803
    %v2805 = vxor.u32 %v2722, 2147483648
    %v2806 = vmul.f32 %v2805, 1.442695
    %v2807 = vpow.pop %v2806
    %v2808 = vadd.f32 %v2807, 1.0
    %v2809 = vrcp.pop %v2808
    %v2810 = vmul.f32 1.0, %v2809
    %v2811 = vtanh.pop %v2722
    %v2812 = vtanh.pop %v2724
    %v2813 = vxor.u32 %v2724, 2147483648
    %v2814 = vxor.u32 %v2763, 2147483648
    %v2815 = vmul.f32 %v2813, 1.442695
    %v2816 = vpow.pop %v2815
    %v2817 = vmul.f32 %v2814, 1.442695
    %v2818 = vpow.pop %v2817
    %v2819 = vadd.f32 %v2816, 1.0
    %v2820 = vadd.f32 %v2818, 1.0
    %v2821 = vrcp.pop %v2819
    %v2822 = vmul.f32 1.0, %v2821
    %v2823 = vrcp.pop %v2820
    %v2824 = vmul.f32 1.0, %v2823
    %v2825 = vmul.f32 %v2804, %v2511
    %v2826 = vmul.f32 %v2810, %v2512
    %2829 = vrot.lane.b32.xlu0 %v2811, 64
    %v2830 = vpop.permute.xlu0 %2829
    %2831 = vrot.lane.b32.xlu0 %v2812, 64
    %v2832 = vpop.permute.xlu0 %2831
    %v2833 = vsel %vm149, %v2830, %v2832
    %v2836 = vmul.f32 %v2802, %v2833
    %v2837 = vmul.f32 %v2804, %v2832
    %2840 = vrot.lane.b32.xlu0 %v2836, 32
    %v2841 = vpop.permute.xlu0 %2840
    %2842 = vrot.lane.b32.xlu0 %v2837, 32
    %v2843 = vpop.permute.xlu0 %2842
    %v2844 = vsel %vm146, %v2841, %v2843
    %v2847 = vadd.f32 %v2825, %v2841
    %v2848 = vadd.f32 %v2826, %v2844
    %v2849 = vtanh.pop %v2847
    %v2850 = vtanh.pop %v2848
    %2853 = vrot.lane.b32.xlu0 %v2849, 64
    %v2854 = vpop.permute.xlu0 %2853
    %2855 = vrot.lane.b32.xlu0 %v2850, 64
    %v2856 = vpop.permute.xlu0 %2855
    %v2857 = vsel %vm149, %v2854, %v2856
    %v2860 = vmul.f32 %v2822, %v2854
    %v2861 = vmul.f32 %v2824, %v2857
    %v2862 = vpack.c.bf16 %v2860, %v2860
    %v2863 = vpack.c.bf16 %v2861, %v2861
    %s2864 = scalar_lea.vmem %s1, 7
    %v2865 = vld [vmem:[%s2864] sm:$0x1]
    %v2866 = vunpack.c.l.bf16 %v2792
    %v2867 = vadd.f32 %v2866, 0.0
    %v2869 = vrot.slane %v2866, 2
    %v2871 = vadd.f32 %v2867, %v2869
    %v2872 = vrot.slane %v2866, 4
    %v2874 = vadd.f32 %v2871, %v2872
    %v2875 = vrot.slane %v2866, 6
    %v2877 = vadd.f32 %v2874, %v2875
    %v2878 = vmul.f32 %v2877, 0.25
    %v2879 = vpack.c.bf16 %v2878, %v2878
    %2882 = vrot.lane.b32.xlu0 %v2862, 32
    %v2883 = vpop.permute.xlu0 %2882
    %2884 = vrot.lane.b32.xlu0 %v2863, 32
    %v2885 = vpop.permute.xlu0 %2884
    %v2886 = vsel %vm936, %v2883, %v2885
    %2889 = vrot.lane.b32.xlu0 %v2879, 64
    %v2890 = vpop.permute.xlu0 %2889
    %v2893 = vunpack.c.l.s4 1966171168
    %v2894 = vunpack.c.0.s8 %v2893
    %v2895 = vlaneseq
    %v2896 = vshrl.u32 %v2895, 7
    %v2897 = vsub.s32 %v2894, %v2896
    %v2898 = vrot.slane %v2865, %v2897
    %v2900 = vunpack.c.l.s4 1966171168
    %v2901 = vunpack.c.0.s8 %v2900
    %v2902 = vlaneseq
    %v2903 = vshrl.u32 %v2902, 7
    %v2904 = vsub.s32 %v2901, %v2903
    %v2905 = vrot.slane %v2898, %v2904
    %2906 = vrot.lane.b32.xlu0 %v2905, 64
    %v2907 = vpop.permute.xlu0 %2906
    %v2910 = vsel %vm146, %v2885, %v2890
    %v2912 = vsel %vm149, %v2910, %v2907
    %v2913 = vsel %vm609, %v2912, 0
    %2915 = vmatprep.subr.bf16.mxu0 %v489
    %2916 = vmatpush1.bf16.msra.mxu0 %v488
    %2917 = vmatprep.subr.bf16.mxu0 %v484
    %2918 = vmatpush1.bf16.msra.mxu0 %v483
    %2919 = vmatprep.subr.bf16.mxu0 %v479
    %2920 = vmatpush1.bf16.msra.mxu0 %v478
    %2921 = vmatprep.subr.bf16.mxu0 %v474
    %2922 = vmatpush1.bf16.msra.mxu0 %v473
    %2923 = vmatprep.subr.bf16.mxu0 %v469
    %2924 = vmatpush1.bf16.msra.mxu0 %v468
    %2925 = vmatprep.subr.bf16.mxu0 %v464
    %2926 = vmatpush1.bf16.msra.mxu0 %v463
    %2927 = vmatprep.subr.bf16.mxu0 %v459
    %2928 = vmatpush1.bf16.msra.mxu0 %v458
    %2929 = vmatprep.subr.bf16.mxu0 %v454
    %2930 = vmatpush1.bf16.msra.mxu0 %v453
    %2931 = vmatprep.subr.bf16.mxu0 0
    %2932 = vmatpush2.bf16.msra.mxu0 0
    %2933 = vmatprep.subr.bf16.mxu0 0
    %2934 = vmatpush2.bf16.msra.mxu0 0
    %2935 = vmatprep.subr.bf16.mxu0 0
    %2936 = vmatpush2.bf16.msra.mxu0 0
    %2937 = vmatprep.subr.bf16.mxu0 %v618
    %2938 = vmatpush2.bf16.msra.mxu0 %v615
    %2939 = vmatprep.subr.bf16.mxu0 %v509
    %2940 = vmatpush2.bf16.msra.mxu0 %v508
    %2941 = vmatprep.subr.bf16.mxu0 %v504
    %2942 = vmatpush2.bf16.msra.mxu0 %v503
    %2943 = vmatprep.subr.bf16.mxu0 %v499
    %2944 = vmatpush2.bf16.msra.mxu0 %v498
    %2945 = vmatprep.subr.bf16.mxu0 %v494
    %2946 = vmatpush2.bf16.msra.mxu0 %v493
    %2947 = vmatprep.mubr.bf16.mxu0 %v2913
    %2948 = vmatmul.mubr.bf16.gmra.mxu0 %v2886
    %v2949 = vpop.f32.mrf.mxu0
    %v2950 = vadd.f32 %v587, %v2949
    %v2951 = vpop.f32.mrf.mxu0
    %v2952 = vadd.f32 %v595, %v2951
    %v2953 = vpop.f32.mrf.mxu0
    %v2954 = vpop.f32.mrf.mxu0
    %2955 = vdwg.mxu0
    %2956 = vmatprep.subr.bf16.mxu0 %v491
    %2957 = vmatpush1.bf16.msra.mxu0 %v490
    %2958 = vmatprep.subr.bf16.mxu0 %v486
    %2959 = vmatpush1.bf16.msra.mxu0 %v485
    %2960 = vmatprep.subr.bf16.mxu0 %v481
    %2961 = vmatpush1.bf16.msra.mxu0 %v480
    %2962 = vmatprep.subr.bf16.mxu0 %v476
    %2963 = vmatpush1.bf16.msra.mxu0 %v475
    %2964 = vmatprep.subr.bf16.mxu0 %v471
    %2965 = vmatpush1.bf16.msra.mxu0 %v470
    %2966 = vmatprep.subr.bf16.mxu0 %v466
    %2967 = vmatpush1.bf16.msra.mxu0 %v465
    %2968 = vmatprep.subr.bf16.mxu0 %v461
    %2969 = vmatpush1.bf16.msra.mxu0 %v460
    %2970 = vmatprep.subr.bf16.mxu0 %v456
    %2971 = vmatpush1.bf16.msra.mxu0 %v455
    %2972 = vmatprep.subr.bf16.mxu0 0
    %2973 = vmatpush2.bf16.msra.mxu0 0
    %2974 = vmatprep.subr.bf16.mxu0 0
    %2975 = vmatpush2.bf16.msra.mxu0 0
    %2976 = vmatprep.subr.bf16.mxu0 0
    %2977 = vmatpush2.bf16.msra.mxu0 0
    %2978 = vmatprep.subr.bf16.mxu0 %v624
    %2979 = vmatpush2.bf16.msra.mxu0 %v621
    %2980 = vmatprep.subr.bf16.mxu0 %v511
    %2981 = vmatpush2.bf16.msra.mxu0 %v510
    %2982 = vmatprep.subr.bf16.mxu0 %v506
    %2983 = vmatpush2.bf16.msra.mxu0 %v505
    %2984 = vmatprep.subr.bf16.mxu0 %v501
    %2985 = vmatpush2.bf16.msra.mxu0 %v500
    %2986 = vmatprep.subr.bf16.mxu0 %v496
    %2987 = vmatpush2.bf16.msra.mxu0 %v495
    %2988 = vmatprep.mubr.bf16.mxu0 %v2913
    %2989 = vmatmul.mubr.bf16.gmra.mxu0 %v2886
    %v2990 = vpop.f32.mrf.mxu0
    %v2991 = vadd.f32 %v594, %v2990
    %v2992 = vpop.f32.mrf.mxu0
    %v2993 = vadd.f32 %v596, %v2992
    %v2994 = vpop.f32.mrf.mxu0
    %v2995 = vpop.f32.mrf.mxu0
    %2996 = vdwg.mxu0
    %2997 = vmatprep.subr.bf16.mxu0 0
    %2998 = vmatpush1.bf16.msra.mxu0 %v492
    %2999 = vmatprep.subr.bf16.mxu0 0
    %3000 = vmatpush1.bf16.msra.mxu0 %v487
    %3001 = vmatprep.subr.bf16.mxu0 0
    %3002 = vmatpush1.bf16.msra.mxu0 %v482
    %3003 = vmatprep.subr.bf16.mxu0 0
    %3004 = vmatpush1.bf16.msra.mxu0 %v477
    %3005 = vmatprep.subr.bf16.mxu0 0
    %3006 = vmatpush1.bf16.msra.mxu0 %v472
    %3007 = vmatprep.subr.bf16.mxu0 0
    %3008 = vmatpush1.bf16.msra.mxu0 %v467
    %3009 = vmatprep.subr.bf16.mxu0 0
    %3010 = vmatpush1.bf16.msra.mxu0 %v462
    %3011 = vmatprep.subr.bf16.mxu0 0
    %3012 = vmatpush1.bf16.msra.mxu0 %v457
    %3013 = vmatprep.subr.bf16.mxu0 0
    %3014 = vmatpush2.bf16.msra.mxu0 0
    %3015 = vmatprep.subr.bf16.mxu0 0
    %3016 = vmatpush2.bf16.msra.mxu0 0
    %3017 = vmatprep.subr.bf16.mxu0 0
    %3018 = vmatpush2.bf16.msra.mxu0 0
    %3019 = vmatprep.subr.bf16.mxu0 0
    %3020 = vmatpush2.bf16.msra.mxu0 %v627
    %3021 = vmatprep.subr.bf16.mxu0 0
    %3022 = vmatpush2.bf16.msra.mxu0 %v512
    %3023 = vmatprep.subr.bf16.mxu0 0
    %3024 = vmatpush2.bf16.msra.mxu0 %v507
    %3025 = vmatprep.subr.bf16.mxu0 0
    %3026 = vmatpush2.bf16.msra.mxu0 %v502
    %3027 = vmatprep.subr.bf16.mxu0 0
    %3028 = vmatpush2.bf16.msra.mxu0 %v497
    %3029 = vmatprep.mubr.bf16.mxu0 %v2913
    %3030 = vmatmul.mubr.bf16.gmra.mxu0 %v2886
    %v3031 = vpop.f32.mrf.mxu0
    %v3032 = vadd.f32 %v603, %v3031
    %v3033 = vpop.f32.mrf.mxu0
    %v3034 = vpop.f32.mrf.mxu0
    %v3035 = vpop.f32.mrf.mxu0
    %3036 = vdwg.mxu0
    %v3037 = vxor.u32 %v2950, 2147483648
    %v3038 = vxor.u32 %v2952, 2147483648
    %v3039 = vmul.f32 %v3037, 1.442695
    %v3040 = vpow.pop %v3039
    %v3041 = vmul.f32 %v3038, 1.442695
    %v3042 = vpow.pop %v3041
    %v3043 = vadd.f32 %v3040, 1.0
    %v3044 = vadd.f32 %v3042, 1.0
    %v3045 = vrcp.pop %v3043
    %v3046 = vmul.f32 1.0, %v3045
    %v3047 = vrcp.pop %v3044
    %v3048 = vmul.f32 1.0, %v3047
    %v3049 = vxor.u32 %v2991, 2147483648
    %v3050 = vmul.f32 %v3049, 1.442695
    %v3051 = vpow.pop %v3050
    %v3052 = vadd.f32 %v3051, 1.0
    %v3053 = vrcp.pop %v3052
    %v3054 = vmul.f32 1.0, %v3053
    %v3055 = vtanh.pop %v2991
    %v3056 = vtanh.pop %v2993
    %v3057 = vxor.u32 %v2993, 2147483648
    %v3058 = vxor.u32 %v3032, 2147483648
    %v3059 = vmul.f32 %v3057, 1.442695
    %v3060 = vpow.pop %v3059
    %v3061 = vmul.f32 %v3058, 1.442695
    %v3062 = vpow.pop %v3061
    %v3063 = vadd.f32 %v3060, 1.0
    %v3064 = vadd.f32 %v3062, 1.0
    %v3065 = vrcp.pop %v3063
    %v3066 = vmul.f32 1.0, %v3065
    %v3067 = vrcp.pop %v3064
    %v3068 = vmul.f32 1.0, %v3067
    %v3069 = vmul.f32 %v3048, %v2847
    %v3070 = vmul.f32 %v3054, %v2848
    %3073 = vrot.lane.b32.xlu0 %v3055, 64
    %v3074 = vpop.permute.xlu0 %3073
    %3075 = vrot.lane.b32.xlu0 %v3056, 64
    %v3076 = vpop.permute.xlu0 %3075
    %v3077 = vsel %vm149, %v3074, %v3076
    %v3080 = vmul.f32 %v3046, %v3077
    %v3081 = vmul.f32 %v3048, %v3076
    %3084 = vrot.lane.b32.xlu0 %v3080, 32
    %v3085 = vpop.permute.xlu0 %3084
    %3086 = vrot.lane.b32.xlu0 %v3081, 32
    %v3087 = vpop.permute.xlu0 %3086
    %v3088 = vsel %vm146, %v3085, %v3087
    %v3091 = vadd.f32 %v3069, %v3085
    %v3092 = vadd.f32 %v3070, %v3088
    %v3093 = vtanh.pop %v3091
    %v3094 = vtanh.pop %v3092
    %3097 = vrot.lane.b32.xlu0 %v3093, 64
    %v3098 = vpop.permute.xlu0 %3097
    %3099 = vrot.lane.b32.xlu0 %v3094, 64
    %v3100 = vpop.permute.xlu0 %3099
    %v3101 = vsel %vm149, %v3098, %v3100
    %v3104 = vmul.f32 %v3066, %v3098
    %v3105 = vmul.f32 %v3068, %v3101
    %v3106 = vpack.c.bf16 %v3104, %v3104
    %v3107 = vpack.c.bf16 %v3105, %v3105
    %v3108 = vld [vmem:[%s5] sm:$0xf]
    %v3109 = vld [vmem:[%s5 + $0x4] sm:$0xf]
    %v3110 = vld [vmem:[%s5 + $0x8] sm:$0xf]
    %v3111 = vld [vmem:[%s5 + $0xc] sm:$0xf]
    %v3112 = vld [vmem:[%s5 + $0x10] sm:$0xf]
    %v3113 = vld [vmem:[%s5 + $0x14] sm:$0xf]
    %v3114 = vld [vmem:[%s5 + $0x18] sm:$0xf]
    %v3115 = vld [vmem:[%s5 + $0x1c] sm:$0xf]
    %v3116 = vld [vmem:[%s5 + $0x20] sm:$0xf]
    %v3117 = vld [vmem:[%s5 + $0x24] sm:$0xf]
    %v3118 = vld [vmem:[%s5 + $0x28] sm:$0xf]
    %v3119 = vld [vmem:[%s5 + $0x2c] sm:$0xf]
    %v3120 = vld [vmem:[%s5 + $0x30] sm:$0xf]
    %v3121 = vld [vmem:[%s5 + $0x34] sm:$0xf]
    %v3122 = vld [vmem:[%s5 + $0x38] sm:$0xf]
    %v3123 = vld [vmem:[%s5 + $0x3c] sm:$0xf]
    %v3124 = vld [vmem:[%s5 + $0x40] sm:$0xf]
    %v3125 = vld [vmem:[%s5 + $0x44] sm:$0xf]
    %v3126 = vld [vmem:[%s5 + $0x48] sm:$0xf]
    %v3127 = vld [vmem:[%s5 + $0x4c] sm:$0xf]
    %v3128 = vld [vmem:[%s6] sm:$0x1]
    %v3130 = vlaneseq
    %v3131 = vshrl.u32 %v3130, 7
    %v3132 = vsub.s32 0, %v3131
    %v3133 = vrot.slane %v3128, %v3132
    %3137 = vrot.lane.b32.xlu0 %v3106, 32
    %v3138 = vpop.permute.xlu0 %3137
    %3139 = vrot.lane.b32.xlu0 %v3107, 32
    %v3140 = vpop.permute.xlu0 %3139
    %v3141 = vsel %vm936, %v3138, %v3140
    %v3163 = vunpack.c.l.b16 %v3108
    %v3164 = vunpack.c.l.b16 %v3109
    %v3165 = vunpack.c.l.b16 %v3110
    %v3166 = vunpack.c.l.b16 %v3111
    %v3167 = vunpack.c.l.b16 %v3112
    %v3168 = vunpack.c.l.b16 %v3113
    %v3169 = vunpack.c.l.b16 %v3114
    %v3170 = vunpack.c.l.b16 %v3115
    %v3171 = vunpack.c.l.b16 %v3116
    %v3172 = vunpack.c.l.b16 %v3117
    %v3173 = vunpack.c.l.b16 %v3118
    %v3174 = vunpack.c.l.b16 %v3119
    %v3175 = vunpack.c.l.b16 %v3120
    %v3176 = vunpack.c.l.b16 %v3121
    %v3177 = vunpack.c.l.b16 %v3122
    %v3178 = vunpack.c.l.b16 %v3123
    %v3179 = vunpack.c.l.b16 %v3124
    %v3180 = vunpack.c.l.b16 %v3125
    %v3181 = vunpack.c.l.b16 %v3126
    %v3182 = vunpack.c.l.b16 %v3127
    %v3183 = vpack.c.b16 %v3164, %v3163
    %v3184 = vpack.c.b16 %v3166, %v3165
    %v3185 = vpack.c.b16 %v3168, %v3167
    %v3186 = vpack.c.b16 %v3170, %v3169
    %v3187 = vpack.c.b16 %v3172, %v3171
    %v3188 = vpack.c.b16 %v3174, %v3173
    %v3189 = vpack.c.b16 %v3176, %v3175
    %v3190 = vpack.c.b16 %v3178, %v3177
    %v3191 = vpack.c.b16 %v3180, %v3179
    %v3192 = vpack.c.b16 %v3182, %v3181
    %v3204 = vsel %vm146, %v3140, 0
    %3206 = vmatprep.subr.bf16.mxu0 0
    %3207 = vmatpush1.bf16.msra.mxu0 %v3190
    %3208 = vmatprep.subr.bf16.mxu0 0
    %3209 = vmatpush1.bf16.msra.mxu0 %v3189
    %3210 = vmatprep.subr.bf16.mxu0 0
    %3211 = vmatpush1.bf16.msra.mxu0 %v3188
    %3212 = vmatprep.subr.bf16.mxu0 0
    %3213 = vmatpush1.bf16.msra.mxu0 %v3187
    %3214 = vmatprep.subr.bf16.mxu0 0
    %3215 = vmatpush1.bf16.msra.mxu0 %v3186
    %3216 = vmatprep.subr.bf16.mxu0 0
    %3217 = vmatpush1.bf16.msra.mxu0 %v3185
    %3218 = vmatprep.subr.bf16.mxu0 0
    %3219 = vmatpush1.bf16.msra.mxu0 %v3184
    %3220 = vmatprep.subr.bf16.mxu0 0
    %3221 = vmatpush1.bf16.msra.mxu0 %v3183
    %3222 = vmatprep.subr.bf16.mxu0 0
    %3223 = vmatpush2.bf16.msra.mxu0 0
    %3224 = vmatprep.subr.bf16.mxu0 0
    %3225 = vmatpush2.bf16.msra.mxu0 0
    %3226 = vmatprep.subr.bf16.mxu0 0
    %3227 = vmatpush2.bf16.msra.mxu0 0
    %3228 = vmatprep.subr.bf16.mxu0 0
    %3229 = vmatpush2.bf16.msra.mxu0 0
    %3230 = vmatprep.subr.bf16.mxu0 0
    %3231 = vmatpush2.bf16.msra.mxu0 0
    %3232 = vmatprep.subr.bf16.mxu0 0
    %3233 = vmatpush2.bf16.msra.mxu0 0
    %3234 = vmatprep.subr.bf16.mxu0 0
    %3235 = vmatpush2.bf16.msra.mxu0 %v3192
    %3236 = vmatprep.subr.bf16.mxu0 0
    %3237 = vmatpush2.bf16.msra.mxu0 %v3191
    %3238 = vmatprep.mubr.bf16.mxu0 %v3204
    %3239 = vmatmul.mubr.bf16.gmra.mxu0 %v3141
    %v3240 = vpop.f32.mrf.mxu0
    %v3241 = vadd.f32 %v3133, %v3240
    %v3242 = vpop.f32.mrf.mxu0
    %v3243 = vpop.f32.mrf.mxu0
    %v3244 = vpop.f32.mrf.mxu0
    %3245 = vdwg.mxu0
    %3246 = vst [vmem:[#allocation5] sm:$0x3] %v3241
    // Predicated region
    $region34: #{hetero_lstm_pallas.1} parent=1 // pred_check
      _
    $region35: #{hetero_lstm_pallas.1} parent=1 // pred_check_branch
      %3248 = sbr.rel (0) target = $region37
    $region36: #{hetero_lstm_pallas.1} parent=1 // pred_region
      %s3250 = ssub.s32 32, 32
      %3251 = vsyncadd [#allocation4], %s3250
      %s3253 = sshll.u32 [#allocation5], 4
      %s3254 = int_to_ptr.vmem [resolvable:$true] %s3253
      %3256 = dma.vmem_to_hbm [thread:$0]  %s3254, 32, %s7, [#allocation4]
    $region37: #{hetero_lstm_pallas.1} parent=1 // pred_fallthru
      _
    // Predicated region
    $region38: #{hetero_lstm_pallas.1} parent=1 // pred_check
      _
    $region39: #{hetero_lstm_pallas.1} parent=1 // pred_check_branch
      %3258 = sbr.rel (0) target = $region41
    $region40: #{hetero_lstm_pallas.1} parent=1 // pred_region
      %3259 = dma.done [#allocation4], 32
    $region41: #{hetero_lstm_pallas.1} parent=1 // pred_fallthru
      _
    %3260 = vsyncpa [#allocation3], 1
    %3261 = vsyncpa [#allocation4], 1

</llo_original>
